<compile_context>
chip_gen: v5e
topology: v5e:2x2
jax: 0.10.0
libtpu: 0.0.40
codegen_flags: <defaults>
</compile_context>

<pallas_src>
import jax
import jax.numpy as jnp
from jax.experimental import pallas as pl
from jax.experimental.pallas import tpu as pltpu

# ----------------------------- configuration -----------------------------
INPUT_SIZE = (16, 16)      # (H, W)
PATCH_SIZE = (4, 4)        # (p1, p2)
CHANNELS   = 4
DIM        = 32            # transformer model dim
DEPTH      = 2
HEADS      = 4
DIM_HEAD   = 16
MLP_DIM    = 64
POOL       = "cls"
LN_EPS     = 1e-5          # PyTorch nn.LayerNorm default

INNER_DIM  = HEADS * DIM_HEAD                                        # 64
NUM_PATCH  = (INPUT_SIZE[0] // PATCH_SIZE[0]) * (INPUT_SIZE[1] // PATCH_SIZE[1])  # 16
PATCH_DIM  = CHANNELS * PATCH_SIZE[0] * PATCH_SIZE[1]                # 64

N_REAL   = NUM_PATCH + 1   # 17 real tokens (16 patches + cls)
N_PAD    = 24              # token axis padded to a multiple of 8 sublanes
CLS_ROW  = NUM_PATCH       # cls token stored at row 16 (tile-aligned)
NEG_BIG  = -1e30           # softmax mask value for padded keys


# ------------------------------ fused kernel ------------------------------
def _encoder_kernel(patches_ref, pw_ref, base_ref,
                    ln1g_ref, ln1b_ref, wqkv_ref, wout_ref, bout_ref,
                    ln2g_ref, ln2b_ref, wff1_ref, bff1_ref, wff2_ref, bff2_ref,
                    out_ref):
    """One grid step == one batch element, everything resident in VMEM."""
    f32 = jnp.float32
    scale = f32(DIM_HEAD ** (-0.5))

    def layernorm(x, g, b):
        mu = jnp.mean(x, axis=-1, keepdims=True)
        d = x - mu
        var = jnp.mean(d * d, axis=-1, keepdims=True)
        return d * jax.lax.rsqrt(var + f32(LN_EPS)) * g + b

    # ---- patch embedding (Linear(patch_dim -> dim), bias folded into base) --
    patches = patches_ref[0]                                           # (N_PAD, PATCH_DIM)
    tok = jnp.dot(patches, pw_ref[...], preferred_element_type=f32)    # (N_PAD, DIM)

    # base rows 0..NP-1 = pos[1:NP+1] + patch_b, row NP = cls + pos[0],
    # rows NP+1..N_PAD-1 = 0.  Padded patch rows are zero, so tok there is 0.
    x = base_ref[...] + tok                                             # (N_PAD, DIM)

    # key-padding mask bias: columns >= N_REAL contribute -inf-ish scores
    col = jax.lax.broadcasted_iota(jnp.int32, (N_PAD, N_PAD), 1)
    mask_bias = jnp.where(col < N_REAL, f32(0.0), f32(NEG_BIG))

    for l in range(DEPTH):                                   # static unroll (DEPTH=2)
        # ---------- PreNorm + multi-head attention + residual ----------
        xn = layernorm(x, ln1g_ref[l], ln1b_ref[l])                    # (N_PAD, DIM)
        qkv = jnp.dot(xn, wqkv_ref[l], preferred_element_type=f32)     # (N_PAD, 3*INNER)
        w_out_l = wout_ref[l]                                          # (INNER, DIM)

        acc = jnp.zeros((N_PAD, DIM), f32)
        for h in range(HEADS):                               # static unroll (HEADS=4)
            q = qkv[:, h * DIM_HEAD:(h + 1) * DIM_HEAD]                # (N_PAD, Dh)
            k = qkv[:, INNER_DIM + h * DIM_HEAD:INNER_DIM + (h + 1) * DIM_HEAD]
            v = qkv[:, 2 * INNER_DIM + h * DIM_HEAD:2 * INNER_DIM + (h + 1) * DIM_HEAD]

            # q @ k^T without materializing a transpose
            s = jax.lax.dot_general(q, k, (((1,), (1,)), ((), ())),
                                    preferred_element_type=f32) * scale   # (N_PAD, N_PAD)
            s = s + mask_bias
            s = s - jnp.max(s, axis=-1, keepdims=True)
            e = jnp.exp(s)
            p = e / jnp.sum(e, axis=-1, keepdims=True)
            o = jnp.dot(p, v, preferred_element_type=f32)                 # (N_PAD, Dh)
            # fold head-merge + output projection: sum_h o_h @ W_out[h*Dh:(h+1)*Dh]
            acc = acc + jnp.dot(o, w_out_l[h * DIM_HEAD:(h + 1) * DIM_HEAD, :],
                                preferred_element_type=f32)               # (N_PAD, DIM)

        x = x + acc + bout_ref[l]                                         # residual

        # ---------- PreNorm + FeedForward (GELU) + residual ----------
        xn2 = layernorm(x, ln2g_ref[l], ln2b_ref[l])
        hmid = jnp.dot(xn2, wff1_ref[l], preferred_element_type=f32) + bff1_ref[l]
        # exact GELU (matches torch.nn.GELU default)
        hmid = 0.5 * hmid * (1.0 + jax.lax.erf(hmid * f32(0.7071067811865476)))
        y = jnp.dot(hmid, wff2_ref[l], preferred_element_type=f32) + bff2_ref[l]
        x = x + y                                                         # residual

    # ---- pooling ----
    if POOL == "mean":
        feat = jnp.sum(x[0:N_REAL, :], axis=0, keepdims=True) / f32(N_REAL)
    else:  # 'cls'
        feat = x[CLS_ROW:CLS_ROW + 1, :]                                  # (1, DIM)
    out_ref[0] = feat.astype(out_ref.dtype)


def _const_spec(shape):
    """Full-array block that is identical for every grid step (weights)."""
    zeros = (0,) * len(shape)
    return pl.BlockSpec(shape, lambda b: zeros)


# ------------------------------ parameters ------------------------------
def init_params(key):
    keys = iter(jax.random.split(key, 4 + DEPTH * 6))
    nk = lambda: next(keys)
    scale = 0.02
    params = {
        "patch_w": jax.random.normal(nk(), (PATCH_DIM, DIM), jnp.float32) * scale,
        "patch_b": jnp.zeros((DIM,), jnp.float32),
        "pos_embedding": jax.random.normal(nk(), (1, NUM_PATCH + 1, DIM), jnp.float32),
        "cls_token": jax.random.normal(nk(), (1, 1, DIM), jnp.float32),
        "layers": [],
    }
    for _ in range(DEPTH):
        layer = {
            # PreNorm(Attention) -- to_qkv has NO bias in the reference model
            "ln1_g": jnp.ones((DIM,), jnp.float32),
            "ln1_b": jnp.zeros((DIM,), jnp.float32),
            "w_qkv": jax.random.normal(nk(), (DIM, 3 * INNER_DIM), jnp.float32) * scale,
            "w_out": jax.random.normal(nk(), (INNER_DIM, DIM), jnp.float32) * scale,
            "b_out": jnp.zeros((DIM,), jnp.float32),
            # PreNorm(FeedForward)
            "ln2_g": jnp.ones((DIM,), jnp.float32),
            "ln2_b": jnp.zeros((DIM,), jnp.float32),
            "w_ff1": jax.random.normal(nk(), (DIM, MLP_DIM), jnp.float32) * scale,
            "b_ff1": jnp.zeros((MLP_DIM,), jnp.float32),
            "w_ff2": jax.random.normal(nk(), (MLP_DIM, DIM), jnp.float32) * scale,
            "b_ff2": jnp.zeros((DIM,), jnp.float32),
        }
        params["layers"].append(layer)
    return params


# ------------------------------ forward pass ------------------------------
def md_cat_forward(x, params):
    # x: (B, C, H, W)  -- NCHW, same as PyTorch
    B, C, H, W = x.shape
    p1, p2 = PATCH_SIZE
    h, w = H // p1, W // p2

    # TODO(synk): MDCAEncoder not defined in provided source; identity pass-through.

    # Rearrange 'b c (h p1) (w p2) -> b (h w) (p1 p2 c)'   (pure layout glue)
    patches = x.reshape(B, C, h, p1, w, p2)
    patches = jnp.transpose(patches, (0, 2, 4, 3, 5, 1))
    patches = patches.reshape(B, h * w, p1 * p2 * C).astype(jnp.float32)
    # Zero-pad token axis to a sublane-aligned 24 rows (padded rows -> tok=0).
    patches = jnp.pad(patches, ((0, 0), (0, N_PAD - NUM_PATCH), (0, 0)))

    # Batch-independent "base" token matrix (parameters only):
    #   rows 0..NP-1 = pos[1:NP+1] + patch_b, row NP = cls + pos[0], rest = 0.
    pos = params["pos_embedding"][0]                     # (N_REAL, DIM)
    cls = params["cls_token"][0]                         # (1, DIM)
    patch_b = params["patch_b"].reshape(1, DIM)
    base = jnp.concatenate(
        [pos[1:N_REAL] + patch_b,
         cls + pos[0:1],
         jnp.zeros((N_PAD - N_REAL, DIM), jnp.float32)], axis=0)       # (N_PAD, DIM)

    # Stack per-layer weights along a leading DEPTH axis
    L = params["layers"]
    stack = lambda name: jnp.stack([lyr[name] for lyr in L], axis=0)
    ln1g = stack("ln1_g").reshape(DEPTH, 1, DIM)
    ln1b = stack("ln1_b").reshape(DEPTH, 1, DIM)
    wqkv = stack("w_qkv")                                # (DEPTH, DIM, 3*INNER)
    wout = stack("w_out")                                # (DEPTH, INNER, DIM)
    bout = stack("b_out").reshape(DEPTH, 1, DIM)
    ln2g = stack("ln2_g").reshape(DEPTH, 1, DIM)
    ln2b = stack("ln2_b").reshape(DEPTH, 1, DIM)
    wff1 = stack("w_ff1")                                # (DEPTH, DIM, MLP_DIM)
    bff1 = stack("b_ff1").reshape(DEPTH, 1, MLP_DIM)
    wff2 = stack("w_ff2")                                # (DEPTH, MLP_DIM, DIM)
    bff2 = stack("b_ff2").reshape(DEPTH, 1, DIM)

    out = pl.pallas_call(
        _encoder_kernel,
        out_shape=jax.ShapeDtypeStruct((B, 1, DIM), jnp.float32),
        grid=(B,),
        in_specs=[
            pl.BlockSpec((1, N_PAD, PATCH_DIM), lambda b: (b, 0, 0)),
            _const_spec((PATCH_DIM, DIM)),                # patch_w
            _const_spec((N_PAD, DIM)),                    # base (pos/cls/bias)
            _const_spec((DEPTH, 1, DIM)),                 # ln1_g
            _const_spec((DEPTH, 1, DIM)),                 # ln1_b
            _const_spec((DEPTH, DIM, 3 * INNER_DIM)),     # w_qkv
            _const_spec((DEPTH, INNER_DIM, DIM)),         # w_out
            _const_spec((DEPTH, 1, DIM)),                 # b_out
            _const_spec((DEPTH, 1, DIM)),                 # ln2_g
            _const_spec((DEPTH, 1, DIM)),                 # ln2_b
            _const_spec((DEPTH, DIM, MLP_DIM)),           # w_ff1
            _const_spec((DEPTH, 1, MLP_DIM)),             # b_ff1
            _const_spec((DEPTH, MLP_DIM, DIM)),           # w_ff2
            _const_spec((DEPTH, 1, DIM)),                 # b_ff2
        ],
        out_specs=pl.BlockSpec((1, 1, DIM), lambda b: (b, 0, 0)),
        compiler_params=pltpu.CompilerParams(dimension_semantics=("parallel",)),
        cost_estimate=pl.CostEstimate(flops=4_200_000, transcendentals=20_000,
                                      bytes_accessed=140_000),
    )(patches, params["patch_w"], base,
      ln1g, ln1b, wqkv, wout, bout, ln2g, ln2b, wff1, bff1, wff2, bff2)

    return {"features": out[:, 0, :]}


# ------------------------------ main ------------------------------
if __name__ == "__main__":
    key = jax.random.PRNGKey(0)
    k_params, k_x = jax.random.split(key)

    params = init_params(k_params)
    B = 2
    x = jax.random.normal(k_x, (B, CHANNELS, INPUT_SIZE[0], INPUT_SIZE[1]), jnp.float32)

    fwd = jax.jit(md_cat_forward)
    out = fwd(x, params)
    feats = jax.block_until_ready(out["features"])
    assert feats.shape == (B, DIM), feats.shape
    assert bool(jnp.all(jnp.isfinite(feats)))
    print("KERNEL_OK")
</pallas_src>

<mosaic_0001>
module attributes {stable_mosaic.version = 11 : i64} {
  func.func @_encoder_kernel(%arg0: i32, %arg1: memref<1x24x64xf32, #tpu.memory_space<vmem>>, %arg2: memref<64x32xf32, #tpu.memory_space<vmem>>, %arg3: memref<24x32xf32, #tpu.memory_space<vmem>>, %arg4: memref<2x1x32xf32, #tpu.memory_space<vmem>>, %arg5: memref<2x1x32xf32, #tpu.memory_space<vmem>>, %arg6: memref<2x32x192xf32, #tpu.memory_space<vmem>>, %arg7: memref<2x64x32xf32, #tpu.memory_space<vmem>>, %arg8: memref<2x1x32xf32, #tpu.memory_space<vmem>>, %arg9: memref<2x1x32xf32, #tpu.memory_space<vmem>>, %arg10: memref<2x1x32xf32, #tpu.memory_space<vmem>>, %arg11: memref<2x32x64xf32, #tpu.memory_space<vmem>>, %arg12: memref<2x1x64xf32, #tpu.memory_space<vmem>>, %arg13: memref<2x64x32xf32, #tpu.memory_space<vmem>>, %arg14: memref<2x1x32xf32, #tpu.memory_space<vmem>>, %arg15: memref<1x1x32xf32, #tpu.memory_space<vmem>>) attributes {dimension_semantics = [#tpu.dimension_semantics<parallel>], iteration_bounds = array<i64: 2>, scalar_prefetch = 0 : i64, scratch_operands = 0 : i64, tpu.core_type = #tpu.core_type<tc>, window_params = [{transform_indices = @transform_0, window_bounds = array<i64: 1, 24, 64>}, {pipeline_mode = #tpu.pipeline_mode<synchronous>, transform_indices = @transform_1, window_bounds = array<i64: 64, 32>}, {pipeline_mode = #tpu.pipeline_mode<synchronous>, transform_indices = @transform_2, window_bounds = array<i64: 24, 32>}, {pipeline_mode = #tpu.pipeline_mode<synchronous>, transform_indices = @transform_3, window_bounds = array<i64: 2, 1, 32>}, {pipeline_mode = #tpu.pipeline_mode<synchronous>, transform_indices = @transform_4, window_bounds = array<i64: 2, 1, 32>}, {pipeline_mode = #tpu.pipeline_mode<synchronous>, transform_indices = @transform_5, window_bounds = array<i64: 2, 32, 192>}, {pipeline_mode = #tpu.pipeline_mode<synchronous>, transform_indices = @transform_6, window_bounds = array<i64: 2, 64, 32>}, {pipeline_mode = #tpu.pipeline_mode<synchronous>, transform_indices = @transform_7, window_bounds = array<i64: 2, 1, 32>}, {pipeline_mode = #tpu.pipeline_mode<synchronous>, transform_indices = @transform_8, window_bounds = array<i64: 2, 1, 32>}, {pipeline_mode = #tpu.pipeline_mode<synchronous>, transform_indices = @transform_9, window_bounds = array<i64: 2, 1, 32>}, {pipeline_mode = #tpu.pipeline_mode<synchronous>, transform_indices = @transform_10, window_bounds = array<i64: 2, 32, 64>}, {pipeline_mode = #tpu.pipeline_mode<synchronous>, transform_indices = @transform_11, window_bounds = array<i64: 2, 1, 64>}, {pipeline_mode = #tpu.pipeline_mode<synchronous>, transform_indices = @transform_12, window_bounds = array<i64: 2, 64, 32>}, {pipeline_mode = #tpu.pipeline_mode<synchronous>, transform_indices = @transform_13, window_bounds = array<i64: 2, 1, 32>}, {transform_indices = @transform_14, window_bounds = array<i64: 1, 1, 32>}]} {
    %c0 = arith.constant 0 : index
    %c0_0 = arith.constant 0 : index
    %c0_1 = arith.constant 0 : index
    %0 = vector.load %arg1[%c0, %c0_0, %c0_1] : memref<1x24x64xf32, #tpu.memory_space<vmem>>, vector<1x24x64xf32>
    %1 = vector.shape_cast %0 : vector<1x24x64xf32> to vector<24x64xf32>
    %c0_2 = arith.constant 0 : index
    %c0_3 = arith.constant 0 : index
    %2 = vector.load %arg2[%c0_2, %c0_3] : memref<64x32xf32, #tpu.memory_space<vmem>>, vector<64x32xf32>
    %cst = arith.constant dense<0.000000e+00> : vector<24x32xf32>
    %3 = tpu.matmul %1, %2, %cst {dimension_numbers = #tpu.dot_dimension_numbers<[1], [0], [0], [1], [0, 0, 1, 1], [], []>} : vector<24x64xf32>, vector<64x32xf32>, vector<24x32xf32> -> vector<24x32xf32>
    %c0_4 = arith.constant 0 : index
    %c0_5 = arith.constant 0 : index
    %4 = vector.load %arg3[%c0_4, %c0_5] : memref<24x32xf32, #tpu.memory_space<vmem>>, vector<24x32xf32>
    %5 = arith.addf %4, %3 : vector<24x32xf32>
    %6 = tpu.iota {dimensions = array<i32: 1>} : vector<24x24xi32>
    %c17_i32 = arith.constant 17 : i32
    %7 = vector.broadcast %c17_i32 : i32 to vector<24x24xi32>
    %8 = arith.cmpi slt, %6, %7 : vector<24x24xi32>
    %cst_6 = arith.constant 0.000000e+00 : f32
    %cst_7 = arith.constant -1.000000e+30 : f32
    %9 = vector.broadcast %cst_6 : f32 to vector<24x24xf32>
    %10 = vector.broadcast %cst_7 : f32 to vector<24x24xf32>
    %11 = arith.select %8, %9, %10 : vector<24x24xi1>, vector<24x24xf32>
    %c0_8 = arith.constant 0 : index
    %c0_9 = arith.constant 0 : index
    %c0_10 = arith.constant 0 : index
    %12 = vector.load %arg4[%c0_8, %c0_9, %c0_10] : memref<2x1x32xf32, #tpu.memory_space<vmem>>, vector<1x1x32xf32>
    %13 = vector.shape_cast %12 : vector<1x1x32xf32> to vector<1x32xf32>
    %c0_11 = arith.constant 0 : index
    %c0_12 = arith.constant 0 : index
    %c0_13 = arith.constant 0 : index
    %14 = vector.load %arg5[%c0_11, %c0_12, %c0_13] : memref<2x1x32xf32, #tpu.memory_space<vmem>>, vector<1x1x32xf32>
    %15 = vector.shape_cast %14 : vector<1x1x32xf32> to vector<1x32xf32>
    %cst_14 = arith.constant dense<0.000000e+00> : vector<24xf32>
    %16 = vector.multi_reduction <add>, %5, %cst_14 [1] : vector<24x32xf32> to vector<24xf32>
    %17 = vector.shape_cast %16 : vector<24xf32> to vector<24x1xf32>
    %cst_15 = arith.constant 3.200000e+01 : f32
    %18 = vector.broadcast %cst_15 : f32 to vector<24x1xf32>
    %19 = arith.divf %17, %18 : vector<24x1xf32>
    %20 = vector.broadcast %19 : vector<24x1xf32> to vector<24x32xf32>
    %21 = arith.subf %5, %20 : vector<24x32xf32>
    %22 = arith.mulf %21, %21 : vector<24x32xf32>
    %cst_16 = arith.constant dense<0.000000e+00> : vector<24xf32>
    %23 = vector.multi_reduction <add>, %22, %cst_16 [1] : vector<24x32xf32> to vector<24xf32>
    %24 = vector.shape_cast %23 : vector<24xf32> to vector<24x1xf32>
    %cst_17 = arith.constant 3.200000e+01 : f32
    %25 = vector.broadcast %cst_17 : f32 to vector<24x1xf32>
    %26 = arith.divf %24, %25 : vector<24x1xf32>
    %cst_18 = arith.constant 9.99999974E-6 : f32
    %27 = vector.broadcast %cst_18 : f32 to vector<24x1xf32>
    %28 = arith.addf %26, %27 : vector<24x1xf32>
    %29 = math.rsqrt %28 : vector<24x1xf32>
    %30 = vector.broadcast %29 : vector<24x1xf32> to vector<24x32xf32>
    %31 = arith.mulf %21, %30 : vector<24x32xf32>
    %32 = vector.broadcast %13 : vector<1x32xf32> to vector<24x32xf32>
    %33 = arith.mulf %31, %32 : vector<24x32xf32>
    %34 = vector.broadcast %15 : vector<1x32xf32> to vector<24x32xf32>
    %35 = arith.addf %33, %34 : vector<24x32xf32>
    %c0_19 = arith.constant 0 : index
    %c0_20 = arith.constant 0 : index
    %c0_21 = arith.constant 0 : index
    %36 = vector.load %arg6[%c0_19, %c0_20, %c0_21] : memref<2x32x192xf32, #tpu.memory_space<vmem>>, vector<1x32x192xf32>
    %37 = vector.shape_cast %36 : vector<1x32x192xf32> to vector<32x192xf32>
    %cst_22 = arith.constant dense<0.000000e+00> : vector<24x192xf32>
    %38 = tpu.matmul %35, %37, %cst_22 {dimension_numbers = #tpu.dot_dimension_numbers<[1], [0], [0], [1], [0, 0, 1, 1], [], []>} : vector<24x32xf32>, vector<32x192xf32>, vector<24x192xf32> -> vector<24x192xf32>
    %c0_23 = arith.constant 0 : index
    %c0_24 = arith.constant 0 : index
    %c0_25 = arith.constant 0 : index
    %39 = vector.load %arg7[%c0_23, %c0_24, %c0_25] : memref<2x64x32xf32, #tpu.memory_space<vmem>>, vector<1x64x32xf32>
    %40 = vector.shape_cast %39 : vector<1x64x32xf32> to vector<64x32xf32>
    %cst_26 = arith.constant 0.000000e+00 : f32
    %41 = vector.broadcast %cst_26 : f32 to vector<24x32xf32>
    %42 = vector.extract_strided_slice %38 {offsets = [0, 0], sizes = [24, 16], strides = [1, 1]} : vector<24x192xf32> to vector<24x16xf32>
    %43 = vector.extract_strided_slice %38 {offsets = [0, 64], sizes = [24, 16], strides = [1, 1]} : vector<24x192xf32> to vector<24x16xf32>
    %44 = vector.extract_strided_slice %38 {offsets = [0, 128], sizes = [24, 16], strides = [1, 1]} : vector<24x192xf32> to vector<24x16xf32>
    %cst_27 = arith.constant dense<0.000000e+00> : vector<24x24xf32>
    %45 = tpu.matmul %42, %43, %cst_27 {dimension_numbers = #tpu.dot_dimension_numbers<[1], [1], [0], [0], [0, 0, 1, 0], [], []>} : vector<24x16xf32>, vector<24x16xf32>, vector<24x24xf32> -> vector<24x24xf32>
    %cst_28 = arith.constant 2.500000e-01 : f32
    %46 = vector.broadcast %cst_28 : f32 to vector<24x24xf32>
    %47 = arith.mulf %45, %46 : vector<24x24xf32>
    %48 = arith.addf %47, %11 : vector<24x24xf32>
    %cst_29 = arith.constant dense<0xFF800000> : vector<24xf32>
    %49 = vector.multi_reduction <maximumf>, %48, %cst_29 [1] : vector<24x24xf32> to vector<24xf32>
    %50 = vector.shape_cast %49 : vector<24xf32> to vector<24x1xf32>
    %51 = vector.broadcast %50 : vector<24x1xf32> to vector<24x24xf32>
    %52 = arith.subf %48, %51 : vector<24x24xf32>
    %53 = math.exp %52 : vector<24x24xf32>
    %cst_30 = arith.constant dense<0.000000e+00> : vector<24xf32>
    %54 = vector.multi_reduction <add>, %53, %cst_30 [1] : vector<24x24xf32> to vector<24xf32>
    %55 = vector.shape_cast %54 : vector<24xf32> to vector<24x1xf32>
    %56 = vector.broadcast %55 : vector<24x1xf32> to vector<24x24xf32>
    %57 = arith.divf %53, %56 : vector<24x24xf32>
    %cst_31 = arith.constant dense<0.000000e+00> : vector<24x16xf32>
    %58 = tpu.matmul %57, %44, %cst_31 {dimension_numbers = #tpu.dot_dimension_numbers<[1], [0], [0], [1], [0, 0, 1, 1], [], []>} : vector<24x24xf32>, vector<24x16xf32>, vector<24x16xf32> -> vector<24x16xf32>
    %59 = vector.extract_strided_slice %40 {offsets = [0, 0], sizes = [16, 32], strides = [1, 1]} : vector<64x32xf32> to vector<16x32xf32>
    %cst_32 = arith.constant dense<0.000000e+00> : vector<24x32xf32>
    %60 = tpu.matmul %58, %59, %cst_32 {dimension_numbers = #tpu.dot_dimension_numbers<[1], [0], [0], [1], [0, 0, 1, 1], [], []>} : vector<24x16xf32>, vector<16x32xf32>, vector<24x32xf32> -> vector<24x32xf32>
    %61 = arith.addf %41, %60 : vector<24x32xf32>
    %62 = vector.extract_strided_slice %38 {offsets = [0, 16], sizes = [24, 16], strides = [1, 1]} : vector<24x192xf32> to vector<24x16xf32>
    %63 = vector.extract_strided_slice %38 {offsets = [0, 80], sizes = [24, 16], strides = [1, 1]} : vector<24x192xf32> to vector<24x16xf32>
    %64 = vector.extract_strided_slice %38 {offsets = [0, 144], sizes = [24, 16], strides = [1, 1]} : vector<24x192xf32> to vector<24x16xf32>
    %cst_33 = arith.constant dense<0.000000e+00> : vector<24x24xf32>
    %65 = tpu.matmul %62, %63, %cst_33 {dimension_numbers = #tpu.dot_dimension_numbers<[1], [1], [0], [0], [0, 0, 1, 0], [], []>} : vector<24x16xf32>, vector<24x16xf32>, vector<24x24xf32> -> vector<24x24xf32>
    %cst_34 = arith.constant 2.500000e-01 : f32
    %66 = vector.broadcast %cst_34 : f32 to vector<24x24xf32>
    %67 = arith.mulf %65, %66 : vector<24x24xf32>
    %68 = arith.addf %67, %11 : vector<24x24xf32>
    %cst_35 = arith.constant dense<0xFF800000> : vector<24xf32>
    %69 = vector.multi_reduction <maximumf>, %68, %cst_35 [1] : vector<24x24xf32> to vector<24xf32>
    %70 = vector.shape_cast %69 : vector<24xf32> to vector<24x1xf32>
    %71 = vector.broadcast %70 : vector<24x1xf32> to vector<24x24xf32>
    %72 = arith.subf %68, %71 : vector<24x24xf32>
    %73 = math.exp %72 : vector<24x24xf32>
    %cst_36 = arith.constant dense<0.000000e+00> : vector<24xf32>
    %74 = vector.multi_reduction <add>, %73, %cst_36 [1] : vector<24x24xf32> to vector<24xf32>
    %75 = vector.shape_cast %74 : vector<24xf32> to vector<24x1xf32>
    %76 = vector.broadcast %75 : vector<24x1xf32> to vector<24x24xf32>
    %77 = arith.divf %73, %76 : vector<24x24xf32>
    %cst_37 = arith.constant dense<0.000000e+00> : vector<24x16xf32>
    %78 = tpu.matmul %77, %64, %cst_37 {dimension_numbers = #tpu.dot_dimension_numbers<[1], [0], [0], [1], [0, 0, 1, 1], [], []>} : vector<24x24xf32>, vector<24x16xf32>, vector<24x16xf32> -> vector<24x16xf32>
    %79 = vector.extract_strided_slice %40 {offsets = [16, 0], sizes = [16, 32], strides = [1, 1]} : vector<64x32xf32> to vector<16x32xf32>
    %cst_38 = arith.constant dense<0.000000e+00> : vector<24x32xf32>
    %80 = tpu.matmul %78, %79, %cst_38 {dimension_numbers = #tpu.dot_dimension_numbers<[1], [0], [0], [1], [0, 0, 1, 1], [], []>} : vector<24x16xf32>, vector<16x32xf32>, vector<24x32xf32> -> vector<24x32xf32>
    %81 = arith.addf %61, %80 : vector<24x32xf32>
    %82 = vector.extract_strided_slice %38 {offsets = [0, 32], sizes = [24, 16], strides = [1, 1]} : vector<24x192xf32> to vector<24x16xf32>
    %83 = vector.extract_strided_slice %38 {offsets = [0, 96], sizes = [24, 16], strides = [1, 1]} : vector<24x192xf32> to vector<24x16xf32>
    %84 = vector.extract_strided_slice %38 {offsets = [0, 160], sizes = [24, 16], strides = [1, 1]} : vector<24x192xf32> to vector<24x16xf32>
    %cst_39 = arith.constant dense<0.000000e+00> : vector<24x24xf32>
    %85 = tpu.matmul %82, %83, %cst_39 {dimension_numbers = #tpu.dot_dimension_numbers<[1], [1], [0], [0], [0, 0, 1, 0], [], []>} : vector<24x16xf32>, vector<24x16xf32>, vector<24x24xf32> -> vector<24x24xf32>
    %cst_40 = arith.constant 2.500000e-01 : f32
    %86 = vector.broadcast %cst_40 : f32 to vector<24x24xf32>
    %87 = arith.mulf %85, %86 : vector<24x24xf32>
    %88 = arith.addf %87, %11 : vector<24x24xf32>
    %cst_41 = arith.constant dense<0xFF800000> : vector<24xf32>
    %89 = vector.multi_reduction <maximumf>, %88, %cst_41 [1] : vector<24x24xf32> to vector<24xf32>
    %90 = vector.shape_cast %89 : vector<24xf32> to vector<24x1xf32>
    %91 = vector.broadcast %90 : vector<24x1xf32> to vector<24x24xf32>
    %92 = arith.subf %88, %91 : vector<24x24xf32>
    %93 = math.exp %92 : vector<24x24xf32>
    %cst_42 = arith.constant dense<0.000000e+00> : vector<24xf32>
    %94 = vector.multi_reduction <add>, %93, %cst_42 [1] : vector<24x24xf32> to vector<24xf32>
    %95 = vector.shape_cast %94 : vector<24xf32> to vector<24x1xf32>
    %96 = vector.broadcast %95 : vector<24x1xf32> to vector<24x24xf32>
    %97 = arith.divf %93, %96 : vector<24x24xf32>
    %cst_43 = arith.constant dense<0.000000e+00> : vector<24x16xf32>
    %98 = tpu.matmul %97, %84, %cst_43 {dimension_numbers = #tpu.dot_dimension_numbers<[1], [0], [0], [1], [0, 0, 1, 1], [], []>} : vector<24x24xf32>, vector<24x16xf32>, vector<24x16xf32> -> vector<24x16xf32>
    %99 = vector.extract_strided_slice %40 {offsets = [32, 0], sizes = [16, 32], strides = [1, 1]} : vector<64x32xf32> to vector<16x32xf32>
    %cst_44 = arith.constant dense<0.000000e+00> : vector<24x32xf32>
    %100 = tpu.matmul %98, %99, %cst_44 {dimension_numbers = #tpu.dot_dimension_numbers<[1], [0], [0], [1], [0, 0, 1, 1], [], []>} : vector<24x16xf32>, vector<16x32xf32>, vector<24x32xf32> -> vector<24x32xf32>
    %101 = arith.addf %81, %100 : vector<24x32xf32>
    %102 = vector.extract_strided_slice %38 {offsets = [0, 48], sizes = [24, 16], strides = [1, 1]} : vector<24x192xf32> to vector<24x16xf32>
    %103 = vector.extract_strided_slice %38 {offsets = [0, 112], sizes = [24, 16], strides = [1, 1]} : vector<24x192xf32> to vector<24x16xf32>
    %104 = vector.extract_strided_slice %38 {offsets = [0, 176], sizes = [24, 16], strides = [1, 1]} : vector<24x192xf32> to vector<24x16xf32>
    %cst_45 = arith.constant dense<0.000000e+00> : vector<24x24xf32>
    %105 = tpu.matmul %102, %103, %cst_45 {dimension_numbers = #tpu.dot_dimension_numbers<[1], [1], [0], [0], [0, 0, 1, 0], [], []>} : vector<24x16xf32>, vector<24x16xf32>, vector<24x24xf32> -> vector<24x24xf32>
    %cst_46 = arith.constant 2.500000e-01 : f32
    %106 = vector.broadcast %cst_46 : f32 to vector<24x24xf32>
    %107 = arith.mulf %105, %106 : vector<24x24xf32>
    %108 = arith.addf %107, %11 : vector<24x24xf32>
    %cst_47 = arith.constant dense<0xFF800000> : vector<24xf32>
    %109 = vector.multi_reduction <maximumf>, %108, %cst_47 [1] : vector<24x24xf32> to vector<24xf32>
    %110 = vector.shape_cast %109 : vector<24xf32> to vector<24x1xf32>
    %111 = vector.broadcast %110 : vector<24x1xf32> to vector<24x24xf32>
    %112 = arith.subf %108, %111 : vector<24x24xf32>
    %113 = math.exp %112 : vector<24x24xf32>
    %cst_48 = arith.constant dense<0.000000e+00> : vector<24xf32>
    %114 = vector.multi_reduction <add>, %113, %cst_48 [1] : vector<24x24xf32> to vector<24xf32>
    %115 = vector.shape_cast %114 : vector<24xf32> to vector<24x1xf32>
    %116 = vector.broadcast %115 : vector<24x1xf32> to vector<24x24xf32>
    %117 = arith.divf %113, %116 : vector<24x24xf32>
    %cst_49 = arith.constant dense<0.000000e+00> : vector<24x16xf32>
    %118 = tpu.matmul %117, %104, %cst_49 {dimension_numbers = #tpu.dot_dimension_numbers<[1], [0], [0], [1], [0, 0, 1, 1], [], []>} : vector<24x24xf32>, vector<24x16xf32>, vector<24x16xf32> -> vector<24x16xf32>
    %119 = vector.extract_strided_slice %40 {offsets = [48, 0], sizes = [16, 32], strides = [1, 1]} : vector<64x32xf32> to vector<16x32xf32>
    %cst_50 = arith.constant dense<0.000000e+00> : vector<24x32xf32>
    %120 = tpu.matmul %118, %119, %cst_50 {dimension_numbers = #tpu.dot_dimension_numbers<[1], [0], [0], [1], [0, 0, 1, 1], [], []>} : vector<24x16xf32>, vector<16x32xf32>, vector<24x32xf32> -> vector<24x32xf32>
    %121 = arith.addf %101, %120 : vector<24x32xf32>
    %122 = arith.addf %5, %121 : vector<24x32xf32>
    %c0_51 = arith.constant 0 : index
    %c0_52 = arith.constant 0 : index
    %c0_53 = arith.constant 0 : index
    %123 = vector.load %arg8[%c0_51, %c0_52, %c0_53] : memref<2x1x32xf32, #tpu.memory_space<vmem>>, vector<1x1x32xf32>
    %124 = vector.shape_cast %123 : vector<1x1x32xf32> to vector<1x32xf32>
    %125 = vector.broadcast %124 : vector<1x32xf32> to vector<24x32xf32>
    %126 = arith.addf %122, %125 : vector<24x32xf32>
    %c0_54 = arith.constant 0 : index
    %c0_55 = arith.constant 0 : index
    %c0_56 = arith.constant 0 : index
    %127 = vector.load %arg9[%c0_54, %c0_55, %c0_56] : memref<2x1x32xf32, #tpu.memory_space<vmem>>, vector<1x1x32xf32>
    %128 = vector.shape_cast %127 : vector<1x1x32xf32> to vector<1x32xf32>
    %c0_57 = arith.constant 0 : index
    %c0_58 = arith.constant 0 : index
    %c0_59 = arith.constant 0 : index
    %129 = vector.load %arg10[%c0_57, %c0_58, %c0_59] : memref<2x1x32xf32, #tpu.memory_space<vmem>>, vector<1x1x32xf32>
    %130 = vector.shape_cast %129 : vector<1x1x32xf32> to vector<1x32xf32>
    %cst_60 = arith.constant dense<0.000000e+00> : vector<24xf32>
    %131 = vector.multi_reduction <add>, %126, %cst_60 [1] : vector<24x32xf32> to vector<24xf32>
    %132 = vector.shape_cast %131 : vector<24xf32> to vector<24x1xf32>
    %cst_61 = arith.constant 3.200000e+01 : f32
    %133 = vector.broadcast %cst_61 : f32 to vector<24x1xf32>
    %134 = arith.divf %132, %133 : vector<24x1xf32>
    %135 = vector.broadcast %134 : vector<24x1xf32> to vector<24x32xf32>
    %136 = arith.subf %126, %135 : vector<24x32xf32>
    %137 = arith.mulf %136, %136 : vector<24x32xf32>
    %cst_62 = arith.constant dense<0.000000e+00> : vector<24xf32>
    %138 = vector.multi_reduction <add>, %137, %cst_62 [1] : vector<24x32xf32> to vector<24xf32>
    %139 = vector.shape_cast %138 : vector<24xf32> to vector<24x1xf32>
    %cst_63 = arith.constant 3.200000e+01 : f32
    %140 = vector.broadcast %cst_63 : f32 to vector<24x1xf32>
    %141 = arith.divf %139, %140 : vector<24x1xf32>
    %cst_64 = arith.constant 9.99999974E-6 : f32
    %142 = vector.broadcast %cst_64 : f32 to vector<24x1xf32>
    %143 = arith.addf %141, %142 : vector<24x1xf32>
    %144 = math.rsqrt %143 : vector<24x1xf32>
    %145 = vector.broadcast %144 : vector<24x1xf32> to vector<24x32xf32>
    %146 = arith.mulf %136, %145 : vector<24x32xf32>
    %147 = vector.broadcast %128 : vector<1x32xf32> to vector<24x32xf32>
    %148 = arith.mulf %146, %147 : vector<24x32xf32>
    %149 = vector.broadcast %130 : vector<1x32xf32> to vector<24x32xf32>
    %150 = arith.addf %148, %149 : vector<24x32xf32>
    %c0_65 = arith.constant 0 : index
    %c0_66 = arith.constant 0 : index
    %c0_67 = arith.constant 0 : index
    %151 = vector.load %arg11[%c0_65, %c0_66, %c0_67] : memref<2x32x64xf32, #tpu.memory_space<vmem>>, vector<1x32x64xf32>
    %152 = vector.shape_cast %151 : vector<1x32x64xf32> to vector<32x64xf32>
    %cst_68 = arith.constant dense<0.000000e+00> : vector<24x64xf32>
    %153 = tpu.matmul %150, %152, %cst_68 {dimension_numbers = #tpu.dot_dimension_numbers<[1], [0], [0], [1], [0, 0, 1, 1], [], []>} : vector<24x32xf32>, vector<32x64xf32>, vector<24x64xf32> -> vector<24x64xf32>
    %c0_69 = arith.constant 0 : index
    %c0_70 = arith.constant 0 : index
    %c0_71 = arith.constant 0 : index
    %154 = vector.load %arg12[%c0_69, %c0_70, %c0_71] : memref<2x1x64xf32, #tpu.memory_space<vmem>>, vector<1x1x64xf32>
    %155 = vector.shape_cast %154 : vector<1x1x64xf32> to vector<1x64xf32>
    %156 = vector.broadcast %155 : vector<1x64xf32> to vector<24x64xf32>
    %157 = arith.addf %153, %156 : vector<24x64xf32>
    %cst_72 = arith.constant 5.000000e-01 : f32
    %158 = vector.broadcast %cst_72 : f32 to vector<24x64xf32>
    %159 = arith.mulf %158, %157 : vector<24x64xf32>
    %cst_73 = arith.constant 0.707106769 : f32
    %160 = vector.broadcast %cst_73 : f32 to vector<24x64xf32>
    %161 = arith.mulf %157, %160 : vector<24x64xf32>
    %162 = math.erf %161 : vector<24x64xf32>
    %cst_74 = arith.constant 1.000000e+00 : f32
    %163 = vector.broadcast %cst_74 : f32 to vector<24x64xf32>
    %164 = arith.addf %163, %162 : vector<24x64xf32>
    %165 = arith.mulf %159, %164 : vector<24x64xf32>
    %c0_75 = arith.constant 0 : index
    %c0_76 = arith.constant 0 : index
    %c0_77 = arith.constant 0 : index
    %166 = vector.load %arg13[%c0_75, %c0_76, %c0_77] : memref<2x64x32xf32, #tpu.memory_space<vmem>>, vector<1x64x32xf32>
    %167 = vector.shape_cast %166 : vector<1x64x32xf32> to vector<64x32xf32>
    %cst_78 = arith.constant dense<0.000000e+00> : vector<24x32xf32>
    %168 = tpu.matmul %165, %167, %cst_78 {dimension_numbers = #tpu.dot_dimension_numbers<[1], [0], [0], [1], [0, 0, 1, 1], [], []>} : vector<24x64xf32>, vector<64x32xf32>, vector<24x32xf32> -> vector<24x32xf32>
    %c0_79 = arith.constant 0 : index
    %c0_80 = arith.constant 0 : index
    %c0_81 = arith.constant 0 : index
    %169 = vector.load %arg14[%c0_79, %c0_80, %c0_81] : memref<2x1x32xf32, #tpu.memory_space<vmem>>, vector<1x1x32xf32>
    %170 = vector.shape_cast %169 : vector<1x1x32xf32> to vector<1x32xf32>
    %171 = vector.broadcast %170 : vector<1x32xf32> to vector<24x32xf32>
    %172 = arith.addf %168, %171 : vector<24x32xf32>
    %173 = arith.addf %126, %172 : vector<24x32xf32>
    %c1 = arith.constant 1 : index
    %c0_82 = arith.constant 0 : index
    %c0_83 = arith.constant 0 : index
    %174 = vector.load %arg4[%c1, %c0_82, %c0_83] : memref<2x1x32xf32, #tpu.memory_space<vmem>>, vector<1x1x32xf32>
    %175 = vector.shape_cast %174 : vector<1x1x32xf32> to vector<1x32xf32>
    %c1_84 = arith.constant 1 : index
    %c0_85 = arith.constant 0 : index
    %c0_86 = arith.constant 0 : index
    %176 = vector.load %arg5[%c1_84, %c0_85, %c0_86] : memref<2x1x32xf32, #tpu.memory_space<vmem>>, vector<1x1x32xf32>
    %177 = vector.shape_cast %176 : vector<1x1x32xf32> to vector<1x32xf32>
    %cst_87 = arith.constant dense<0.000000e+00> : vector<24xf32>
    %178 = vector.multi_reduction <add>, %173, %cst_87 [1] : vector<24x32xf32> to vector<24xf32>
    %179 = vector.shape_cast %178 : vector<24xf32> to vector<24x1xf32>
    %cst_88 = arith.constant 3.200000e+01 : f32
    %180 = vector.broadcast %cst_88 : f32 to vector<24x1xf32>
    %181 = arith.divf %179, %180 : vector<24x1xf32>
    %182 = vector.broadcast %181 : vector<24x1xf32> to vector<24x32xf32>
    %183 = arith.subf %173, %182 : vector<24x32xf32>
    %184 = arith.mulf %183, %183 : vector<24x32xf32>
    %cst_89 = arith.constant dense<0.000000e+00> : vector<24xf32>
    %185 = vector.multi_reduction <add>, %184, %cst_89 [1] : vector<24x32xf32> to vector<24xf32>
    %186 = vector.shape_cast %185 : vector<24xf32> to vector<24x1xf32>
    %cst_90 = arith.constant 3.200000e+01 : f32
    %187 = vector.broadcast %cst_90 : f32 to vector<24x1xf32>
    %188 = arith.divf %186, %187 : vector<24x1xf32>
    %cst_91 = arith.constant 9.99999974E-6 : f32
    %189 = vector.broadcast %cst_91 : f32 to vector<24x1xf32>
    %190 = arith.addf %188, %189 : vector<24x1xf32>
    %191 = math.rsqrt %190 : vector<24x1xf32>
    %192 = vector.broadcast %191 : vector<24x1xf32> to vector<24x32xf32>
    %193 = arith.mulf %183, %192 : vector<24x32xf32>
    %194 = vector.broadcast %175 : vector<1x32xf32> to vector<24x32xf32>
    %195 = arith.mulf %193, %194 : vector<24x32xf32>
    %196 = vector.broadcast %177 : vector<1x32xf32> to vector<24x32xf32>
    %197 = arith.addf %195, %196 : vector<24x32xf32>
    %c1_92 = arith.constant 1 : index
    %c0_93 = arith.constant 0 : index
    %c0_94 = arith.constant 0 : index
    %198 = vector.load %arg6[%c1_92, %c0_93, %c0_94] : memref<2x32x192xf32, #tpu.memory_space<vmem>>, vector<1x32x192xf32>
    %199 = vector.shape_cast %198 : vector<1x32x192xf32> to vector<32x192xf32>
    %cst_95 = arith.constant dense<0.000000e+00> : vector<24x192xf32>
    %200 = tpu.matmul %197, %199, %cst_95 {dimension_numbers = #tpu.dot_dimension_numbers<[1], [0], [0], [1], [0, 0, 1, 1], [], []>} : vector<24x32xf32>, vector<32x192xf32>, vector<24x192xf32> -> vector<24x192xf32>
    %c1_96 = arith.constant 1 : index
    %c0_97 = arith.constant 0 : index
    %c0_98 = arith.constant 0 : index
    %201 = vector.load %arg7[%c1_96, %c0_97, %c0_98] : memref<2x64x32xf32, #tpu.memory_space<vmem>>, vector<1x64x32xf32>
    %202 = vector.shape_cast %201 : vector<1x64x32xf32> to vector<64x32xf32>
    %cst_99 = arith.constant 0.000000e+00 : f32
    %203 = vector.broadcast %cst_99 : f32 to vector<24x32xf32>
    %204 = vector.extract_strided_slice %200 {offsets = [0, 0], sizes = [24, 16], strides = [1, 1]} : vector<24x192xf32> to vector<24x16xf32>
    %205 = vector.extract_strided_slice %200 {offsets = [0, 64], sizes = [24, 16], strides = [1, 1]} : vector<24x192xf32> to vector<24x16xf32>
    %206 = vector.extract_strided_slice %200 {offsets = [0, 128], sizes = [24, 16], strides = [1, 1]} : vector<24x192xf32> to vector<24x16xf32>
    %cst_100 = arith.constant dense<0.000000e+00> : vector<24x24xf32>
    %207 = tpu.matmul %204, %205, %cst_100 {dimension_numbers = #tpu.dot_dimension_numbers<[1], [1], [0], [0], [0, 0, 1, 0], [], []>} : vector<24x16xf32>, vector<24x16xf32>, vector<24x24xf32> -> vector<24x24xf32>
    %cst_101 = arith.constant 2.500000e-01 : f32
    %208 = vector.broadcast %cst_101 : f32 to vector<24x24xf32>
    %209 = arith.mulf %207, %208 : vector<24x24xf32>
    %210 = arith.addf %209, %11 : vector<24x24xf32>
    %cst_102 = arith.constant dense<0xFF800000> : vector<24xf32>
    %211 = vector.multi_reduction <maximumf>, %210, %cst_102 [1] : vector<24x24xf32> to vector<24xf32>
    %212 = vector.shape_cast %211 : vector<24xf32> to vector<24x1xf32>
    %213 = vector.broadcast %212 : vector<24x1xf32> to vector<24x24xf32>
    %214 = arith.subf %210, %213 : vector<24x24xf32>
    %215 = math.exp %214 : vector<24x24xf32>
    %cst_103 = arith.constant dense<0.000000e+00> : vector<24xf32>
    %216 = vector.multi_reduction <add>, %215, %cst_103 [1] : vector<24x24xf32> to vector<24xf32>
    %217 = vector.shape_cast %216 : vector<24xf32> to vector<24x1xf32>
    %218 = vector.broadcast %217 : vector<24x1xf32> to vector<24x24xf32>
    %219 = arith.divf %215, %218 : vector<24x24xf32>
    %cst_104 = arith.constant dense<0.000000e+00> : vector<24x16xf32>
    %220 = tpu.matmul %219, %206, %cst_104 {dimension_numbers = #tpu.dot_dimension_numbers<[1], [0], [0], [1], [0, 0, 1, 1], [], []>} : vector<24x24xf32>, vector<24x16xf32>, vector<24x16xf32> -> vector<24x16xf32>
    %221 = vector.extract_strided_slice %202 {offsets = [0, 0], sizes = [16, 32], strides = [1, 1]} : vector<64x32xf32> to vector<16x32xf32>
    %cst_105 = arith.constant dense<0.000000e+00> : vector<24x32xf32>
    %222 = tpu.matmul %220, %221, %cst_105 {dimension_numbers = #tpu.dot_dimension_numbers<[1], [0], [0], [1], [0, 0, 1, 1], [], []>} : vector<24x16xf32>, vector<16x32xf32>, vector<24x32xf32> -> vector<24x32xf32>
    %223 = arith.addf %203, %222 : vector<24x32xf32>
    %224 = vector.extract_strided_slice %200 {offsets = [0, 16], sizes = [24, 16], strides = [1, 1]} : vector<24x192xf32> to vector<24x16xf32>
    %225 = vector.extract_strided_slice %200 {offsets = [0, 80], sizes = [24, 16], strides = [1, 1]} : vector<24x192xf32> to vector<24x16xf32>
    %226 = vector.extract_strided_slice %200 {offsets = [0, 144], sizes = [24, 16], strides = [1, 1]} : vector<24x192xf32> to vector<24x16xf32>
    %cst_106 = arith.constant dense<0.000000e+00> : vector<24x24xf32>
    %227 = tpu.matmul %224, %225, %cst_106 {dimension_numbers = #tpu.dot_dimension_numbers<[1], [1], [0], [0], [0, 0, 1, 0], [], []>} : vector<24x16xf32>, vector<24x16xf32>, vector<24x24xf32> -> vector<24x24xf32>
    %cst_107 = arith.constant 2.500000e-01 : f32
    %228 = vector.broadcast %cst_107 : f32 to vector<24x24xf32>
    %229 = arith.mulf %227, %228 : vector<24x24xf32>
    %230 = arith.addf %229, %11 : vector<24x24xf32>
    %cst_108 = arith.constant dense<0xFF800000> : vector<24xf32>
    %231 = vector.multi_reduction <maximumf>, %230, %cst_108 [1] : vector<24x24xf32> to vector<24xf32>
    %232 = vector.shape_cast %231 : vector<24xf32> to vector<24x1xf32>
    %233 = vector.broadcast %232 : vector<24x1xf32> to vector<24x24xf32>
    %234 = arith.subf %230, %233 : vector<24x24xf32>
    %235 = math.exp %234 : vector<24x24xf32>
    %cst_109 = arith.constant dense<0.000000e+00> : vector<24xf32>
    %236 = vector.multi_reduction <add>, %235, %cst_109 [1] : vector<24x24xf32> to vector<24xf32>
    %237 = vector.shape_cast %236 : vector<24xf32> to vector<24x1xf32>
    %238 = vector.broadcast %237 : vector<24x1xf32> to vector<24x24xf32>
    %239 = arith.divf %235, %238 : vector<24x24xf32>
    %cst_110 = arith.constant dense<0.000000e+00> : vector<24x16xf32>
    %240 = tpu.matmul %239, %226, %cst_110 {dimension_numbers = #tpu.dot_dimension_numbers<[1], [0], [0], [1], [0, 0, 1, 1], [], []>} : vector<24x24xf32>, vector<24x16xf32>, vector<24x16xf32> -> vector<24x16xf32>
    %241 = vector.extract_strided_slice %202 {offsets = [16, 0], sizes = [16, 32], strides = [1, 1]} : vector<64x32xf32> to vector<16x32xf32>
    %cst_111 = arith.constant dense<0.000000e+00> : vector<24x32xf32>
    %242 = tpu.matmul %240, %241, %cst_111 {dimension_numbers = #tpu.dot_dimension_numbers<[1], [0], [0], [1], [0, 0, 1, 1], [], []>} : vector<24x16xf32>, vector<16x32xf32>, vector<24x32xf32> -> vector<24x32xf32>
    %243 = arith.addf %223, %242 : vector<24x32xf32>
    %244 = vector.extract_strided_slice %200 {offsets = [0, 32], sizes = [24, 16], strides = [1, 1]} : vector<24x192xf32> to vector<24x16xf32>
    %245 = vector.extract_strided_slice %200 {offsets = [0, 96], sizes = [24, 16], strides = [1, 1]} : vector<24x192xf32> to vector<24x16xf32>
    %246 = vector.extract_strided_slice %200 {offsets = [0, 160], sizes = [24, 16], strides = [1, 1]} : vector<24x192xf32> to vector<24x16xf32>
    %cst_112 = arith.constant dense<0.000000e+00> : vector<24x24xf32>
    %247 = tpu.matmul %244, %245, %cst_112 {dimension_numbers = #tpu.dot_dimension_numbers<[1], [1], [0], [0], [0, 0, 1, 0], [], []>} : vector<24x16xf32>, vector<24x16xf32>, vector<24x24xf32> -> vector<24x24xf32>
    %cst_113 = arith.constant 2.500000e-01 : f32
    %248 = vector.broadcast %cst_113 : f32 to vector<24x24xf32>
    %249 = arith.mulf %247, %248 : vector<24x24xf32>
    %250 = arith.addf %249, %11 : vector<24x24xf32>
    %cst_114 = arith.constant dense<0xFF800000> : vector<24xf32>
    %251 = vector.multi_reduction <maximumf>, %250, %cst_114 [1] : vector<24x24xf32> to vector<24xf32>
    %252 = vector.shape_cast %251 : vector<24xf32> to vector<24x1xf32>
    %253 = vector.broadcast %252 : vector<24x1xf32> to vector<24x24xf32>
    %254 = arith.subf %250, %253 : vector<24x24xf32>
    %255 = math.exp %254 : vector<24x24xf32>
    %cst_115 = arith.constant dense<0.000000e+00> : vector<24xf32>
    %256 = vector.multi_reduction <add>, %255, %cst_115 [1] : vector<24x24xf32> to vector<24xf32>
    %257 = vector.shape_cast %256 : vector<24xf32> to vector<24x1xf32>
    %258 = vector.broadcast %257 : vector<24x1xf32> to vector<24x24xf32>
    %259 = arith.divf %255, %258 : vector<24x24xf32>
    %cst_116 = arith.constant dense<0.000000e+00> : vector<24x16xf32>
    %260 = tpu.matmul %259, %246, %cst_116 {dimension_numbers = #tpu.dot_dimension_numbers<[1], [0], [0], [1], [0, 0, 1, 1], [], []>} : vector<24x24xf32>, vector<24x16xf32>, vector<24x16xf32> -> vector<24x16xf32>
    %261 = vector.extract_strided_slice %202 {offsets = [32, 0], sizes = [16, 32], strides = [1, 1]} : vector<64x32xf32> to vector<16x32xf32>
    %cst_117 = arith.constant dense<0.000000e+00> : vector<24x32xf32>
    %262 = tpu.matmul %260, %261, %cst_117 {dimension_numbers = #tpu.dot_dimension_numbers<[1], [0], [0], [1], [0, 0, 1, 1], [], []>} : vector<24x16xf32>, vector<16x32xf32>, vector<24x32xf32> -> vector<24x32xf32>
    %263 = arith.addf %243, %262 : vector<24x32xf32>
    %264 = vector.extract_strided_slice %200 {offsets = [0, 48], sizes = [24, 16], strides = [1, 1]} : vector<24x192xf32> to vector<24x16xf32>
    %265 = vector.extract_strided_slice %200 {offsets = [0, 112], sizes = [24, 16], strides = [1, 1]} : vector<24x192xf32> to vector<24x16xf32>
    %266 = vector.extract_strided_slice %200 {offsets = [0, 176], sizes = [24, 16], strides = [1, 1]} : vector<24x192xf32> to vector<24x16xf32>
    %cst_118 = arith.constant dense<0.000000e+00> : vector<24x24xf32>
    %267 = tpu.matmul %264, %265, %cst_118 {dimension_numbers = #tpu.dot_dimension_numbers<[1], [1], [0], [0], [0, 0, 1, 0], [], []>} : vector<24x16xf32>, vector<24x16xf32>, vector<24x24xf32> -> vector<24x24xf32>
    %cst_119 = arith.constant 2.500000e-01 : f32
    %268 = vector.broadcast %cst_119 : f32 to vector<24x24xf32>
    %269 = arith.mulf %267, %268 : vector<24x24xf32>
    %270 = arith.addf %269, %11 : vector<24x24xf32>
    %cst_120 = arith.constant dense<0xFF800000> : vector<24xf32>
    %271 = vector.multi_reduction <maximumf>, %270, %cst_120 [1] : vector<24x24xf32> to vector<24xf32>
    %272 = vector.shape_cast %271 : vector<24xf32> to vector<24x1xf32>
    %273 = vector.broadcast %272 : vector<24x1xf32> to vector<24x24xf32>
    %274 = arith.subf %270, %273 : vector<24x24xf32>
    %275 = math.exp %274 : vector<24x24xf32>
    %cst_121 = arith.constant dense<0.000000e+00> : vector<24xf32>
    %276 = vector.multi_reduction <add>, %275, %cst_121 [1] : vector<24x24xf32> to vector<24xf32>
    %277 = vector.shape_cast %276 : vector<24xf32> to vector<24x1xf32>
    %278 = vector.broadcast %277 : vector<24x1xf32> to vector<24x24xf32>
    %279 = arith.divf %275, %278 : vector<24x24xf32>
    %cst_122 = arith.constant dense<0.000000e+00> : vector<24x16xf32>
    %280 = tpu.matmul %279, %266, %cst_122 {dimension_numbers = #tpu.dot_dimension_numbers<[1], [0], [0], [1], [0, 0, 1, 1], [], []>} : vector<24x24xf32>, vector<24x16xf32>, vector<24x16xf32> -> vector<24x16xf32>
    %281 = vector.extract_strided_slice %202 {offsets = [48, 0], sizes = [16, 32], strides = [1, 1]} : vector<64x32xf32> to vector<16x32xf32>
    %cst_123 = arith.constant dense<0.000000e+00> : vector<24x32xf32>
    %282 = tpu.matmul %280, %281, %cst_123 {dimension_numbers = #tpu.dot_dimension_numbers<[1], [0], [0], [1], [0, 0, 1, 1], [], []>} : vector<24x16xf32>, vector<16x32xf32>, vector<24x32xf32> -> vector<24x32xf32>
    %283 = arith.addf %263, %282 : vector<24x32xf32>
    %284 = arith.addf %173, %283 : vector<24x32xf32>
    %c1_124 = arith.constant 1 : index
    %c0_125 = arith.constant 0 : index
    %c0_126 = arith.constant 0 : index
    %285 = vector.load %arg8[%c1_124, %c0_125, %c0_126] : memref<2x1x32xf32, #tpu.memory_space<vmem>>, vector<1x1x32xf32>
    %286 = vector.shape_cast %285 : vector<1x1x32xf32> to vector<1x32xf32>
    %287 = vector.broadcast %286 : vector<1x32xf32> to vector<24x32xf32>
    %288 = arith.addf %284, %287 : vector<24x32xf32>
    %c1_127 = arith.constant 1 : index
    %c0_128 = arith.constant 0 : index
    %c0_129 = arith.constant 0 : index
    %289 = vector.load %arg9[%c1_127, %c0_128, %c0_129] : memref<2x1x32xf32, #tpu.memory_space<vmem>>, vector<1x1x32xf32>
    %290 = vector.shape_cast %289 : vector<1x1x32xf32> to vector<1x32xf32>
    %c1_130 = arith.constant 1 : index
    %c0_131 = arith.constant 0 : index
    %c0_132 = arith.constant 0 : index
    %291 = vector.load %arg10[%c1_130, %c0_131, %c0_132] : memref<2x1x32xf32, #tpu.memory_space<vmem>>, vector<1x1x32xf32>
    %292 = vector.shape_cast %291 : vector<1x1x32xf32> to vector<1x32xf32>
    %cst_133 = arith.constant dense<0.000000e+00> : vector<24xf32>
    %293 = vector.multi_reduction <add>, %288, %cst_133 [1] : vector<24x32xf32> to vector<24xf32>
    %294 = vector.shape_cast %293 : vector<24xf32> to vector<24x1xf32>
    %cst_134 = arith.constant 3.200000e+01 : f32
    %295 = vector.broadcast %cst_134 : f32 to vector<24x1xf32>
    %296 = arith.divf %294, %295 : vector<24x1xf32>
    %297 = vector.broadcast %296 : vector<24x1xf32> to vector<24x32xf32>
    %298 = arith.subf %288, %297 : vector<24x32xf32>
    %299 = arith.mulf %298, %298 : vector<24x32xf32>
    %cst_135 = arith.constant dense<0.000000e+00> : vector<24xf32>
    %300 = vector.multi_reduction <add>, %299, %cst_135 [1] : vector<24x32xf32> to vector<24xf32>
    %301 = vector.shape_cast %300 : vector<24xf32> to vector<24x1xf32>
    %cst_136 = arith.constant 3.200000e+01 : f32
    %302 = vector.broadcast %cst_136 : f32 to vector<24x1xf32>
    %303 = arith.divf %301, %302 : vector<24x1xf32>
    %cst_137 = arith.constant 9.99999974E-6 : f32
    %304 = vector.broadcast %cst_137 : f32 to vector<24x1xf32>
    %305 = arith.addf %303, %304 : vector<24x1xf32>
    %306 = math.rsqrt %305 : vector<24x1xf32>
    %307 = vector.broadcast %306 : vector<24x1xf32> to vector<24x32xf32>
    %308 = arith.mulf %298, %307 : vector<24x32xf32>
    %309 = vector.broadcast %290 : vector<1x32xf32> to vector<24x32xf32>
    %310 = arith.mulf %308, %309 : vector<24x32xf32>
    %311 = vector.broadcast %292 : vector<1x32xf32> to vector<24x32xf32>
    %312 = arith.addf %310, %311 : vector<24x32xf32>
    %c1_138 = arith.constant 1 : index
    %c0_139 = arith.constant 0 : index
    %c0_140 = arith.constant 0 : index
    %313 = vector.load %arg11[%c1_138, %c0_139, %c0_140] : memref<2x32x64xf32, #tpu.memory_space<vmem>>, vector<1x32x64xf32>
    %314 = vector.shape_cast %313 : vector<1x32x64xf32> to vector<32x64xf32>
    %cst_141 = arith.constant dense<0.000000e+00> : vector<24x64xf32>
    %315 = tpu.matmul %312, %314, %cst_141 {dimension_numbers = #tpu.dot_dimension_numbers<[1], [0], [0], [1], [0, 0, 1, 1], [], []>} : vector<24x32xf32>, vector<32x64xf32>, vector<24x64xf32> -> vector<24x64xf32>
    %c1_142 = arith.constant 1 : index
    %c0_143 = arith.constant 0 : index
    %c0_144 = arith.constant 0 : index
    %316 = vector.load %arg12[%c1_142, %c0_143, %c0_144] : memref<2x1x64xf32, #tpu.memory_space<vmem>>, vector<1x1x64xf32>
    %317 = vector.shape_cast %316 : vector<1x1x64xf32> to vector<1x64xf32>
    %318 = vector.broadcast %317 : vector<1x64xf32> to vector<24x64xf32>
    %319 = arith.addf %315, %318 : vector<24x64xf32>
    %cst_145 = arith.constant 5.000000e-01 : f32
    %320 = vector.broadcast %cst_145 : f32 to vector<24x64xf32>
    %321 = arith.mulf %320, %319 : vector<24x64xf32>
    %cst_146 = arith.constant 0.707106769 : f32
    %322 = vector.broadcast %cst_146 : f32 to vector<24x64xf32>
    %323 = arith.mulf %319, %322 : vector<24x64xf32>
    %324 = math.erf %323 : vector<24x64xf32>
    %cst_147 = arith.constant 1.000000e+00 : f32
    %325 = vector.broadcast %cst_147 : f32 to vector<24x64xf32>
    %326 = arith.addf %325, %324 : vector<24x64xf32>
    %327 = arith.mulf %321, %326 : vector<24x64xf32>
    %c1_148 = arith.constant 1 : index
    %c0_149 = arith.constant 0 : index
    %c0_150 = arith.constant 0 : index
    %328 = vector.load %arg13[%c1_148, %c0_149, %c0_150] : memref<2x64x32xf32, #tpu.memory_space<vmem>>, vector<1x64x32xf32>
    %329 = vector.shape_cast %328 : vector<1x64x32xf32> to vector<64x32xf32>
    %cst_151 = arith.constant dense<0.000000e+00> : vector<24x32xf32>
    %330 = tpu.matmul %327, %329, %cst_151 {dimension_numbers = #tpu.dot_dimension_numbers<[1], [0], [0], [1], [0, 0, 1, 1], [], []>} : vector<24x64xf32>, vector<64x32xf32>, vector<24x32xf32> -> vector<24x32xf32>
    %c1_152 = arith.constant 1 : index
    %c0_153 = arith.constant 0 : index
    %c0_154 = arith.constant 0 : index
    %331 = vector.load %arg14[%c1_152, %c0_153, %c0_154] : memref<2x1x32xf32, #tpu.memory_space<vmem>>, vector<1x1x32xf32>
    %332 = vector.shape_cast %331 : vector<1x1x32xf32> to vector<1x32xf32>
    %333 = vector.broadcast %332 : vector<1x32xf32> to vector<24x32xf32>
    %334 = arith.addf %330, %333 : vector<24x32xf32>
    %335 = arith.addf %288, %334 : vector<24x32xf32>
    %336 = vector.extract_strided_slice %335 {offsets = [16, 0], sizes = [1, 32], strides = [1, 1]} : vector<24x32xf32> to vector<1x32xf32>
    %c0_155 = arith.constant 0 : index
    %c0_156 = arith.constant 0 : index
    %c0_157 = arith.constant 0 : index
    %337 = vector.load %arg15[%c0_155, %c0_156, %c0_157] : memref<1x1x32xf32, #tpu.memory_space<vmem>>, vector<1x1x32xf32>
    %338 = vector.shape_cast %337 : vector<1x1x32xf32> to vector<1x32xf32>
    %339 = vector.shape_cast %336 : vector<1x32xf32> to vector<1x1x32xf32>
    tpu.vector_store %arg15[%c0_155, %c0_156, %c0_157], %339 {strides = array<i32>} : memref<1x1x32xf32, #tpu.memory_space<vmem>>, vector<1x1x32xf32>,
    return
  }
  func.func @transform_0(%arg0: i32) -> (i32, i32, i32) {
    %c0_i32 = arith.constant 0 : i32
    %c0_i32_0 = arith.constant 0 : i32
    %c0_i32_1 = arith.constant 0 : i32
    return %arg0, %c0_i32, %c0_i32_0 : i32, i32, i32
  }
  func.func @transform_1(%arg0: i32) -> (i32, i32) {
    %c0_i32 = arith.constant 0 : i32
    %c0_i32_0 = arith.constant 0 : i32
    %c0_i32_1 = arith.constant 0 : i32
    return %c0_i32, %c0_i32_0 : i32, i32
  }
  func.func @transform_2(%arg0: i32) -> (i32, i32) {
    %c0_i32 = arith.constant 0 : i32
    %c0_i32_0 = arith.constant 0 : i32
    %c0_i32_1 = arith.constant 0 : i32
    return %c0_i32, %c0_i32_0 : i32, i32
  }
  func.func @transform_3(%arg0: i32) -> (i32, i32, i32) {
    %c0_i32 = arith.constant 0 : i32
    %c0_i32_0 = arith.constant 0 : i32
    %c0_i32_1 = arith.constant 0 : i32
    %c0_i32_2 = arith.constant 0 : i32
    return %c0_i32, %c0_i32_0, %c0_i32_1 : i32, i32, i32
  }
  func.func @transform_4(%arg0: i32) -> (i32, i32, i32) {
    %c0_i32 = arith.constant 0 : i32
    %c0_i32_0 = arith.constant 0 : i32
    %c0_i32_1 = arith.constant 0 : i32
    %c0_i32_2 = arith.constant 0 : i32
    return %c0_i32, %c0_i32_0, %c0_i32_1 : i32, i32, i32
  }
  func.func @transform_5(%arg0: i32) -> (i32, i32, i32) {
    %c0_i32 = arith.constant 0 : i32
    %c0_i32_0 = arith.constant 0 : i32
    %c0_i32_1 = arith.constant 0 : i32
    %c0_i32_2 = arith.constant 0 : i32
    return %c0_i32, %c0_i32_0, %c0_i32_1 : i32, i32, i32
  }
  func.func @transform_6(%arg0: i32) -> (i32, i32, i32) {
    %c0_i32 = arith.constant 0 : i32
    %c0_i32_0 = arith.constant 0 : i32
    %c0_i32_1 = arith.constant 0 : i32
    %c0_i32_2 = arith.constant 0 : i32
    return %c0_i32, %c0_i32_0, %c0_i32_1 : i32, i32, i32
  }
  func.func @transform_7(%arg0: i32) -> (i32, i32, i32) {
    %c0_i32 = arith.constant 0 : i32
    %c0_i32_0 = arith.constant 0 : i32
    %c0_i32_1 = arith.constant 0 : i32
    %c0_i32_2 = arith.constant 0 : i32
    return %c0_i32, %c0_i32_0, %c0_i32_1 : i32, i32, i32
  }
  func.func @transform_8(%arg0: i32) -> (i32, i32, i32) {
    %c0_i32 = arith.constant 0 : i32
    %c0_i32_0 = arith.constant 0 : i32
    %c0_i32_1 = arith.constant 0 : i32
    %c0_i32_2 = arith.constant 0 : i32
    return %c0_i32, %c0_i32_0, %c0_i32_1 : i32, i32, i32
  }
  func.func @transform_9(%arg0: i32) -> (i32, i32, i32) {
    %c0_i32 = arith.constant 0 : i32
    %c0_i32_0 = arith.constant 0 : i32
    %c0_i32_1 = arith.constant 0 : i32
    %c0_i32_2 = arith.constant 0 : i32
    return %c0_i32, %c0_i32_0, %c0_i32_1 : i32, i32, i32
  }
  func.func @transform_10(%arg0: i32) -> (i32, i32, i32) {
    %c0_i32 = arith.constant 0 : i32
    %c0_i32_0 = arith.constant 0 : i32
    %c0_i32_1 = arith.constant 0 : i32
    %c0_i32_2 = arith.constant 0 : i32
    return %c0_i32, %c0_i32_0, %c0_i32_1 : i32, i32, i32
  }
  func.func @transform_11(%arg0: i32) -> (i32, i32, i32) {
    %c0_i32 = arith.constant 0 : i32
    %c0_i32_0 = arith.constant 0 : i32
    %c0_i32_1 = arith.constant 0 : i32
    %c0_i32_2 = arith.constant 0 : i32
    return %c0_i32, %c0_i32_0, %c0_i32_1 : i32, i32, i32
  }
  func.func @transform_12(%arg0: i32) -> (i32, i32, i32) {
    %c0_i32 = arith.constant 0 : i32
    %c0_i32_0 = arith.constant 0 : i32
    %c0_i32_1 = arith.constant 0 : i32
    %c0_i32_2 = arith.constant 0 : i32
    return %c0_i32, %c0_i32_0, %c0_i32_1 : i32, i32, i32
  }
  func.func @transform_13(%arg0: i32) -> (i32, i32, i32) {
    %c0_i32 = arith.constant 0 : i32
    %c0_i32_0 = arith.constant 0 : i32
    %c0_i32_1 = arith.constant 0 : i32
    %c0_i32_2 = arith.constant 0 : i32
    return %c0_i32, %c0_i32_0, %c0_i32_1 : i32, i32, i32
  }
  func.func @transform_14(%arg0: i32) -> (i32, i32, i32) {
    %c0_i32 = arith.constant 0 : i32
    %c0_i32_0 = arith.constant 0 : i32
    %c0_i32_1 = arith.constant 0 : i32
    return %arg0, %c0_i32, %c0_i32_0 : i32, i32, i32
  }
}

</mosaic_0001>

<llo_original>
// kernel: md_cat_forward.1
$region0: #{md_cat_forward.1}
  #allocation0 [shape = 'u32[]', space=smem, size = 0x4, offset = 0x4, fixed_abs, tag = 'smem constant byte address 0x4 - core index']
  #allocation1 [shape = 'u32[72,128]{1,0:T(1,128)}', space=vmem, size = 0x9000, scoped, tag = 'internal scratch']
  %s0 = inlined_call_operand.vmem [shape: f32[2,24,64], index: 0, kind: input, shape index: {}]
  %s1 = inlined_call_operand.vmem [shape: f32[64,32], index: 1, kind: input, shape index: {}]
  %s2 = inlined_call_operand.vmem [shape: f32[24,32], index: 2, kind: input, shape index: {}]
  %s3 = inlined_call_operand.vmem [shape: f32[2,1,32], index: 3, kind: input, shape index: {}]
  %s4 = inlined_call_operand.vmem [shape: f32[2,1,32], index: 4, kind: input, shape index: {}]
  %s5 = inlined_call_operand.vmem [shape: f32[2,32,192], index: 5, kind: input, shape index: {}]
  %s6 = inlined_call_operand.vmem [shape: f32[2,64,32], index: 6, kind: input, shape index: {}]
  %s7 = inlined_call_operand.vmem [shape: f32[2,1,32], index: 7, kind: input, shape index: {}]
  %s8 = inlined_call_operand.vmem [shape: f32[2,1,32], index: 8, kind: input, shape index: {}]
  %s9 = inlined_call_operand.vmem [shape: f32[2,1,32], index: 9, kind: input, shape index: {}]
  %s10 = inlined_call_operand.vmem [shape: f32[2,32,64], index: 10, kind: input, shape index: {}]
  %s11 = inlined_call_operand.vmem [shape: f32[2,1,64], index: 11, kind: input, shape index: {}]
  %s12 = inlined_call_operand.vmem [shape: f32[2,64,32], index: 12, kind: input, shape index: {}]
  %s13 = inlined_call_operand.vmem [shape: f32[2,1,32], index: 13, kind: input, shape index: {}]
  %s14 = inlined_call_operand.hbm [shape: f32[2,1,32], index: 14, kind: output, shape index: {}]
  %s15 = sld [smem:[#allocation0]]
  $region89: #{md_cat_forward.1} parent=0
    _
  %s17 = ssub.s32 1, %s15
  %s18 = scalar_select 0, %s17, %s15
  $region1: #{md_cat_forward.1} parent=0
    #allocation2 [shape = 'u8[1024]{0}', space=vmem, size = 0x400, scoped, tag = 'output window, operand 0']
    #allocation3 [shape = 's32[2]{0}', space=sflag, size = 0x8, scoped, tag = 'scoped memory for md_cat_forward.1']
    %19 = vsyncpa [#allocation3], 0
    %s20 = scalar_lea.sflag [#allocation3], 1
    %21 = vsyncpa %s20, 0
    loop: start=0, step=1, limit=4
    $region2: #{md_cat_forward.1} parent=1 // loop_pre_header
      _
    $region3: #{md_cat_forward.1} parent=1 // loop_header
      %s23 = sphi 0, %s27
      %p24 = scmp.ge.s32.totalorder %s23, 4
      %s33 = sphi 0, %s35
      %s36 = sphi 0, %s33
      %s37 = sphi 0, %s36
      %s53 = sphi 0, %s37
      %s57 = sphi 0, %s57
      %s59 = sphi 0, %s57
      %s60 = sphi 0, %s59
      %s74 = sphi 0, %s60
      %s78 = sphi 0, %s78
      %s80 = sphi 0, %s78
      %s81 = sphi 0, %s80
      %s95 = sphi 0, %s81
      %s99 = sphi 0, %s99
      %s101 = sphi 0, %s99
      %s102 = sphi 0, %s101
      %s116 = sphi 0, %s102
      %s120 = sphi 0, %s120
      %s122 = sphi 0, %s120
      %s123 = sphi 0, %s122
      %s137 = sphi 0, %s123
      %s141 = sphi 0, %s141
      %s143 = sphi 0, %s141
      %s144 = sphi 0, %s143
      %s158 = sphi 0, %s144
      %s162 = sphi 0, %s162
      %s164 = sphi 0, %s162
      %s165 = sphi 0, %s164
      %s179 = sphi 0, %s165
      %s183 = sphi 0, %s183
      %s185 = sphi 0, %s183
      %s186 = sphi 0, %s185
      %s200 = sphi 0, %s186
      %s204 = sphi 0, %s204
      %s206 = sphi 0, %s204
      %s207 = sphi 0, %s206
      %s221 = sphi 0, %s207
      %s225 = sphi 0, %s225
      %s227 = sphi 0, %s225
      %s228 = sphi 0, %s227
      %s242 = sphi 0, %s228
      %s246 = sphi 0, %s246
      %s248 = sphi 0, %s246
      %s249 = sphi 0, %s248
      %s263 = sphi 0, %s249
      %s267 = sphi 0, %s267
      %s269 = sphi 0, %s267
      %s270 = sphi 0, %s269
      %s284 = sphi 0, %s270
      %s288 = sphi 0, %s288
      %s290 = sphi 0, %s288
      %s291 = sphi 0, %s290
      %s305 = sphi 0, %s291
      %s309 = sphi 0, %s309
      %s311 = sphi 0, %s309
      %s312 = sphi 0, %s311
      %s326 = sphi 0, %s312
      %s332 = sphi 0, %s334
      %s335 = sphi 0, %s332
      %s336 = sphi 0, %s335
      %s352 = sphi 0, %s336
    $region4: #{md_cat_forward.1} parent=1 // loop_header_branch
      %26 = sbr.rel (%p24) target = $region8
    $region5: #{md_cat_forward.1} parent=1 // loop_body
      %s28 = ssub.s32 %s23, 1
      %s29 = ssub.s32 %s23, 2
      %s30 = sadd.s32 %s23, 1
      %s31 = ssub.s32 %s23, %s30
      %p32 = scmp.eq.s32.totalorder %s31, 0
      %s34 = sadd.s32 %s33, 1
      %s35 = scalar_select %p32, %s33, %s34
      %p38 = pneg %p32
      %p39 = scmp.eq.s32.totalorder %s23, 1
      %p40 = por %p38, %p39
      %p41 = scmp.ne.s32.totalorder %s33, %s36
      %p42 = scmp.eq.s32.totalorder %s23, 0
      %p43 = por %p41, %p42
      %p44 = scmp.ne.s32.totalorder %s33, %s36
      %p45 = scmp.eq.s32.totalorder %s28, 1
      %p46 = por %p44, %p45
      %p47 = scmp.ne.s32.totalorder %s36, %s37
      %p48 = scmp.eq.s32.totalorder %s28, 0
      %p49 = por %p47, %p48
      %p50 = scmp.ne.s32.totalorder %s36, %s37
      %p51 = scmp.eq.s32.totalorder %s29, 1
      %p52 = por %p50, %p51
      %p54 = scmp.ne.s32.totalorder %s37, %s53
      %p55 = scmp.eq.s32.totalorder %s29, 0
      %p56 = por %p54, %p55
      %s58 = sadd.s32 %s57, 1
      %p61 = scmp.eq.s32.totalorder %s23, 1
      %p62 = scmp.ne.s32.totalorder %s57, %s59
      %p63 = scmp.eq.s32.totalorder %s23, 0
      %p64 = por %p62, %p63
      %p65 = scmp.ne.s32.totalorder %s57, %s59
      %p66 = scmp.eq.s32.totalorder %s28, 1
      %p67 = por %p65, %p66
      %p68 = scmp.ne.s32.totalorder %s59, %s60
      %p69 = scmp.eq.s32.totalorder %s28, 0
      %p70 = por %p68, %p69
      %p71 = scmp.ne.s32.totalorder %s59, %s60
      %p72 = scmp.eq.s32.totalorder %s29, 1
      %p73 = por %p71, %p72
      %p75 = scmp.ne.s32.totalorder %s60, %s74
      %p76 = scmp.eq.s32.totalorder %s29, 0
      %p77 = por %p75, %p76
      %s79 = sadd.s32 %s78, 1
      %p82 = scmp.eq.s32.totalorder %s23, 1
      %p83 = scmp.ne.s32.totalorder %s78, %s80
      %p84 = scmp.eq.s32.totalorder %s23, 0
      %p85 = por %p83, %p84
      %p86 = scmp.ne.s32.totalorder %s78, %s80
      %p87 = scmp.eq.s32.totalorder %s28, 1
      %p88 = por %p86, %p87
      %p89 = scmp.ne.s32.totalorder %s80, %s81
      %p90 = scmp.eq.s32.totalorder %s28, 0
      %p91 = por %p89, %p90
      %p92 = scmp.ne.s32.totalorder %s80, %s81
      %p93 = scmp.eq.s32.totalorder %s29, 1
      %p94 = por %p92, %p93
      %p96 = scmp.ne.s32.totalorder %s81, %s95
      %p97 = scmp.eq.s32.totalorder %s29, 0
      %p98 = por %p96, %p97
      %s100 = sadd.s32 %s99, 1
      %p103 = scmp.eq.s32.totalorder %s23, 1
      %p104 = scmp.ne.s32.totalorder %s99, %s101
      %p105 = scmp.eq.s32.totalorder %s23, 0
      %p106 = por %p104, %p105
      %p107 = scmp.ne.s32.totalorder %s99, %s101
      %p108 = scmp.eq.s32.totalorder %s28, 1
      %p109 = por %p107, %p108
      %p110 = scmp.ne.s32.totalorder %s101, %s102
      %p111 = scmp.eq.s32.totalorder %s28, 0
      %p112 = por %p110, %p111
      %p113 = scmp.ne.s32.totalorder %s101, %s102
      %p114 = scmp.eq.s32.totalorder %s29, 1
      %p115 = por %p113, %p114
      %p117 = scmp.ne.s32.totalorder %s102, %s116
      %p118 = scmp.eq.s32.totalorder %s29, 0
      %p119 = por %p117, %p118
      %s121 = sadd.s32 %s120, 1
      %p124 = scmp.eq.s32.totalorder %s23, 1
      %p125 = scmp.ne.s32.totalorder %s120, %s122
      %p126 = scmp.eq.s32.totalorder %s23, 0
      %p127 = por %p125, %p126
      %p128 = scmp.ne.s32.totalorder %s120, %s122
      %p129 = scmp.eq.s32.totalorder %s28, 1
      %p130 = por %p128, %p129
      %p131 = scmp.ne.s32.totalorder %s122, %s123
      %p132 = scmp.eq.s32.totalorder %s28, 0
      %p133 = por %p131, %p132
      %p134 = scmp.ne.s32.totalorder %s122, %s123
      %p135 = scmp.eq.s32.totalorder %s29, 1
      %p136 = por %p134, %p135
      %p138 = scmp.ne.s32.totalorder %s123, %s137
      %p139 = scmp.eq.s32.totalorder %s29, 0
      %p140 = por %p138, %p139
      %s142 = sadd.s32 %s141, 1
      %p145 = scmp.eq.s32.totalorder %s23, 1
      %p146 = scmp.ne.s32.totalorder %s141, %s143
      %p147 = scmp.eq.s32.totalorder %s23, 0
      %p148 = por %p146, %p147
      %p149 = scmp.ne.s32.totalorder %s141, %s143
      %p150 = scmp.eq.s32.totalorder %s28, 1
      %p151 = por %p149, %p150
      %p152 = scmp.ne.s32.totalorder %s143, %s144
      %p153 = scmp.eq.s32.totalorder %s28, 0
      %p154 = por %p152, %p153
      %p155 = scmp.ne.s32.totalorder %s143, %s144
      %p156 = scmp.eq.s32.totalorder %s29, 1
      %p157 = por %p155, %p156
      %p159 = scmp.ne.s32.totalorder %s144, %s158
      %p160 = scmp.eq.s32.totalorder %s29, 0
      %p161 = por %p159, %p160
      %s163 = sadd.s32 %s162, 1
      %p166 = scmp.eq.s32.totalorder %s23, 1
      %p167 = scmp.ne.s32.totalorder %s162, %s164
      %p168 = scmp.eq.s32.totalorder %s23, 0
      %p169 = por %p167, %p168
      %p170 = scmp.ne.s32.totalorder %s162, %s164
      %p171 = scmp.eq.s32.totalorder %s28, 1
      %p172 = por %p170, %p171
      %p173 = scmp.ne.s32.totalorder %s164, %s165
      %p174 = scmp.eq.s32.totalorder %s28, 0
      %p175 = por %p173, %p174
      %p176 = scmp.ne.s32.totalorder %s164, %s165
      %p177 = scmp.eq.s32.totalorder %s29, 1
      %p178 = por %p176, %p177
      %p180 = scmp.ne.s32.totalorder %s165, %s179
      %p181 = scmp.eq.s32.totalorder %s29, 0
      %p182 = por %p180, %p181
      %s184 = sadd.s32 %s183, 1
      %p187 = scmp.eq.s32.totalorder %s23, 1
      %p188 = scmp.ne.s32.totalorder %s183, %s185
      %p189 = scmp.eq.s32.totalorder %s23, 0
      %p190 = por %p188, %p189
      %p191 = scmp.ne.s32.totalorder %s183, %s185
      %p192 = scmp.eq.s32.totalorder %s28, 1
      %p193 = por %p191, %p192
      %p194 = scmp.ne.s32.totalorder %s185, %s186
      %p195 = scmp.eq.s32.totalorder %s28, 0
      %p196 = por %p194, %p195
      %p197 = scmp.ne.s32.totalorder %s185, %s186
      %p198 = scmp.eq.s32.totalorder %s29, 1
      %p199 = por %p197, %p198
      %p201 = scmp.ne.s32.totalorder %s186, %s200
      %p202 = scmp.eq.s32.totalorder %s29, 0
      %p203 = por %p201, %p202
      %s205 = sadd.s32 %s204, 1
      %p208 = scmp.eq.s32.totalorder %s23, 1
      %p209 = scmp.ne.s32.totalorder %s204, %s206
      %p210 = scmp.eq.s32.totalorder %s23, 0
      %p211 = por %p209, %p210
      %p212 = scmp.ne.s32.totalorder %s204, %s206
      %p213 = scmp.eq.s32.totalorder %s28, 1
      %p214 = por %p212, %p213
      %p215 = scmp.ne.s32.totalorder %s206, %s207
      %p216 = scmp.eq.s32.totalorder %s28, 0
      %p217 = por %p215, %p216
      %p218 = scmp.ne.s32.totalorder %s206, %s207
      %p219 = scmp.eq.s32.totalorder %s29, 1
      %p220 = por %p218, %p219
      %p222 = scmp.ne.s32.totalorder %s207, %s221
      %p223 = scmp.eq.s32.totalorder %s29, 0
      %p224 = por %p222, %p223
      %s226 = sadd.s32 %s225, 1
      %p229 = scmp.eq.s32.totalorder %s23, 1
      %p230 = scmp.ne.s32.totalorder %s225, %s227
      %p231 = scmp.eq.s32.totalorder %s23, 0
      %p232 = por %p230, %p231
      %p233 = scmp.ne.s32.totalorder %s225, %s227
      %p234 = scmp.eq.s32.totalorder %s28, 1
      %p235 = por %p233, %p234
      %p236 = scmp.ne.s32.totalorder %s227, %s228
      %p237 = scmp.eq.s32.totalorder %s28, 0
      %p238 = por %p236, %p237
      %p239 = scmp.ne.s32.totalorder %s227, %s228
      %p240 = scmp.eq.s32.totalorder %s29, 1
      %p241 = por %p239, %p240
      %p243 = scmp.ne.s32.totalorder %s228, %s242
      %p244 = scmp.eq.s32.totalorder %s29, 0
      %p245 = por %p243, %p244
      %s247 = sadd.s32 %s246, 1
      %p250 = scmp.eq.s32.totalorder %s23, 1
      %p251 = scmp.ne.s32.totalorder %s246, %s248
      %p252 = scmp.eq.s32.totalorder %s23, 0
      %p253 = por %p251, %p252
      %p254 = scmp.ne.s32.totalorder %s246, %s248
      %p255 = scmp.eq.s32.totalorder %s28, 1
      %p256 = por %p254, %p255
      %p257 = scmp.ne.s32.totalorder %s248, %s249
      %p258 = scmp.eq.s32.totalorder %s28, 0
      %p259 = por %p257, %p258
      %p260 = scmp.ne.s32.totalorder %s248, %s249
      %p261 = scmp.eq.s32.totalorder %s29, 1
      %p262 = por %p260, %p261
      %p264 = scmp.ne.s32.totalorder %s249, %s263
      %p265 = scmp.eq.s32.totalorder %s29, 0
      %p266 = por %p264, %p265
      %s268 = sadd.s32 %s267, 1
      %p271 = scmp.eq.s32.totalorder %s23, 1
      %p272 = scmp.ne.s32.totalorder %s267, %s269
      %p273 = scmp.eq.s32.totalorder %s23, 0
      %p274 = por %p272, %p273
      %p275 = scmp.ne.s32.totalorder %s267, %s269
      %p276 = scmp.eq.s32.totalorder %s28, 1
      %p277 = por %p275, %p276
      %p278 = scmp.ne.s32.totalorder %s269, %s270
      %p279 = scmp.eq.s32.totalorder %s28, 0
      %p280 = por %p278, %p279
      %p281 = scmp.ne.s32.totalorder %s269, %s270
      %p282 = scmp.eq.s32.totalorder %s29, 1
      %p283 = por %p281, %p282
      %p285 = scmp.ne.s32.totalorder %s270, %s284
      %p286 = scmp.eq.s32.totalorder %s29, 0
      %p287 = por %p285, %p286
      %s289 = sadd.s32 %s288, 1
      %p292 = scmp.eq.s32.totalorder %s23, 1
      %p293 = scmp.ne.s32.totalorder %s288, %s290
      %p294 = scmp.eq.s32.totalorder %s23, 0
      %p295 = por %p293, %p294
      %p296 = scmp.ne.s32.totalorder %s288, %s290
      %p297 = scmp.eq.s32.totalorder %s28, 1
      %p298 = por %p296, %p297
      %p299 = scmp.ne.s32.totalorder %s290, %s291
      %p300 = scmp.eq.s32.totalorder %s28, 0
      %p301 = por %p299, %p300
      %p302 = scmp.ne.s32.totalorder %s290, %s291
      %p303 = scmp.eq.s32.totalorder %s29, 1
      %p304 = por %p302, %p303
      %p306 = scmp.ne.s32.totalorder %s291, %s305
      %p307 = scmp.eq.s32.totalorder %s29, 0
      %p308 = por %p306, %p307
      %s310 = sadd.s32 %s309, 1
      %p313 = scmp.eq.s32.totalorder %s23, 1
      %p314 = scmp.ne.s32.totalorder %s309, %s311
      %p315 = scmp.eq.s32.totalorder %s23, 0
      %p316 = por %p314, %p315
      %p317 = scmp.ne.s32.totalorder %s309, %s311
      %p318 = scmp.eq.s32.totalorder %s28, 1
      %p319 = por %p317, %p318
      %p320 = scmp.ne.s32.totalorder %s311, %s312
      %p321 = scmp.eq.s32.totalorder %s28, 0
      %p322 = por %p320, %p321
      %p323 = scmp.ne.s32.totalorder %s311, %s312
      %p324 = scmp.eq.s32.totalorder %s29, 1
      %p325 = por %p323, %p324
      %p327 = scmp.ne.s32.totalorder %s312, %s326
      %p328 = scmp.eq.s32.totalorder %s29, 0
      %p329 = por %p327, %p328
      %s330 = ssub.s32 %s23, %s30
      %p331 = scmp.eq.s32.totalorder %s330, 0
      %s333 = sadd.s32 %s332, 1
      %s334 = scalar_select %p331, %s332, %s333
      %p337 = pneg %p331
      %p338 = scmp.eq.s32.totalorder %s23, 1
      %p339 = por %p337, %p338
      %p340 = scmp.ne.s32.totalorder %s332, %s335
      %p341 = scmp.eq.s32.totalorder %s23, 0
      %p342 = por %p340, %p341
      %p343 = scmp.ne.s32.totalorder %s332, %s335
      %p344 = scmp.eq.s32.totalorder %s28, 1
      %p345 = por %p343, %p344
      %p346 = scmp.ne.s32.totalorder %s335, %s336
      %p347 = scmp.eq.s32.totalorder %s28, 0
      %p348 = por %p346, %p347
      %p349 = scmp.ne.s32.totalorder %s335, %s336
      %p350 = scmp.eq.s32.totalorder %s29, 1
      %p351 = por %p349, %p350
      %p353 = scmp.ne.s32.totalorder %s336, %s352
      %p354 = scmp.eq.s32.totalorder %s29, 0
      %p355 = por %p353, %p354
      %p356 = scmp.le.s32.totalorder 1, %s23
      %p357 = scmp.lt.s32.totalorder %s23, 3
      %p358 = pnand %p356, %p357
      %p359 = pneg %p358
      // Predicated region
      $region9: #{md_cat_forward.1} parent=5 // pred_check
        _
      $region10: #{md_cat_forward.1} parent=5 // pred_check_branch
        %361 = sbr.rel (%p358) target = $region12
      $region11: #{md_cat_forward.1} parent=5 // pred_region
        %s362 = ssub.s32 %s23, 1
        // Predicated region
        $region13: #{md_cat_forward.1} parent=11 // pred_check
          %p363 = pneg %p70
        $region14: #{md_cat_forward.1} parent=11 // pred_check_branch
          %365 = sbr.rel (%p363) target = $region16
        $region15: #{md_cat_forward.1} parent=11 // pred_region
          _
        $region16: #{md_cat_forward.1} parent=11 // pred_fallthru
          _
        // Predicated region
        $region17: #{md_cat_forward.1} parent=11 // pred_check
          %p366 = pneg %p91
        $region18: #{md_cat_forward.1} parent=11 // pred_check_branch
          %368 = sbr.rel (%p366) target = $region20
        $region19: #{md_cat_forward.1} parent=11 // pred_region
          _
        $region20: #{md_cat_forward.1} parent=11 // pred_fallthru
          _
        // Predicated region
        $region21: #{md_cat_forward.1} parent=11 // pred_check
          %p369 = pneg %p112
        $region22: #{md_cat_forward.1} parent=11 // pred_check_branch
          %371 = sbr.rel (%p369) target = $region24
        $region23: #{md_cat_forward.1} parent=11 // pred_region
          _
        $region24: #{md_cat_forward.1} parent=11 // pred_fallthru
          _
        // Predicated region
        $region25: #{md_cat_forward.1} parent=11 // pred_check
          %p372 = pneg %p133
        $region26: #{md_cat_forward.1} parent=11 // pred_check_branch
          %374 = sbr.rel (%p372) target = $region28
        $region27: #{md_cat_forward.1} parent=11 // pred_region
          _
        $region28: #{md_cat_forward.1} parent=11 // pred_fallthru
          _
        // Predicated region
        $region29: #{md_cat_forward.1} parent=11 // pred_check
          %p375 = pneg %p154
        $region30: #{md_cat_forward.1} parent=11 // pred_check_branch
          %377 = sbr.rel (%p375) target = $region32
        $region31: #{md_cat_forward.1} parent=11 // pred_region
          _
        $region32: #{md_cat_forward.1} parent=11 // pred_fallthru
          _
        // Predicated region
        $region33: #{md_cat_forward.1} parent=11 // pred_check
          %p378 = pneg %p175
        $region34: #{md_cat_forward.1} parent=11 // pred_check_branch
          %380 = sbr.rel (%p378) target = $region36
        $region35: #{md_cat_forward.1} parent=11 // pred_region
          _
        $region36: #{md_cat_forward.1} parent=11 // pred_fallthru
          _
        // Predicated region
        $region37: #{md_cat_forward.1} parent=11 // pred_check
          %p381 = pneg %p196
        $region38: #{md_cat_forward.1} parent=11 // pred_check_branch
          %383 = sbr.rel (%p381) target = $region40
        $region39: #{md_cat_forward.1} parent=11 // pred_region
          _
        $region40: #{md_cat_forward.1} parent=11 // pred_fallthru
          _
        // Predicated region
        $region41: #{md_cat_forward.1} parent=11 // pred_check
          %p384 = pneg %p217
        $region42: #{md_cat_forward.1} parent=11 // pred_check_branch
          %386 = sbr.rel (%p384) target = $region44
        $region43: #{md_cat_forward.1} parent=11 // pred_region
          _
        $region44: #{md_cat_forward.1} parent=11 // pred_fallthru
          _
        // Predicated region
        $region45: #{md_cat_forward.1} parent=11 // pred_check
          %p387 = pneg %p238
        $region46: #{md_cat_forward.1} parent=11 // pred_check_branch
          %389 = sbr.rel (%p387) target = $region48
        $region47: #{md_cat_forward.1} parent=11 // pred_region
          _
        $region48: #{md_cat_forward.1} parent=11 // pred_fallthru
          _
        // Predicated region
        $region49: #{md_cat_forward.1} parent=11 // pred_check
          %p390 = pneg %p259
        $region50: #{md_cat_forward.1} parent=11 // pred_check_branch
          %392 = sbr.rel (%p390) target = $region52
        $region51: #{md_cat_forward.1} parent=11 // pred_region
          _
        $region52: #{md_cat_forward.1} parent=11 // pred_fallthru
          _
        // Predicated region
        $region53: #{md_cat_forward.1} parent=11 // pred_check
          %p393 = pneg %p280
        $region54: #{md_cat_forward.1} parent=11 // pred_check_branch
          %395 = sbr.rel (%p393) target = $region56
        $region55: #{md_cat_forward.1} parent=11 // pred_region
          _
        $region56: #{md_cat_forward.1} parent=11 // pred_fallthru
          _
        // Predicated region
        $region57: #{md_cat_forward.1} parent=11 // pred_check
          %p396 = pneg %p301
        $region58: #{md_cat_forward.1} parent=11 // pred_check_branch
          %398 = sbr.rel (%p396) target = $region60
        $region59: #{md_cat_forward.1} parent=11 // pred_region
          _
        $region60: #{md_cat_forward.1} parent=11 // pred_fallthru
          _
        // Predicated region
        $region61: #{md_cat_forward.1} parent=11 // pred_check
          %p399 = pneg %p322
        $region62: #{md_cat_forward.1} parent=11 // pred_check_branch
          %401 = sbr.rel (%p399) target = $region64
        $region63: #{md_cat_forward.1} parent=11 // pred_region
          _
        $region64: #{md_cat_forward.1} parent=11 // pred_fallthru
          _
      $region12: #{md_cat_forward.1} parent=5 // pred_fallthru
        _
      %p402 = scmp.lt.s32.totalorder %s23, 2
      // Predicated region
      $region65: #{md_cat_forward.1} parent=5 // pred_check
        %p403 = pneg %p402
      $region66: #{md_cat_forward.1} parent=5 // pred_check_branch
        %405 = sbr.rel (%p403) target = $region68
      $region67: #{md_cat_forward.1} parent=5 // pred_region
        // Predicated region
        $region69: #{md_cat_forward.1} parent=67 // pred_check
          %p406 = pneg %p43
        $region70: #{md_cat_forward.1} parent=67 // pred_check_branch
          %408 = sbr.rel (%p406) target = $region72
        $region71: #{md_cat_forward.1} parent=67 // pred_region
          %p409 = scmp.lt.s32.totalorder %s23, 1
          %s410 = scalar_select %p409, %s23, 1
          %s411 = smul.addr %s410, 3
          %s412 = smul.addr %s411, 8
          %s413 = scalar_lea.vmem %s0, %s412
        $region72: #{md_cat_forward.1} parent=67 // pred_fallthru
          _
      $region68: #{md_cat_forward.1} parent=5 // pred_fallthru
        _
      %p414 = scmp.le.s32.totalorder 1, %s23
      %p415 = scmp.lt.s32.totalorder %s23, 3
      %p416 = pnand %p414, %p415
      %p417 = pneg %p416
      // Predicated region
      $region73: #{md_cat_forward.1} parent=5 // pred_check
        _
      $region74: #{md_cat_forward.1} parent=5 // pred_check_branch
        %419 = sbr.rel (%p416) target = $region76
      $region75: #{md_cat_forward.1} parent=5 // pred_region
        %s420 = ssub.s32 %s23, 1
        %p421 = scmp.lt.s32.totalorder %s28, 1
        %s422 = scalar_select %p421, %s28, 1
        %s423 = smul.addr %s422, 3
        %s424 = smul.addr %s423, 8
        %s425 = scalar_lea.vmem %s0, %s424
        %p426 = pneg %p49
        %p427 = pneg %p46
        %p428 = pneg %p70
        %p429 = pneg %p67
        %p430 = pneg %p91
        %p431 = pneg %p88
        %p432 = pneg %p112
        %p433 = pneg %p109
        %p434 = pneg %p133
        %p435 = pneg %p130
        %p436 = pneg %p154
        %p437 = pneg %p151
        %p438 = pneg %p175
        %p439 = pneg %p172
        %p440 = pneg %p196
        %p441 = pneg %p193
        %p442 = pneg %p217
        %p443 = pneg %p214
        %p444 = pneg %p238
        %p445 = pneg %p235
        %p446 = pneg %p259
        %p447 = pneg %p256
        %p448 = pneg %p280
        %p449 = pneg %p277
        %p450 = pneg %p301
        %p451 = pneg %p298
        %p452 = pneg %p322
        %p453 = pneg %p319
        %p454 = pneg %p348
        %p455 = pneg %p345
        %s456 = sand.u32 %s335, 1
        %s457 = scalar_lea.sflag [#allocation3], %s456
        %s458 = sand.u32 %s335, 1
        %s459 = scalar_lea.vmem [#allocation2], %s458
        %p460 = scmp.lt.s32.totalorder %s28, 1
        %s461 = scalar_select %p460, %s28, 1
        %s462 = smul.addr %s461, 3
        %s463 = smul.addr %s462, 8
        %s464 = scalar_lea.vmem %s0, %s463
        %v465 = vld [vmem:[%s464] sm:$0xff]
        %v466 = vld [vmem:[%s464 + $0x8] sm:$0xff]
        %v467 = vld [vmem:[%s464 + $0x10] sm:$0xff]
        %v468 = vld [vmem:[%s1] sm:$0xff]
        %v469 = vld [vmem:[%s1 + $0x8] sm:$0xff]
        %v470 = vld [vmem:[%s1 + $0x10] sm:$0xff]
        %v471 = vld [vmem:[%s1 + $0x18] sm:$0xff]
        %v472 = vld [vmem:[%s1 + $0x20] sm:$0xff]
        %v473 = vld [vmem:[%s1 + $0x28] sm:$0xff]
        %v474 = vld [vmem:[%s1 + $0x30] sm:$0xff]
        %v475 = vld [vmem:[%s1 + $0x38] sm:$0xff]
        %vm476 = vcmask 523264
        %v478 = vsel %vm476, %v465, 0
        %v481 = vsel %vm476, %v466, 0
        %v484 = vsel %vm476, %v467, 0
        %486 = vmatpush.msra.mxu0 0.0
        %487 = vmatpush.msra.mxu0 0.0
        %488 = vmatpush.msra.mxu0 0.0
        %489 = vmatpush.msra.mxu0 0.0
        %490 = vmatpush.msra.mxu0 0.0
        %491 = vmatpush.msra.mxu0 0.0
        %492 = vmatpush.msra.mxu0 0.0
        %493 = vmatpush.msra.mxu0 0.0
        %494 = vmatpush.msra.mxu0 %v475
        %495 = vmatpush.msra.mxu0 %v474
        %496 = vmatpush.msra.mxu0 %v473
        %497 = vmatpush.msra.mxu0 %v472
        %498 = vmatpush.msra.mxu0 %v471
        %499 = vmatpush.msra.mxu0 %v470
        %500 = vmatpush.msra.mxu0 %v469
        %501 = vmatpush.msra.mxu0 %v468
        %502 = vmatmul.f32.gmra.mxu0 %v478
        %v503 = vpop.f32.mrf.mxu0
        %v504 = vadd.f32 0.0, %v503
        %505 = vmatmul.f32.gmra.mxu0 %v481
        %v506 = vpop.f32.mrf.mxu0
        %v507 = vadd.f32 0.0, %v506
        %508 = vmatmul.f32.gmra.mxu0 %v484
        %v509 = vpop.f32.mrf.mxu0
        %v510 = vadd.f32 0.0, %v509
        %511 = vdwg.mxu0
        %v512 = vld [vmem:[%s2] sm:$0xff]
        %v513 = vld [vmem:[%s2 + $0x8] sm:$0xff]
        %v514 = vld [vmem:[%s2 + $0x10] sm:$0xff]
        %v515 = vadd.f32 %v512, %v504
        %v516 = vadd.f32 %v513, %v507
        %v517 = vadd.f32 %v514, %v510
        %v518 = vlaneseq
        %v519 = vand.u32 %v518, 127
        %vm520 = vcmp.lt.s32.totalorder %v519, 17
        %v521 = vsel %vm520, 0.0, -1e+30
        %v522 = vld [vmem:[%s3] sm:$0x1]
        %v523 = vld [vmem:[%s4] sm:$0x1]
        %vm524 = vcmask 261120
        %v525 = vsel %vm524, %v515, 0.0
        %526 = vadd.xlane.f32.xlu0 %v525
        %v527 = vpop.xlane.xlu0 %526
        %v528 = vsel %vm524, %v516, 0.0
        %529 = vadd.xlane.f32.xlu0 %v528
        %v530 = vpop.xlane.xlu0 %529
        %v531 = vsel %vm524, %v517, 0.0
        %532 = vadd.xlane.f32.xlu0 %v531
        %v533 = vpop.xlane.xlu0 %532
        %v534 = vrcp.pop 32.0
        %v535 = vmul.f32 32.0, %v534
        %v536 = vsub.f32 1.0, %v535
        %v537 = vmul.f32 %v534, %v536
        %v538 = vadd.f32 %v534, %v537
        %vm539 = vweird.f32 %v534
        %v540 = vsel %vm539, %v534, %v538
        %v541 = vmul.f32 %v527, %v540
        %v542 = vmul.f32 %v530, %v540
        %v543 = vmul.f32 %v533, %v540
        %v544 = vsub.f32 %v515, %v541
        %v545 = vsub.f32 %v516, %v542
        %v546 = vsub.f32 %v517, %v543
        %v547 = vmul.f32 %v544, %v544
        %v548 = vmul.f32 %v545, %v545
        %v549 = vmul.f32 %v546, %v546
        %v550 = vsel %vm524, %v547, 0.0
        %551 = vadd.xlane.f32.xlu0 %v550
        %v552 = vpop.xlane.xlu0 %551
        %v553 = vsel %vm524, %v548, 0.0
        %554 = vadd.xlane.f32.xlu0 %v553
        %v555 = vpop.xlane.xlu0 %554
        %v556 = vsel %vm524, %v549, 0.0
        %557 = vadd.xlane.f32.xlu0 %v556
        %v558 = vpop.xlane.xlu0 %557
        %v559 = vmul.f32 %v552, %v540
        %v560 = vmul.f32 %v555, %v540
        %v561 = vmul.f32 %v558, %v540
        %v562 = vadd.f32 %v559, 1e-05
        %v563 = vadd.f32 %v560, 1e-05
        %v564 = vadd.f32 %v561, 1e-05
        %v565 = vrsqrt.pop %v562
        %v566 = vmul.f32 %v565, %v562
        %v567 = vmul.f32 %v566, %v565
        %v568 = vmul.f32 0.5, %v567
        %v569 = vsub.f32 1.5, %v568
        %v570 = vmul.f32 %v565, %v569
        %vm571 = vweird.f32 %v562
        %vm572 = vweird.f32 %v565
        %vm573 = vmor %vm571, %vm572
        %v574 = vsel %vm573, %v565, %v570
        %v575 = vrsqrt.pop %v563
        %v576 = vmul.f32 %v575, %v563
        %v577 = vmul.f32 %v576, %v575
        %v578 = vmul.f32 0.5, %v577
        %v579 = vsub.f32 1.5, %v578
        %v580 = vmul.f32 %v575, %v579
        %vm581 = vweird.f32 %v563
        %vm582 = vweird.f32 %v575
        %vm583 = vmor %vm581, %vm582
        %v584 = vsel %vm583, %v575, %v580
        %v585 = vrsqrt.pop %v564
        %v586 = vmul.f32 %v585, %v564
        %v587 = vmul.f32 %v586, %v585
        %v588 = vmul.f32 0.5, %v587
        %v589 = vsub.f32 1.5, %v588
        %v590 = vmul.f32 %v585, %v589
        %vm591 = vweird.f32 %v564
        %vm592 = vweird.f32 %v585
        %vm593 = vmor %vm591, %vm592
        %v594 = vsel %vm593, %v585, %v590
        %v595 = vmul.f32 %v544, %v574
        %v596 = vmul.f32 %v545, %v584
        %v597 = vmul.f32 %v546, %v594
        %v599 = vperm.slane %v522, 0
        %v601 = vmul.f32 %v595, %v599
        %v602 = vmul.f32 %v596, %v599
        %v603 = vmul.f32 %v597, %v599
        %v605 = vperm.slane %v523, 0
        %v607 = vadd.f32 %v601, %v605
        %v608 = vadd.f32 %v602, %v605
        %v609 = vadd.f32 %v603, %v605
        %v610 = vld [vmem:[%s5] sm:$0xff]
        %v611 = vld [vmem:[%s5 + $0x8] sm:$0xff]
        %v612 = vld [vmem:[%s5 + $0x10] sm:$0xff]
        %v613 = vld [vmem:[%s5 + $0x18] sm:$0xff]
        %v614 = vld [vmem:[%s5 + $0x20] sm:$0xff]
        %v615 = vld [vmem:[%s5 + $0x28] sm:$0xff]
        %v616 = vld [vmem:[%s5 + $0x30] sm:$0xff]
        %v617 = vld [vmem:[%s5 + $0x38] sm:$0xff]
        %v619 = vsel %vm524, %v607, 0
        %v622 = vsel %vm524, %v608, 0
        %v625 = vsel %vm524, %v609, 0
        %627 = vmatpush.msra.mxu0 0.0
        %628 = vmatpush.msra.mxu0 0.0
        %629 = vmatpush.msra.mxu0 0.0
        %630 = vmatpush.msra.mxu0 0.0
        %631 = vmatpush.msra.mxu0 0.0
        %632 = vmatpush.msra.mxu0 0.0
        %633 = vmatpush.msra.mxu0 0.0
        %634 = vmatpush.msra.mxu0 0.0
        %635 = vmatpush.msra.mxu0 0.0
        %636 = vmatpush.msra.mxu0 0.0
        %637 = vmatpush.msra.mxu0 0.0
        %638 = vmatpush.msra.mxu0 0.0
        %639 = vmatpush.msra.mxu0 %v616
        %640 = vmatpush.msra.mxu0 %v614
        %641 = vmatpush.msra.mxu0 %v612
        %642 = vmatpush.msra.mxu0 %v610
        %643 = vmatmul.f32.gmra.mxu0 %v619
        %v644 = vpop.f32.mrf.mxu0
        %v645 = vadd.f32 0.0, %v644
        %646 = vmatmul.f32.gmra.mxu0 %v622
        %v647 = vpop.f32.mrf.mxu0
        %v648 = vadd.f32 0.0, %v647
        %649 = vmatmul.f32.gmra.mxu0 %v625
        %v650 = vpop.f32.mrf.mxu0
        %v651 = vadd.f32 0.0, %v650
        %652 = vdwg.mxu0
        %653 = vmatpush.msra.mxu0 0.0
        %654 = vmatpush.msra.mxu0 0.0
        %655 = vmatpush.msra.mxu0 0.0
        %656 = vmatpush.msra.mxu0 0.0
        %657 = vmatpush.msra.mxu0 0.0
        %658 = vmatpush.msra.mxu0 0.0
        %659 = vmatpush.msra.mxu0 0.0
        %660 = vmatpush.msra.mxu0 0.0
        %661 = vmatpush.msra.mxu0 0.0
        %662 = vmatpush.msra.mxu0 0.0
        %663 = vmatpush.msra.mxu0 0.0
        %664 = vmatpush.msra.mxu0 0.0
        %665 = vmatpush.msra.mxu0 %v617
        %666 = vmatpush.msra.mxu0 %v615
        %667 = vmatpush.msra.mxu0 %v613
        %668 = vmatpush.msra.mxu0 %v611
        %669 = vmatmul.f32.gmra.mxu0 %v619
        %v670 = vpop.f32.mrf.mxu0
        %v671 = vadd.f32 0.0, %v670
        %672 = vmatmul.f32.gmra.mxu0 %v622
        %v673 = vpop.f32.mrf.mxu0
        %v674 = vadd.f32 0.0, %v673
        %675 = vmatmul.f32.gmra.mxu0 %v625
        %v676 = vpop.f32.mrf.mxu0
        %v677 = vadd.f32 0.0, %v676
        %678 = vdwg.mxu0
        %v679 = vld [vmem:[%s6] sm:$0xff]
        %v680 = vld [vmem:[%s6 + $0x8] sm:$0xff]
        %v681 = vld [vmem:[%s6 + $0x10] sm:$0xff]
        %v682 = vld [vmem:[%s6 + $0x18] sm:$0xff]
        %v683 = vld [vmem:[%s6 + $0x20] sm:$0xff]
        %v684 = vld [vmem:[%s6 + $0x28] sm:$0xff]
        %v685 = vld [vmem:[%s6 + $0x30] sm:$0xff]
        %v686 = vld [vmem:[%s6 + $0x38] sm:$0xff]
        %690 = vrot.lane.b32.xlu0 %v645, 64
        %v691 = vpop.permute.xlu0 %690
        %692 = vrot.lane.b32.xlu0 %v648, 64
        %v693 = vpop.permute.xlu0 %692
        %694 = vrot.lane.b32.xlu0 %v651, 64
        %v695 = vpop.permute.xlu0 %694
        %vm696 = vcmask 130048
        %v697 = vsel %vm696, %v645, 0
        %v699 = vsel %vm696, %v648, 0
        %v701 = vsel %vm696, %v651, 0
        %v703 = vsel %vm696, %v691, 0
        %v705 = vsel %vm696, %v693, 0
        %v707 = vsel %vm696, %v695, 0
        %709 = vmatpush.xpose.msra.mxu0 0.0
        %710 = vmatpush.xpose.msra.mxu0 0.0
        %711 = vmatpush.xpose.msra.mxu0 0.0
        %712 = vmatpush.xpose.msra.mxu0 0.0
        %713 = vmatpush.xpose.msra.mxu0 0.0
        %714 = vmatpush.xpose.msra.mxu0 0.0
        %715 = vmatpush.xpose.msra.mxu0 0.0
        %716 = vmatpush.xpose.msra.mxu0 0.0
        %717 = vmatpush.xpose.msra.mxu0 0.0
        %718 = vmatpush.xpose.msra.mxu0 0.0
        %719 = vmatpush.xpose.msra.mxu0 0.0
        %720 = vmatpush.xpose.msra.mxu0 0.0
        %721 = vmatpush.xpose.msra.mxu0 0.0
        %722 = vmatpush.xpose.msra.mxu0 %v707
        %723 = vmatpush.xpose.msra.mxu0 %v705
        %724 = vmatpush.xpose.msra.mxu0 %v703
        %725 = vmatmul.f32.gmra.mxu0 %v697
        %v726 = vpop.f32.mrf.mxu0
        %v727 = vadd.f32 0.0, %v726
        %728 = vmatmul.f32.gmra.mxu0 %v699
        %v729 = vpop.f32.mrf.mxu0
        %v730 = vadd.f32 0.0, %v729
        %731 = vmatmul.f32.gmra.mxu0 %v701
        %v732 = vpop.f32.mrf.mxu0
        %v733 = vadd.f32 0.0, %v732
        %734 = vdwg.mxu0
        %v735 = vmul.f32 %v727, 0.25
        %v736 = vmul.f32 %v730, 0.25
        %v737 = vmul.f32 %v733, 0.25
        %v738 = vadd.f32 %v735, %v521
        %v739 = vadd.f32 %v736, %v521
        %v740 = vadd.f32 %v737, %v521
        %vm741 = vcmask 195584
        %v742 = vsel %vm741, %v738, -inf
        %743 = vmax.xlane.f32.xlu0 %v742
        %v744 = vpop.xlane.xlu0 %743
        %v745 = vsel %vm741, %v739, -inf
        %746 = vmax.xlane.f32.xlu0 %v745
        %v747 = vpop.xlane.xlu0 %746
        %v748 = vsel %vm741, %v740, -inf
        %749 = vmax.xlane.f32.xlu0 %v748
        %v750 = vpop.xlane.xlu0 %749
        %v751 = vsub.f32 %v738, %v744
        %v752 = vsub.f32 %v739, %v747
        %v753 = vsub.f32 %v740, %v750
        %v754 = vmul.f32 %v751, 1.442695
        %v755 = vpow.pop %v754
        %v756 = vmul.f32 %v752, 1.442695
        %v757 = vpow.pop %v756
        %v758 = vmul.f32 %v753, 1.442695
        %v759 = vpow.pop %v758
        %v760 = vsel %vm741, %v755, 0.0
        %761 = vadd.xlane.f32.xlu0 %v760
        %v762 = vpop.xlane.xlu0 %761
        %v763 = vsel %vm741, %v757, 0.0
        %764 = vadd.xlane.f32.xlu0 %v763
        %v765 = vpop.xlane.xlu0 %764
        %v766 = vsel %vm741, %v759, 0.0
        %767 = vadd.xlane.f32.xlu0 %v766
        %v768 = vpop.xlane.xlu0 %767
        %v769 = vrcp.pop %v762
        %v770 = vmul.f32 %v762, %v769
        %v771 = vsub.f32 1.0, %v770
        %v772 = vmul.f32 %v769, %v771
        %v773 = vadd.f32 %v769, %v772
        %vm774 = vweird.f32 %v762
        %vm775 = vweird.f32 %v769
        %vm776 = vmor %vm774, %vm775
        %v777 = vsel %vm776, %v769, %v773
        %v778 = vand.u32 2147483647, %v762
        %vm779 = vcmp.eq.f32.partialorder %v778, 8.507059e+37
        %v780 = vand.u32 %v762, 2147483648
        %v781 = vor.u32 1.1754944e-38, %v780
        %v782 = vsel %vm779, %v781, %v777
        %v783 = vmul.f32 %v755, %v782
        %v784 = vrcp.pop %v765
        %v785 = vmul.f32 %v765, %v784
        %v786 = vsub.f32 1.0, %v785
        %v787 = vmul.f32 %v784, %v786
        %v788 = vadd.f32 %v784, %v787
        %vm789 = vweird.f32 %v765
        %vm790 = vweird.f32 %v784
        %vm791 = vmor %vm789, %vm790
        %v792 = vsel %vm791, %v784, %v788
        %v793 = vand.u32 2147483647, %v765
        %vm794 = vcmp.eq.f32.partialorder %v793, 8.507059e+37
        %v795 = vand.u32 %v765, 2147483648
        %v796 = vor.u32 1.1754944e-38, %v795
        %v797 = vsel %vm794, %v796, %v792
        %v798 = vmul.f32 %v757, %v797
        %v799 = vrcp.pop %v768
        %v800 = vmul.f32 %v768, %v799
        %v801 = vsub.f32 1.0, %v800
        %v802 = vmul.f32 %v799, %v801
        %v803 = vadd.f32 %v799, %v802
        %vm804 = vweird.f32 %v768
        %vm805 = vweird.f32 %v799
        %vm806 = vmor %vm804, %vm805
        %v807 = vsel %vm806, %v799, %v803
        %v808 = vand.u32 2147483647, %v768
        %vm809 = vcmp.eq.f32.partialorder %v808, 8.507059e+37
        %v810 = vand.u32 %v768, 2147483648
        %v811 = vor.u32 1.1754944e-38, %v810
        %v812 = vsel %vm809, %v811, %v807
        %v813 = vmul.f32 %v759, %v812
        %v815 = vsel %vm741, %v783, 0
        %v818 = vsel %vm741, %v798, 0
        %v821 = vsel %vm741, %v813, 0
        %823 = vmatpush.msra.mxu0 0.0
        %824 = vmatpush.msra.mxu0 0.0
        %825 = vmatpush.msra.mxu0 0.0
        %826 = vmatpush.msra.mxu0 0.0
        %827 = vmatpush.msra.mxu0 0.0
        %828 = vmatpush.msra.mxu0 0.0
        %829 = vmatpush.msra.mxu0 0.0
        %830 = vmatpush.msra.mxu0 0.0
        %831 = vmatpush.msra.mxu0 0.0
        %832 = vmatpush.msra.mxu0 0.0
        %833 = vmatpush.msra.mxu0 0.0
        %834 = vmatpush.msra.mxu0 0.0
        %835 = vmatpush.msra.mxu0 0.0
        %836 = vmatpush.msra.mxu0 %v677
        %837 = vmatpush.msra.mxu0 %v674
        %838 = vmatpush.msra.mxu0 %v671
        %839 = vmatmul.f32.gmra.mxu0 %v815
        %v840 = vpop.f32.mrf.mxu0
        %v841 = vadd.f32 0.0, %v840
        %842 = vmatmul.f32.gmra.mxu0 %v818
        %v843 = vpop.f32.mrf.mxu0
        %v844 = vadd.f32 0.0, %v843
        %845 = vmatmul.f32.gmra.mxu0 %v821
        %v846 = vpop.f32.mrf.mxu0
        %v847 = vadd.f32 0.0, %v846
        %848 = vdwg.mxu0
        %849 = vrot.lane.b32.xlu0 %v645, 112
        %v850 = vpop.permute.xlu0 %849
        %851 = vrot.lane.b32.xlu0 %v648, 112
        %v852 = vpop.permute.xlu0 %851
        %853 = vrot.lane.b32.xlu0 %v651, 112
        %v854 = vpop.permute.xlu0 %853
        %855 = vrot.lane.b32.xlu0 %v645, 48
        %v856 = vpop.permute.xlu0 %855
        %857 = vrot.lane.b32.xlu0 %v648, 48
        %v858 = vpop.permute.xlu0 %857
        %859 = vrot.lane.b32.xlu0 %v651, 48
        %v860 = vpop.permute.xlu0 %859
        %v861 = vsel %vm696, %v850, 0
        %v863 = vsel %vm696, %v852, 0
        %v865 = vsel %vm696, %v854, 0
        %v867 = vsel %vm696, %v856, 0
        %v869 = vsel %vm696, %v858, 0
        %v871 = vsel %vm696, %v860, 0
        %873 = vmatpush.xpose.msra.mxu0 0.0
        %874 = vmatpush.xpose.msra.mxu0 0.0
        %875 = vmatpush.xpose.msra.mxu0 0.0
        %876 = vmatpush.xpose.msra.mxu0 0.0
        %877 = vmatpush.xpose.msra.mxu0 0.0
        %878 = vmatpush.xpose.msra.mxu0 0.0
        %879 = vmatpush.xpose.msra.mxu0 0.0
        %880 = vmatpush.xpose.msra.mxu0 0.0
        %881 = vmatpush.xpose.msra.mxu0 0.0
        %882 = vmatpush.xpose.msra.mxu0 0.0
        %883 = vmatpush.xpose.msra.mxu0 0.0
        %884 = vmatpush.xpose.msra.mxu0 0.0
        %885 = vmatpush.xpose.msra.mxu0 0.0
        %886 = vmatpush.xpose.msra.mxu0 %v871
        %887 = vmatpush.xpose.msra.mxu0 %v869
        %888 = vmatpush.xpose.msra.mxu0 %v867
        %889 = vmatmul.f32.gmra.mxu0 %v861
        %v890 = vpop.f32.mrf.mxu0
        %v891 = vadd.f32 0.0, %v890
        %892 = vmatmul.f32.gmra.mxu0 %v863
        %v893 = vpop.f32.mrf.mxu0
        %v894 = vadd.f32 0.0, %v893
        %895 = vmatmul.f32.gmra.mxu0 %v865
        %v896 = vpop.f32.mrf.mxu0
        %v897 = vadd.f32 0.0, %v896
        %898 = vdwg.mxu0
        %v899 = vmul.f32 %v891, 0.25
        %v900 = vmul.f32 %v894, 0.25
        %v901 = vmul.f32 %v897, 0.25
        %v902 = vadd.f32 %v899, %v521
        %v903 = vadd.f32 %v900, %v521
        %v904 = vadd.f32 %v901, %v521
        %v905 = vsel %vm741, %v902, -inf
        %906 = vmax.xlane.f32.xlu0 %v905
        %v907 = vpop.xlane.xlu0 %906
        %v908 = vsel %vm741, %v903, -inf
        %909 = vmax.xlane.f32.xlu0 %v908
        %v910 = vpop.xlane.xlu0 %909
        %v911 = vsel %vm741, %v904, -inf
        %912 = vmax.xlane.f32.xlu0 %v911
        %v913 = vpop.xlane.xlu0 %912
        %v914 = vsub.f32 %v902, %v907
        %v915 = vsub.f32 %v903, %v910
        %v916 = vsub.f32 %v904, %v913
        %v917 = vmul.f32 %v914, 1.442695
        %v918 = vpow.pop %v917
        %v919 = vmul.f32 %v915, 1.442695
        %v920 = vpow.pop %v919
        %v921 = vmul.f32 %v916, 1.442695
        %v922 = vpow.pop %v921
        %v923 = vsel %vm741, %v918, 0.0
        %924 = vadd.xlane.f32.xlu0 %v923
        %v925 = vpop.xlane.xlu0 %924
        %v926 = vsel %vm741, %v920, 0.0
        %927 = vadd.xlane.f32.xlu0 %v926
        %v928 = vpop.xlane.xlu0 %927
        %v929 = vsel %vm741, %v922, 0.0
        %930 = vadd.xlane.f32.xlu0 %v929
        %v931 = vpop.xlane.xlu0 %930
        %v932 = vrcp.pop %v925
        %v933 = vmul.f32 %v925, %v932
        %v934 = vsub.f32 1.0, %v933
        %v935 = vmul.f32 %v932, %v934
        %v936 = vadd.f32 %v932, %v935
        %vm937 = vweird.f32 %v925
        %vm938 = vweird.f32 %v932
        %vm939 = vmor %vm937, %vm938
        %v940 = vsel %vm939, %v932, %v936
        %v941 = vand.u32 2147483647, %v925
        %vm942 = vcmp.eq.f32.partialorder %v941, 8.507059e+37
        %v943 = vand.u32 %v925, 2147483648
        %v944 = vor.u32 1.1754944e-38, %v943
        %v945 = vsel %vm942, %v944, %v940
        %v946 = vmul.f32 %v918, %v945
        %v947 = vrcp.pop %v928
        %v948 = vmul.f32 %v928, %v947
        %v949 = vsub.f32 1.0, %v948
        %v950 = vmul.f32 %v947, %v949
        %v951 = vadd.f32 %v947, %v950
        %vm952 = vweird.f32 %v928
        %vm953 = vweird.f32 %v947
        %vm954 = vmor %vm952, %vm953
        %v955 = vsel %vm954, %v947, %v951
        %v956 = vand.u32 2147483647, %v928
        %vm957 = vcmp.eq.f32.partialorder %v956, 8.507059e+37
        %v958 = vand.u32 %v928, 2147483648
        %v959 = vor.u32 1.1754944e-38, %v958
        %v960 = vsel %vm957, %v959, %v955
        %v961 = vmul.f32 %v920, %v960
        %v962 = vrcp.pop %v931
        %v963 = vmul.f32 %v931, %v962
        %v964 = vsub.f32 1.0, %v963
        %v965 = vmul.f32 %v962, %v964
        %v966 = vadd.f32 %v962, %v965
        %vm967 = vweird.f32 %v931
        %vm968 = vweird.f32 %v962
        %vm969 = vmor %vm967, %vm968
        %v970 = vsel %vm969, %v962, %v966
        %v971 = vand.u32 2147483647, %v931
        %vm972 = vcmp.eq.f32.partialorder %v971, 8.507059e+37
        %v973 = vand.u32 %v931, 2147483648
        %v974 = vor.u32 1.1754944e-38, %v973
        %v975 = vsel %vm972, %v974, %v970
        %v976 = vmul.f32 %v922, %v975
        %980 = vrot.lane.b32.xlu0 %v671, 112
        %v981 = vpop.permute.xlu0 %980
        %982 = vrot.lane.b32.xlu0 %v674, 112
        %v983 = vpop.permute.xlu0 %982
        %984 = vrot.lane.b32.xlu0 %v677, 112
        %v985 = vpop.permute.xlu0 %984
        %v990 = vsel %vm741, %v946, 0
        %v993 = vsel %vm741, %v961, 0
        %v996 = vsel %vm741, %v976, 0
        %998 = vmatpush.msra.mxu0 0.0
        %999 = vmatpush.msra.mxu0 0.0
        %1000 = vmatpush.msra.mxu0 0.0
        %1001 = vmatpush.msra.mxu0 0.0
        %1002 = vmatpush.msra.mxu0 0.0
        %1003 = vmatpush.msra.mxu0 0.0
        %1004 = vmatpush.msra.mxu0 0.0
        %1005 = vmatpush.msra.mxu0 0.0
        %1006 = vmatpush.msra.mxu0 0.0
        %1007 = vmatpush.msra.mxu0 0.0
        %1008 = vmatpush.msra.mxu0 0.0
        %1009 = vmatpush.msra.mxu0 0.0
        %1010 = vmatpush.msra.mxu0 0.0
        %1011 = vmatpush.msra.mxu0 %v985
        %1012 = vmatpush.msra.mxu0 %v983
        %1013 = vmatpush.msra.mxu0 %v981
        %1014 = vmatmul.f32.gmra.mxu0 %v990
        %v1015 = vpop.f32.mrf.mxu0
        %v1016 = vadd.f32 0.0, %v1015
        %1017 = vmatmul.f32.gmra.mxu0 %v993
        %v1018 = vpop.f32.mrf.mxu0
        %v1019 = vadd.f32 0.0, %v1018
        %1020 = vmatmul.f32.gmra.mxu0 %v996
        %v1021 = vpop.f32.mrf.mxu0
        %v1022 = vadd.f32 0.0, %v1021
        %1023 = vdwg.mxu0
        %v1025 = vsel %vm696, %v1016, 0
        %v1028 = vsel %vm696, %v1019, 0
        %v1031 = vsel %vm696, %v1022, 0
        %1033 = vmatpush.msra.mxu0 0.0
        %1034 = vmatpush.msra.mxu0 0.0
        %1035 = vmatpush.msra.mxu0 0.0
        %1036 = vmatpush.msra.mxu0 0.0
        %1037 = vmatpush.msra.mxu0 0.0
        %1038 = vmatpush.msra.mxu0 0.0
        %1039 = vmatpush.msra.mxu0 0.0
        %1040 = vmatpush.msra.mxu0 0.0
        %1041 = vmatpush.msra.mxu0 0.0
        %1042 = vmatpush.msra.mxu0 0.0
        %1043 = vmatpush.msra.mxu0 0.0
        %1044 = vmatpush.msra.mxu0 0.0
        %1045 = vmatpush.msra.mxu0 0.0
        %1046 = vmatpush.msra.mxu0 0.0
        %1047 = vmatpush.msra.mxu0 %v682
        %1048 = vmatpush.msra.mxu0 %v681
        %1049 = vmatmul.f32.gmra.mxu0 %v1025
        %v1050 = vpop.f32.mrf.mxu0
        %v1051 = vadd.f32 0.0, %v1050
        %1052 = vmatmul.f32.gmra.mxu0 %v1028
        %v1053 = vpop.f32.mrf.mxu0
        %v1054 = vadd.f32 0.0, %v1053
        %1055 = vmatmul.f32.gmra.mxu0 %v1031
        %v1056 = vpop.f32.mrf.mxu0
        %v1057 = vadd.f32 0.0, %v1056
        %1058 = vdwg.mxu0
        %v1060 = vsel %vm696, %v841, 0
        %v1063 = vsel %vm696, %v844, 0
        %v1066 = vsel %vm696, %v847, 0
        %1068 = vmatpush.msra.mxu0 0.0
        %1069 = vmatpush.msra.mxu0 0.0
        %1070 = vmatpush.msra.mxu0 0.0
        %1071 = vmatpush.msra.mxu0 0.0
        %1072 = vmatpush.msra.mxu0 0.0
        %1073 = vmatpush.msra.mxu0 0.0
        %1074 = vmatpush.msra.mxu0 0.0
        %1075 = vmatpush.msra.mxu0 0.0
        %1076 = vmatpush.msra.mxu0 0.0
        %1077 = vmatpush.msra.mxu0 0.0
        %1078 = vmatpush.msra.mxu0 0.0
        %1079 = vmatpush.msra.mxu0 0.0
        %1080 = vmatpush.msra.mxu0 0.0
        %1081 = vmatpush.msra.mxu0 0.0
        %1082 = vmatpush.msra.mxu0 %v680
        %1083 = vmatpush.msra.mxu0 %v679
        %1084 = vmatmul.f32.gmra.mxu0 %v1060
        %v1085 = vpop.f32.mrf.mxu0
        %v1086 = vadd.f32 %v1051, %v1085
        %1087 = vmatmul.f32.gmra.mxu0 %v1063
        %v1088 = vpop.f32.mrf.mxu0
        %v1089 = vadd.f32 %v1054, %v1088
        %1090 = vmatmul.f32.gmra.mxu0 %v1066
        %v1091 = vpop.f32.mrf.mxu0
        %v1092 = vadd.f32 %v1057, %v1091
        %1093 = vdwg.mxu0
        %1094 = vrot.lane.b32.xlu0 %v645, 96
        %v1095 = vpop.permute.xlu0 %1094
        %1096 = vrot.lane.b32.xlu0 %v648, 96
        %v1097 = vpop.permute.xlu0 %1096
        %1098 = vrot.lane.b32.xlu0 %v651, 96
        %v1099 = vpop.permute.xlu0 %1098
        %1100 = vrot.lane.b32.xlu0 %v645, 32
        %v1101 = vpop.permute.xlu0 %1100
        %1102 = vrot.lane.b32.xlu0 %v648, 32
        %v1103 = vpop.permute.xlu0 %1102
        %1104 = vrot.lane.b32.xlu0 %v651, 32
        %v1105 = vpop.permute.xlu0 %1104
        %v1106 = vsel %vm696, %v1095, 0
        %v1108 = vsel %vm696, %v1097, 0
        %v1110 = vsel %vm696, %v1099, 0
        %v1112 = vsel %vm696, %v1101, 0
        %v1114 = vsel %vm696, %v1103, 0
        %v1116 = vsel %vm696, %v1105, 0
        %1118 = vmatpush.xpose.msra.mxu0 0.0
        %1119 = vmatpush.xpose.msra.mxu0 0.0
        %1120 = vmatpush.xpose.msra.mxu0 0.0
        %1121 = vmatpush.xpose.msra.mxu0 0.0
        %1122 = vmatpush.xpose.msra.mxu0 0.0
        %1123 = vmatpush.xpose.msra.mxu0 0.0
        %1124 = vmatpush.xpose.msra.mxu0 0.0
        %1125 = vmatpush.xpose.msra.mxu0 0.0
        %1126 = vmatpush.xpose.msra.mxu0 0.0
        %1127 = vmatpush.xpose.msra.mxu0 0.0
        %1128 = vmatpush.xpose.msra.mxu0 0.0
        %1129 = vmatpush.xpose.msra.mxu0 0.0
        %1130 = vmatpush.xpose.msra.mxu0 0.0
        %1131 = vmatpush.xpose.msra.mxu0 %v1116
        %1132 = vmatpush.xpose.msra.mxu0 %v1114
        %1133 = vmatpush.xpose.msra.mxu0 %v1112
        %1134 = vmatmul.f32.gmra.mxu0 %v1106
        %v1135 = vpop.f32.mrf.mxu0
        %v1136 = vadd.f32 0.0, %v1135
        %1137 = vmatmul.f32.gmra.mxu0 %v1108
        %v1138 = vpop.f32.mrf.mxu0
        %v1139 = vadd.f32 0.0, %v1138
        %1140 = vmatmul.f32.gmra.mxu0 %v1110
        %v1141 = vpop.f32.mrf.mxu0
        %v1142 = vadd.f32 0.0, %v1141
        %1143 = vdwg.mxu0
        %v1144 = vmul.f32 %v1136, 0.25
        %v1145 = vmul.f32 %v1139, 0.25
        %v1146 = vmul.f32 %v1142, 0.25
        %v1147 = vadd.f32 %v1144, %v521
        %v1148 = vadd.f32 %v1145, %v521
        %v1149 = vadd.f32 %v1146, %v521
        %v1150 = vsel %vm741, %v1147, -inf
        %1151 = vmax.xlane.f32.xlu0 %v1150
        %v1152 = vpop.xlane.xlu0 %1151
        %v1153 = vsel %vm741, %v1148, -inf
        %1154 = vmax.xlane.f32.xlu0 %v1153
        %v1155 = vpop.xlane.xlu0 %1154
        %v1156 = vsel %vm741, %v1149, -inf
        %1157 = vmax.xlane.f32.xlu0 %v1156
        %v1158 = vpop.xlane.xlu0 %1157
        %v1159 = vsub.f32 %v1147, %v1152
        %v1160 = vsub.f32 %v1148, %v1155
        %v1161 = vsub.f32 %v1149, %v1158
        %v1162 = vmul.f32 %v1159, 1.442695
        %v1163 = vpow.pop %v1162
        %v1164 = vmul.f32 %v1160, 1.442695
        %v1165 = vpow.pop %v1164
        %v1166 = vmul.f32 %v1161, 1.442695
        %v1167 = vpow.pop %v1166
        %v1168 = vsel %vm741, %v1163, 0.0
        %1169 = vadd.xlane.f32.xlu0 %v1168
        %v1170 = vpop.xlane.xlu0 %1169
        %v1171 = vsel %vm741, %v1165, 0.0
        %1172 = vadd.xlane.f32.xlu0 %v1171
        %v1173 = vpop.xlane.xlu0 %1172
        %v1174 = vsel %vm741, %v1167, 0.0
        %1175 = vadd.xlane.f32.xlu0 %v1174
        %v1176 = vpop.xlane.xlu0 %1175
        %v1177 = vrcp.pop %v1170
        %v1178 = vmul.f32 %v1170, %v1177
        %v1179 = vsub.f32 1.0, %v1178
        %v1180 = vmul.f32 %v1177, %v1179
        %v1181 = vadd.f32 %v1177, %v1180
        %vm1182 = vweird.f32 %v1170
        %vm1183 = vweird.f32 %v1177
        %vm1184 = vmor %vm1182, %vm1183
        %v1185 = vsel %vm1184, %v1177, %v1181
        %v1186 = vand.u32 2147483647, %v1170
        %vm1187 = vcmp.eq.f32.partialorder %v1186, 8.507059e+37
        %v1188 = vand.u32 %v1170, 2147483648
        %v1189 = vor.u32 1.1754944e-38, %v1188
        %v1190 = vsel %vm1187, %v1189, %v1185
        %v1191 = vmul.f32 %v1163, %v1190
        %v1192 = vrcp.pop %v1173
        %v1193 = vmul.f32 %v1173, %v1192
        %v1194 = vsub.f32 1.0, %v1193
        %v1195 = vmul.f32 %v1192, %v1194
        %v1196 = vadd.f32 %v1192, %v1195
        %vm1197 = vweird.f32 %v1173
        %vm1198 = vweird.f32 %v1192
        %vm1199 = vmor %vm1197, %vm1198
        %v1200 = vsel %vm1199, %v1192, %v1196
        %v1201 = vand.u32 2147483647, %v1173
        %vm1202 = vcmp.eq.f32.partialorder %v1201, 8.507059e+37
        %v1203 = vand.u32 %v1173, 2147483648
        %v1204 = vor.u32 1.1754944e-38, %v1203
        %v1205 = vsel %vm1202, %v1204, %v1200
        %v1206 = vmul.f32 %v1165, %v1205
        %v1207 = vrcp.pop %v1176
        %v1208 = vmul.f32 %v1176, %v1207
        %v1209 = vsub.f32 1.0, %v1208
        %v1210 = vmul.f32 %v1207, %v1209
        %v1211 = vadd.f32 %v1207, %v1210
        %vm1212 = vweird.f32 %v1176
        %vm1213 = vweird.f32 %v1207
        %vm1214 = vmor %vm1212, %vm1213
        %v1215 = vsel %vm1214, %v1207, %v1211
        %v1216 = vand.u32 2147483647, %v1176
        %vm1217 = vcmp.eq.f32.partialorder %v1216, 8.507059e+37
        %v1218 = vand.u32 %v1176, 2147483648
        %v1219 = vor.u32 1.1754944e-38, %v1218
        %v1220 = vsel %vm1217, %v1219, %v1215
        %v1221 = vmul.f32 %v1167, %v1220
        %1222 = vrot.lane.b32.xlu0 %v671, 96
        %v1223 = vpop.permute.xlu0 %1222
        %1224 = vrot.lane.b32.xlu0 %v674, 96
        %v1225 = vpop.permute.xlu0 %1224
        %1226 = vrot.lane.b32.xlu0 %v677, 96
        %v1227 = vpop.permute.xlu0 %1226
        %v1232 = vsel %vm741, %v1191, 0
        %v1235 = vsel %vm741, %v1206, 0
        %v1238 = vsel %vm741, %v1221, 0
        %1240 = vmatpush.msra.mxu0 0.0
        %1241 = vmatpush.msra.mxu0 0.0
        %1242 = vmatpush.msra.mxu0 0.0
        %1243 = vmatpush.msra.mxu0 0.0
        %1244 = vmatpush.msra.mxu0 0.0
        %1245 = vmatpush.msra.mxu0 0.0
        %1246 = vmatpush.msra.mxu0 0.0
        %1247 = vmatpush.msra.mxu0 0.0
        %1248 = vmatpush.msra.mxu0 0.0
        %1249 = vmatpush.msra.mxu0 0.0
        %1250 = vmatpush.msra.mxu0 0.0
        %1251 = vmatpush.msra.mxu0 0.0
        %1252 = vmatpush.msra.mxu0 0.0
        %1253 = vmatpush.msra.mxu0 %v1227
        %1254 = vmatpush.msra.mxu0 %v1225
        %1255 = vmatpush.msra.mxu0 %v1223
        %1256 = vmatmul.f32.gmra.mxu0 %v1232
        %v1257 = vpop.f32.mrf.mxu0
        %v1258 = vadd.f32 0.0, %v1257
        %1259 = vmatmul.f32.gmra.mxu0 %v1235
        %v1260 = vpop.f32.mrf.mxu0
        %v1261 = vadd.f32 0.0, %v1260
        %1262 = vmatmul.f32.gmra.mxu0 %v1238
        %v1263 = vpop.f32.mrf.mxu0
        %v1264 = vadd.f32 0.0, %v1263
        %1265 = vdwg.mxu0
        %v1267 = vsel %vm696, %v1258, 0
        %v1270 = vsel %vm696, %v1261, 0
        %v1273 = vsel %vm696, %v1264, 0
        %1275 = vmatpush.msra.mxu0 0.0
        %1276 = vmatpush.msra.mxu0 0.0
        %1277 = vmatpush.msra.mxu0 0.0
        %1278 = vmatpush.msra.mxu0 0.0
        %1279 = vmatpush.msra.mxu0 0.0
        %1280 = vmatpush.msra.mxu0 0.0
        %1281 = vmatpush.msra.mxu0 0.0
        %1282 = vmatpush.msra.mxu0 0.0
        %1283 = vmatpush.msra.mxu0 0.0
        %1284 = vmatpush.msra.mxu0 0.0
        %1285 = vmatpush.msra.mxu0 0.0
        %1286 = vmatpush.msra.mxu0 0.0
        %1287 = vmatpush.msra.mxu0 0.0
        %1288 = vmatpush.msra.mxu0 0.0
        %1289 = vmatpush.msra.mxu0 %v684
        %1290 = vmatpush.msra.mxu0 %v683
        %1291 = vmatmul.f32.gmra.mxu0 %v1267
        %v1292 = vpop.f32.mrf.mxu0
        %v1293 = vadd.f32 0.0, %v1292
        %1294 = vmatmul.f32.gmra.mxu0 %v1270
        %v1295 = vpop.f32.mrf.mxu0
        %v1296 = vadd.f32 0.0, %v1295
        %1297 = vmatmul.f32.gmra.mxu0 %v1273
        %v1298 = vpop.f32.mrf.mxu0
        %v1299 = vadd.f32 0.0, %v1298
        %1300 = vdwg.mxu0
        %v1301 = vadd.f32 %v1086, %v1293
        %v1302 = vadd.f32 %v1089, %v1296
        %v1303 = vadd.f32 %v1092, %v1299
        %1304 = vrot.lane.b32.xlu0 %v645, 80
        %v1305 = vpop.permute.xlu0 %1304
        %1306 = vrot.lane.b32.xlu0 %v648, 80
        %v1307 = vpop.permute.xlu0 %1306
        %1308 = vrot.lane.b32.xlu0 %v651, 80
        %v1309 = vpop.permute.xlu0 %1308
        %1310 = vrot.lane.b32.xlu0 %v645, 16
        %v1311 = vpop.permute.xlu0 %1310
        %1312 = vrot.lane.b32.xlu0 %v648, 16
        %v1313 = vpop.permute.xlu0 %1312
        %1314 = vrot.lane.b32.xlu0 %v651, 16
        %v1315 = vpop.permute.xlu0 %1314
        %v1316 = vsel %vm696, %v1305, 0
        %v1318 = vsel %vm696, %v1307, 0
        %v1320 = vsel %vm696, %v1309, 0
        %v1322 = vsel %vm696, %v1311, 0
        %v1324 = vsel %vm696, %v1313, 0
        %v1326 = vsel %vm696, %v1315, 0
        %1328 = vmatpush.xpose.msra.mxu0 0.0
        %1329 = vmatpush.xpose.msra.mxu0 0.0
        %1330 = vmatpush.xpose.msra.mxu0 0.0
        %1331 = vmatpush.xpose.msra.mxu0 0.0
        %1332 = vmatpush.xpose.msra.mxu0 0.0
        %1333 = vmatpush.xpose.msra.mxu0 0.0
        %1334 = vmatpush.xpose.msra.mxu0 0.0
        %1335 = vmatpush.xpose.msra.mxu0 0.0
        %1336 = vmatpush.xpose.msra.mxu0 0.0
        %1337 = vmatpush.xpose.msra.mxu0 0.0
        %1338 = vmatpush.xpose.msra.mxu0 0.0
        %1339 = vmatpush.xpose.msra.mxu0 0.0
        %1340 = vmatpush.xpose.msra.mxu0 0.0
        %1341 = vmatpush.xpose.msra.mxu0 %v1326
        %1342 = vmatpush.xpose.msra.mxu0 %v1324
        %1343 = vmatpush.xpose.msra.mxu0 %v1322
        %1344 = vmatmul.f32.gmra.mxu0 %v1316
        %v1345 = vpop.f32.mrf.mxu0
        %v1346 = vadd.f32 0.0, %v1345
        %1347 = vmatmul.f32.gmra.mxu0 %v1318
        %v1348 = vpop.f32.mrf.mxu0
        %v1349 = vadd.f32 0.0, %v1348
        %1350 = vmatmul.f32.gmra.mxu0 %v1320
        %v1351 = vpop.f32.mrf.mxu0
        %v1352 = vadd.f32 0.0, %v1351
        %1353 = vdwg.mxu0
        %v1354 = vmul.f32 %v1346, 0.25
        %v1355 = vmul.f32 %v1349, 0.25
        %v1356 = vmul.f32 %v1352, 0.25
        %v1357 = vadd.f32 %v1354, %v521
        %v1358 = vadd.f32 %v1355, %v521
        %v1359 = vadd.f32 %v1356, %v521
        %v1360 = vsel %vm741, %v1357, -inf
        %1361 = vmax.xlane.f32.xlu0 %v1360
        %v1362 = vpop.xlane.xlu0 %1361
        %v1363 = vsel %vm741, %v1358, -inf
        %1364 = vmax.xlane.f32.xlu0 %v1363
        %v1365 = vpop.xlane.xlu0 %1364
        %v1366 = vsel %vm741, %v1359, -inf
        %1367 = vmax.xlane.f32.xlu0 %v1366
        %v1368 = vpop.xlane.xlu0 %1367
        %v1369 = vsub.f32 %v1357, %v1362
        %v1370 = vsub.f32 %v1358, %v1365
        %v1371 = vsub.f32 %v1359, %v1368
        %v1372 = vmul.f32 %v1369, 1.442695
        %v1373 = vpow.pop %v1372
        %v1374 = vmul.f32 %v1370, 1.442695
        %v1375 = vpow.pop %v1374
        %v1376 = vmul.f32 %v1371, 1.442695
        %v1377 = vpow.pop %v1376
        %v1378 = vsel %vm741, %v1373, 0.0
        %1379 = vadd.xlane.f32.xlu0 %v1378
        %v1380 = vpop.xlane.xlu0 %1379
        %v1381 = vsel %vm741, %v1375, 0.0
        %1382 = vadd.xlane.f32.xlu0 %v1381
        %v1383 = vpop.xlane.xlu0 %1382
        %v1384 = vsel %vm741, %v1377, 0.0
        %1385 = vadd.xlane.f32.xlu0 %v1384
        %v1386 = vpop.xlane.xlu0 %1385
        %v1387 = vrcp.pop %v1380
        %v1388 = vmul.f32 %v1380, %v1387
        %v1389 = vsub.f32 1.0, %v1388
        %v1390 = vmul.f32 %v1387, %v1389
        %v1391 = vadd.f32 %v1387, %v1390
        %vm1392 = vweird.f32 %v1380
        %vm1393 = vweird.f32 %v1387
        %vm1394 = vmor %vm1392, %vm1393
        %v1395 = vsel %vm1394, %v1387, %v1391
        %v1396 = vand.u32 2147483647, %v1380
        %vm1397 = vcmp.eq.f32.partialorder %v1396, 8.507059e+37
        %v1398 = vand.u32 %v1380, 2147483648
        %v1399 = vor.u32 1.1754944e-38, %v1398
        %v1400 = vsel %vm1397, %v1399, %v1395
        %v1401 = vmul.f32 %v1373, %v1400
        %v1402 = vrcp.pop %v1383
        %v1403 = vmul.f32 %v1383, %v1402
        %v1404 = vsub.f32 1.0, %v1403
        %v1405 = vmul.f32 %v1402, %v1404
        %v1406 = vadd.f32 %v1402, %v1405
        %vm1407 = vweird.f32 %v1383
        %vm1408 = vweird.f32 %v1402
        %vm1409 = vmor %vm1407, %vm1408
        %v1410 = vsel %vm1409, %v1402, %v1406
        %v1411 = vand.u32 2147483647, %v1383
        %vm1412 = vcmp.eq.f32.partialorder %v1411, 8.507059e+37
        %v1413 = vand.u32 %v1383, 2147483648
        %v1414 = vor.u32 1.1754944e-38, %v1413
        %v1415 = vsel %vm1412, %v1414, %v1410
        %v1416 = vmul.f32 %v1375, %v1415
        %v1417 = vrcp.pop %v1386
        %v1418 = vmul.f32 %v1386, %v1417
        %v1419 = vsub.f32 1.0, %v1418
        %v1420 = vmul.f32 %v1417, %v1419
        %v1421 = vadd.f32 %v1417, %v1420
        %vm1422 = vweird.f32 %v1386
        %vm1423 = vweird.f32 %v1417
        %vm1424 = vmor %vm1422, %vm1423
        %v1425 = vsel %vm1424, %v1417, %v1421
        %v1426 = vand.u32 2147483647, %v1386
        %vm1427 = vcmp.eq.f32.partialorder %v1426, 8.507059e+37
        %v1428 = vand.u32 %v1386, 2147483648
        %v1429 = vor.u32 1.1754944e-38, %v1428
        %v1430 = vsel %vm1427, %v1429, %v1425
        %v1431 = vmul.f32 %v1377, %v1430
        %1432 = vrot.lane.b32.xlu0 %v671, 80
        %v1433 = vpop.permute.xlu0 %1432
        %1434 = vrot.lane.b32.xlu0 %v674, 80
        %v1435 = vpop.permute.xlu0 %1434
        %1436 = vrot.lane.b32.xlu0 %v677, 80
        %v1437 = vpop.permute.xlu0 %1436
        %v1442 = vsel %vm741, %v1401, 0
        %v1445 = vsel %vm741, %v1416, 0
        %v1448 = vsel %vm741, %v1431, 0
        %1450 = vmatpush.msra.mxu0 0.0
        %1451 = vmatpush.msra.mxu0 0.0
        %1452 = vmatpush.msra.mxu0 0.0
        %1453 = vmatpush.msra.mxu0 0.0
        %1454 = vmatpush.msra.mxu0 0.0
        %1455 = vmatpush.msra.mxu0 0.0
        %1456 = vmatpush.msra.mxu0 0.0
        %1457 = vmatpush.msra.mxu0 0.0
        %1458 = vmatpush.msra.mxu0 0.0
        %1459 = vmatpush.msra.mxu0 0.0
        %1460 = vmatpush.msra.mxu0 0.0
        %1461 = vmatpush.msra.mxu0 0.0
        %1462 = vmatpush.msra.mxu0 0.0
        %1463 = vmatpush.msra.mxu0 %v1437
        %1464 = vmatpush.msra.mxu0 %v1435
        %1465 = vmatpush.msra.mxu0 %v1433
        %1466 = vmatmul.f32.gmra.mxu0 %v1442
        %v1467 = vpop.f32.mrf.mxu0
        %v1468 = vadd.f32 0.0, %v1467
        %1469 = vmatmul.f32.gmra.mxu0 %v1445
        %v1470 = vpop.f32.mrf.mxu0
        %v1471 = vadd.f32 0.0, %v1470
        %1472 = vmatmul.f32.gmra.mxu0 %v1448
        %v1473 = vpop.f32.mrf.mxu0
        %v1474 = vadd.f32 0.0, %v1473
        %1475 = vdwg.mxu0
        %v1477 = vsel %vm696, %v1468, 0
        %v1480 = vsel %vm696, %v1471, 0
        %v1483 = vsel %vm696, %v1474, 0
        %1485 = vmatpush.msra.mxu0 0.0
        %1486 = vmatpush.msra.mxu0 0.0
        %1487 = vmatpush.msra.mxu0 0.0
        %1488 = vmatpush.msra.mxu0 0.0
        %1489 = vmatpush.msra.mxu0 0.0
        %1490 = vmatpush.msra.mxu0 0.0
        %1491 = vmatpush.msra.mxu0 0.0
        %1492 = vmatpush.msra.mxu0 0.0
        %1493 = vmatpush.msra.mxu0 0.0
        %1494 = vmatpush.msra.mxu0 0.0
        %1495 = vmatpush.msra.mxu0 0.0
        %1496 = vmatpush.msra.mxu0 0.0
        %1497 = vmatpush.msra.mxu0 0.0
        %1498 = vmatpush.msra.mxu0 0.0
        %1499 = vmatpush.msra.mxu0 %v686
        %1500 = vmatpush.msra.mxu0 %v685
        %1501 = vmatmul.f32.gmra.mxu0 %v1477
        %v1502 = vpop.f32.mrf.mxu0
        %v1503 = vadd.f32 0.0, %v1502
        %1504 = vmatmul.f32.gmra.mxu0 %v1480
        %v1505 = vpop.f32.mrf.mxu0
        %v1506 = vadd.f32 0.0, %v1505
        %1507 = vmatmul.f32.gmra.mxu0 %v1483
        %v1508 = vpop.f32.mrf.mxu0
        %v1509 = vadd.f32 0.0, %v1508
        %1510 = vdwg.mxu0
        %v1511 = vadd.f32 %v1301, %v1503
        %v1512 = vadd.f32 %v1302, %v1506
        %v1513 = vadd.f32 %v1303, %v1509
        %v1514 = vadd.f32 %v515, %v1511
        %v1515 = vadd.f32 %v516, %v1512
        %v1516 = vadd.f32 %v517, %v1513
        %v1517 = vld [vmem:[%s7] sm:$0x1]
        %v1519 = vperm.slane %v1517, 0
        %v1521 = vadd.f32 %v1514, %v1519
        %v1522 = vadd.f32 %v1515, %v1519
        %v1523 = vadd.f32 %v1516, %v1519
        %v1524 = vld [vmem:[%s8] sm:$0x1]
        %v1525 = vld [vmem:[%s9] sm:$0x1]
        %v1526 = vsel %vm524, %v1521, 0.0
        %1527 = vadd.xlane.f32.xlu0 %v1526
        %v1528 = vpop.xlane.xlu0 %1527
        %v1529 = vsel %vm524, %v1522, 0.0
        %1530 = vadd.xlane.f32.xlu0 %v1529
        %v1531 = vpop.xlane.xlu0 %1530
        %v1532 = vsel %vm524, %v1523, 0.0
        %1533 = vadd.xlane.f32.xlu0 %v1532
        %v1534 = vpop.xlane.xlu0 %1533
        %v1535 = vmul.f32 %v1528, %v540
        %v1536 = vmul.f32 %v1531, %v540
        %v1537 = vmul.f32 %v1534, %v540
        %v1538 = vsub.f32 %v1521, %v1535
        %v1539 = vsub.f32 %v1522, %v1536
        %v1540 = vsub.f32 %v1523, %v1537
        %v1541 = vmul.f32 %v1538, %v1538
        %v1542 = vmul.f32 %v1539, %v1539
        %v1543 = vmul.f32 %v1540, %v1540
        %v1544 = vsel %vm524, %v1541, 0.0
        %1545 = vadd.xlane.f32.xlu0 %v1544
        %v1546 = vpop.xlane.xlu0 %1545
        %v1547 = vsel %vm524, %v1542, 0.0
        %1548 = vadd.xlane.f32.xlu0 %v1547
        %v1549 = vpop.xlane.xlu0 %1548
        %v1550 = vsel %vm524, %v1543, 0.0
        %1551 = vadd.xlane.f32.xlu0 %v1550
        %v1552 = vpop.xlane.xlu0 %1551
        %v1553 = vmul.f32 %v1546, %v540
        %v1554 = vmul.f32 %v1549, %v540
        %v1555 = vmul.f32 %v1552, %v540
        %v1556 = vadd.f32 %v1553, 1e-05
        %v1557 = vadd.f32 %v1554, 1e-05
        %v1558 = vadd.f32 %v1555, 1e-05
        %v1559 = vrsqrt.pop %v1556
        %v1560 = vmul.f32 %v1559, %v1556
        %v1561 = vmul.f32 %v1560, %v1559
        %v1562 = vmul.f32 0.5, %v1561
        %v1563 = vsub.f32 1.5, %v1562
        %v1564 = vmul.f32 %v1559, %v1563
        %vm1565 = vweird.f32 %v1556
        %vm1566 = vweird.f32 %v1559
        %vm1567 = vmor %vm1565, %vm1566
        %v1568 = vsel %vm1567, %v1559, %v1564
        %v1569 = vrsqrt.pop %v1557
        %v1570 = vmul.f32 %v1569, %v1557
        %v1571 = vmul.f32 %v1570, %v1569
        %v1572 = vmul.f32 0.5, %v1571
        %v1573 = vsub.f32 1.5, %v1572
        %v1574 = vmul.f32 %v1569, %v1573
        %vm1575 = vweird.f32 %v1557
        %vm1576 = vweird.f32 %v1569
        %vm1577 = vmor %vm1575, %vm1576
        %v1578 = vsel %vm1577, %v1569, %v1574
        %v1579 = vrsqrt.pop %v1558
        %v1580 = vmul.f32 %v1579, %v1558
        %v1581 = vmul.f32 %v1580, %v1579
        %v1582 = vmul.f32 0.5, %v1581
        %v1583 = vsub.f32 1.5, %v1582
        %v1584 = vmul.f32 %v1579, %v1583
        %vm1585 = vweird.f32 %v1558
        %vm1586 = vweird.f32 %v1579
        %vm1587 = vmor %vm1585, %vm1586
        %v1588 = vsel %vm1587, %v1579, %v1584
        %v1589 = vmul.f32 %v1538, %v1568
        %v1590 = vmul.f32 %v1539, %v1578
        %v1591 = vmul.f32 %v1540, %v1588
        %v1593 = vperm.slane %v1524, 0
        %v1595 = vmul.f32 %v1589, %v1593
        %v1596 = vmul.f32 %v1590, %v1593
        %v1597 = vmul.f32 %v1591, %v1593
        %v1599 = vperm.slane %v1525, 0
        %v1601 = vadd.f32 %v1595, %v1599
        %v1602 = vadd.f32 %v1596, %v1599
        %v1603 = vadd.f32 %v1597, %v1599
        %v1604 = vld [vmem:[%s10] sm:$0xff]
        %v1605 = vld [vmem:[%s10 + $0x8] sm:$0xff]
        %v1606 = vld [vmem:[%s10 + $0x10] sm:$0xff]
        %v1607 = vld [vmem:[%s10 + $0x18] sm:$0xff]
        %v1608 = vld [vmem:[%s11] sm:$0x1]
        %v1610 = vperm.slane %v1608, 0
        %v1613 = vsel %vm524, %v1601, 0
        %v1616 = vsel %vm524, %v1602, 0
        %v1619 = vsel %vm524, %v1603, 0
        %1621 = vmatpush.msra.mxu0 0.0
        %1622 = vmatpush.msra.mxu0 0.0
        %1623 = vmatpush.msra.mxu0 0.0
        %1624 = vmatpush.msra.mxu0 0.0
        %1625 = vmatpush.msra.mxu0 0.0
        %1626 = vmatpush.msra.mxu0 0.0
        %1627 = vmatpush.msra.mxu0 0.0
        %1628 = vmatpush.msra.mxu0 0.0
        %1629 = vmatpush.msra.mxu0 0.0
        %1630 = vmatpush.msra.mxu0 0.0
        %1631 = vmatpush.msra.mxu0 0.0
        %1632 = vmatpush.msra.mxu0 0.0
        %1633 = vmatpush.msra.mxu0 %v1607
        %1634 = vmatpush.msra.mxu0 %v1606
        %1635 = vmatpush.msra.mxu0 %v1605
        %1636 = vmatpush.msra.mxu0 %v1604
        %1637 = vmatmul.f32.gmra.mxu0 %v1613
        %v1638 = vpop.f32.mrf.mxu0
        %v1639 = vadd.f32 %v1610, %v1638
        %1640 = vmatmul.f32.gmra.mxu0 %v1616
        %v1641 = vpop.f32.mrf.mxu0
        %v1642 = vadd.f32 %v1610, %v1641
        %1643 = vmatmul.f32.gmra.mxu0 %v1619
        %v1644 = vpop.f32.mrf.mxu0
        %v1645 = vadd.f32 %v1610, %v1644
        %1646 = vdwg.mxu0
        %v1647 = vmul.f32 %v1639, 0.5
        %v1648 = vmul.f32 %v1642, 0.5
        %v1649 = vmul.f32 %v1645, 0.5
        %v1650 = vmul.f32 %v1639, 0.70710677
        %v1651 = vmul.f32 %v1642, 0.70710677
        %v1652 = vmul.f32 %v1645, 0.70710677
        %v1653 = vmul.f32 %v1650, %v1650
        %v1654 = vmin.f32 16.0, %v1653
        %v1655 = vmul.f32 %v1654, 2.1237322e-06
        %v1656 = vadd.f32 %v1655, 0.00028619796
        %v1657 = vmul.f32 %v1654, %v1656
        %v1658 = vadd.f32 %v1657, 0.0036580483
        %v1659 = vmul.f32 %v1654, %v1658
        %v1660 = vadd.f32 %v1659, 0.05243302
        %v1661 = vmul.f32 %v1654, %v1660
        %v1662 = vadd.f32 %v1661, 0.18741608
        %v1663 = vmul.f32 %v1654, %v1662
        %v1664 = vadd.f32 %v1663, 1.1283791
        %v1665 = vmul.f32 %v1650, %v1664
        %v1666 = vmul.f32 %v1654, 3.8918573e-05
        %v1667 = vadd.f32 %v1666, 0.001143296
        %v1668 = vmul.f32 %v1654, %v1667
        %v1669 = vadd.f32 %v1668, 0.014752088
        %v1670 = vmul.f32 %v1654, %v1669
        %v1671 = vadd.f32 %v1670, 0.112945676
        %v1672 = vmul.f32 %v1654, %v1671
        %v1673 = vadd.f32 %v1672, 0.4994258
        %v1674 = vmul.f32 %v1654, %v1673
        %v1675 = vadd.f32 %v1674, 1.0
        %v1676 = vrcp.pop %v1675
        %v1677 = vmul.f32 %v1675, %v1676
        %v1678 = vsub.f32 1.0, %v1677
        %v1679 = vmul.f32 %v1676, %v1678
        %v1680 = vadd.f32 %v1676, %v1679
        %vm1681 = vweird.f32 %v1675
        %vm1682 = vweird.f32 %v1676
        %vm1683 = vmor %vm1681, %vm1682
        %v1684 = vsel %vm1683, %v1676, %v1680
        %v1685 = vand.u32 2147483647, %v1675
        %vm1686 = vcmp.eq.f32.partialorder %v1685, 8.507059e+37
        %v1687 = vand.u32 %v1675, 2147483648
        %v1688 = vor.u32 1.1754944e-38, %v1687
        %v1689 = vsel %vm1686, %v1688, %v1684
        %v1690 = vmul.f32 %v1665, %v1689
        %v1691 = vmin.f32 %v1690, 1.0
        %v1692 = vmax.f32 %v1691, -1.0
        %v1693 = vmul.f32 %v1651, %v1651
        %v1694 = vmin.f32 16.0, %v1693
        %v1695 = vmul.f32 %v1694, 2.1237322e-06
        %v1696 = vadd.f32 %v1695, 0.00028619796
        %v1697 = vmul.f32 %v1694, %v1696
        %v1698 = vadd.f32 %v1697, 0.0036580483
        %v1699 = vmul.f32 %v1694, %v1698
        %v1700 = vadd.f32 %v1699, 0.05243302
        %v1701 = vmul.f32 %v1694, %v1700
        %v1702 = vadd.f32 %v1701, 0.18741608
        %v1703 = vmul.f32 %v1694, %v1702
        %v1704 = vadd.f32 %v1703, 1.1283791
        %v1705 = vmul.f32 %v1651, %v1704
        %v1706 = vmul.f32 %v1694, 3.8918573e-05
        %v1707 = vadd.f32 %v1706, 0.001143296
        %v1708 = vmul.f32 %v1694, %v1707
        %v1709 = vadd.f32 %v1708, 0.014752088
        %v1710 = vmul.f32 %v1694, %v1709
        %v1711 = vadd.f32 %v1710, 0.112945676
        %v1712 = vmul.f32 %v1694, %v1711
        %v1713 = vadd.f32 %v1712, 0.4994258
        %v1714 = vmul.f32 %v1694, %v1713
        %v1715 = vadd.f32 %v1714, 1.0
        %v1716 = vrcp.pop %v1715
        %v1717 = vmul.f32 %v1715, %v1716
        %v1718 = vsub.f32 1.0, %v1717
        %v1719 = vmul.f32 %v1716, %v1718
        %v1720 = vadd.f32 %v1716, %v1719
        %vm1721 = vweird.f32 %v1715
        %vm1722 = vweird.f32 %v1716
        %vm1723 = vmor %vm1721, %vm1722
        %v1724 = vsel %vm1723, %v1716, %v1720
        %v1725 = vand.u32 2147483647, %v1715
        %vm1726 = vcmp.eq.f32.partialorder %v1725, 8.507059e+37
        %v1727 = vand.u32 %v1715, 2147483648
        %v1728 = vor.u32 1.1754944e-38, %v1727
        %v1729 = vsel %vm1726, %v1728, %v1724
        %v1730 = vmul.f32 %v1705, %v1729
        %v1731 = vmin.f32 %v1730, 1.0
        %v1732 = vmax.f32 %v1731, -1.0
        %v1733 = vmul.f32 %v1652, %v1652
        %v1734 = vmin.f32 16.0, %v1733
        %v1735 = vmul.f32 %v1734, 2.1237322e-06
        %v1736 = vadd.f32 %v1735, 0.00028619796
        %v1737 = vmul.f32 %v1734, %v1736
        %v1738 = vadd.f32 %v1737, 0.0036580483
        %v1739 = vmul.f32 %v1734, %v1738
        %v1740 = vadd.f32 %v1739, 0.05243302
        %v1741 = vmul.f32 %v1734, %v1740
        %v1742 = vadd.f32 %v1741, 0.18741608
        %v1743 = vmul.f32 %v1734, %v1742
        %v1744 = vadd.f32 %v1743, 1.1283791
        %v1745 = vmul.f32 %v1652, %v1744
        %v1746 = vmul.f32 %v1734, 3.8918573e-05
        %v1747 = vadd.f32 %v1746, 0.001143296
        %v1748 = vmul.f32 %v1734, %v1747
        %v1749 = vadd.f32 %v1748, 0.014752088
        %v1750 = vmul.f32 %v1734, %v1749
        %v1751 = vadd.f32 %v1750, 0.112945676
        %v1752 = vmul.f32 %v1734, %v1751
        %v1753 = vadd.f32 %v1752, 0.4994258
        %v1754 = vmul.f32 %v1734, %v1753
        %v1755 = vadd.f32 %v1754, 1.0
        %v1756 = vrcp.pop %v1755
        %v1757 = vmul.f32 %v1755, %v1756
        %v1758 = vsub.f32 1.0, %v1757
        %v1759 = vmul.f32 %v1756, %v1758
        %v1760 = vadd.f32 %v1756, %v1759
        %vm1761 = vweird.f32 %v1755
        %vm1762 = vweird.f32 %v1756
        %vm1763 = vmor %vm1761, %vm1762
        %v1764 = vsel %vm1763, %v1756, %v1760
        %v1765 = vand.u32 2147483647, %v1755
        %vm1766 = vcmp.eq.f32.partialorder %v1765, 8.507059e+37
        %v1767 = vand.u32 %v1755, 2147483648
        %v1768 = vor.u32 1.1754944e-38, %v1767
        %v1769 = vsel %vm1766, %v1768, %v1764
        %v1770 = vmul.f32 %v1745, %v1769
        %v1771 = vmin.f32 %v1770, 1.0
        %v1772 = vmax.f32 %v1771, -1.0
        %v1773 = vadd.f32 %v1692, 1.0
        %v1774 = vadd.f32 %v1732, 1.0
        %v1775 = vadd.f32 %v1772, 1.0
        %v1776 = vmul.f32 %v1647, %v1773
        %v1777 = vmul.f32 %v1648, %v1774
        %v1778 = vmul.f32 %v1649, %v1775
        %v1779 = vld [vmem:[%s12] sm:$0xff]
        %v1780 = vld [vmem:[%s12 + $0x8] sm:$0xff]
        %v1781 = vld [vmem:[%s12 + $0x10] sm:$0xff]
        %v1782 = vld [vmem:[%s12 + $0x18] sm:$0xff]
        %v1783 = vld [vmem:[%s12 + $0x20] sm:$0xff]
        %v1784 = vld [vmem:[%s12 + $0x28] sm:$0xff]
        %v1785 = vld [vmem:[%s12 + $0x30] sm:$0xff]
        %v1786 = vld [vmem:[%s12 + $0x38] sm:$0xff]
        %v1787 = vld [vmem:[%s13] sm:$0x1]
        %v1789 = vperm.slane %v1787, 0
        %v1792 = vsel %vm476, %v1776, 0
        %v1795 = vsel %vm476, %v1777, 0
        %v1798 = vsel %vm476, %v1778, 0
        %1800 = vmatpush.msra.mxu0 0.0
        %1801 = vmatpush.msra.mxu0 0.0
        %1802 = vmatpush.msra.mxu0 0.0
        %1803 = vmatpush.msra.mxu0 0.0
        %1804 = vmatpush.msra.mxu0 0.0
        %1805 = vmatpush.msra.mxu0 0.0
        %1806 = vmatpush.msra.mxu0 0.0
        %1807 = vmatpush.msra.mxu0 0.0
        %1808 = vmatpush.msra.mxu0 %v1786
        %1809 = vmatpush.msra.mxu0 %v1785
        %1810 = vmatpush.msra.mxu0 %v1784
        %1811 = vmatpush.msra.mxu0 %v1783
        %1812 = vmatpush.msra.mxu0 %v1782
        %1813 = vmatpush.msra.mxu0 %v1781
        %1814 = vmatpush.msra.mxu0 %v1780
        %1815 = vmatpush.msra.mxu0 %v1779
        %1816 = vmatmul.f32.gmra.mxu0 %v1792
        %v1817 = vpop.f32.mrf.mxu0
        %v1818 = vadd.f32 %v1789, %v1817
        %1819 = vmatmul.f32.gmra.mxu0 %v1795
        %v1820 = vpop.f32.mrf.mxu0
        %v1821 = vadd.f32 %v1789, %v1820
        %1822 = vmatmul.f32.gmra.mxu0 %v1798
        %v1823 = vpop.f32.mrf.mxu0
        %v1824 = vadd.f32 %v1789, %v1823
        %1825 = vdwg.mxu0
        %v1826 = vadd.f32 %v1521, %v1818
        %v1827 = vadd.f32 %v1522, %v1821
        %v1828 = vadd.f32 %v1523, %v1824
        %s1829 = scalar_lea.vmem %s3, 1
        %v1830 = vld [vmem:[%s1829] sm:$0x1]
        %s1831 = scalar_lea.vmem %s4, 1
        %v1832 = vld [vmem:[%s1831] sm:$0x1]
        %v1833 = vsel %vm524, %v1826, 0.0
        %1834 = vadd.xlane.f32.xlu0 %v1833
        %v1835 = vpop.xlane.xlu0 %1834
        %v1836 = vsel %vm524, %v1827, 0.0
        %1837 = vadd.xlane.f32.xlu0 %v1836
        %v1838 = vpop.xlane.xlu0 %1837
        %v1839 = vsel %vm524, %v1828, 0.0
        %1840 = vadd.xlane.f32.xlu0 %v1839
        %v1841 = vpop.xlane.xlu0 %1840
        %v1842 = vmul.f32 %v1835, %v540
        %v1843 = vmul.f32 %v1838, %v540
        %v1844 = vmul.f32 %v1841, %v540
        %v1845 = vsub.f32 %v1826, %v1842
        %v1846 = vsub.f32 %v1827, %v1843
        %v1847 = vsub.f32 %v1828, %v1844
        %v1848 = vmul.f32 %v1845, %v1845
        %v1849 = vmul.f32 %v1846, %v1846
        %v1850 = vmul.f32 %v1847, %v1847
        %v1851 = vsel %vm524, %v1848, 0.0
        %1852 = vadd.xlane.f32.xlu0 %v1851
        %v1853 = vpop.xlane.xlu0 %1852
        %v1854 = vsel %vm524, %v1849, 0.0
        %1855 = vadd.xlane.f32.xlu0 %v1854
        %v1856 = vpop.xlane.xlu0 %1855
        %v1857 = vsel %vm524, %v1850, 0.0
        %1858 = vadd.xlane.f32.xlu0 %v1857
        %v1859 = vpop.xlane.xlu0 %1858
        %v1860 = vmul.f32 %v1853, %v540
        %v1861 = vmul.f32 %v1856, %v540
        %v1862 = vmul.f32 %v1859, %v540
        %v1863 = vadd.f32 %v1860, 1e-05
        %v1864 = vadd.f32 %v1861, 1e-05
        %v1865 = vadd.f32 %v1862, 1e-05
        %v1866 = vrsqrt.pop %v1863
        %v1867 = vmul.f32 %v1866, %v1863
        %v1868 = vmul.f32 %v1867, %v1866
        %v1869 = vmul.f32 0.5, %v1868
        %v1870 = vsub.f32 1.5, %v1869
        %v1871 = vmul.f32 %v1866, %v1870
        %vm1872 = vweird.f32 %v1863
        %vm1873 = vweird.f32 %v1866
        %vm1874 = vmor %vm1872, %vm1873
        %v1875 = vsel %vm1874, %v1866, %v1871
        %v1876 = vrsqrt.pop %v1864
        %v1877 = vmul.f32 %v1876, %v1864
        %v1878 = vmul.f32 %v1877, %v1876
        %v1879 = vmul.f32 0.5, %v1878
        %v1880 = vsub.f32 1.5, %v1879
        %v1881 = vmul.f32 %v1876, %v1880
        %vm1882 = vweird.f32 %v1864
        %vm1883 = vweird.f32 %v1876
        %vm1884 = vmor %vm1882, %vm1883
        %v1885 = vsel %vm1884, %v1876, %v1881
        %v1886 = vrsqrt.pop %v1865
        %v1887 = vmul.f32 %v1886, %v1865
        %v1888 = vmul.f32 %v1887, %v1886
        %v1889 = vmul.f32 0.5, %v1888
        %v1890 = vsub.f32 1.5, %v1889
        %v1891 = vmul.f32 %v1886, %v1890
        %vm1892 = vweird.f32 %v1865
        %vm1893 = vweird.f32 %v1886
        %vm1894 = vmor %vm1892, %vm1893
        %v1895 = vsel %vm1894, %v1886, %v1891
        %v1896 = vmul.f32 %v1845, %v1875
        %v1897 = vmul.f32 %v1846, %v1885
        %v1898 = vmul.f32 %v1847, %v1895
        %v1900 = vperm.slane %v1830, 0
        %v1902 = vmul.f32 %v1896, %v1900
        %v1903 = vmul.f32 %v1897, %v1900
        %v1904 = vmul.f32 %v1898, %v1900
        %v1906 = vperm.slane %v1832, 0
        %v1908 = vadd.f32 %v1902, %v1906
        %v1909 = vadd.f32 %v1903, %v1906
        %v1910 = vadd.f32 %v1904, %v1906
        %s1911 = scalar_lea.vmem %s5, 64
        %v1912 = vld [vmem:[%s1911] sm:$0xff]
        %v1913 = vld [vmem:[%s1911 + $0x8] sm:$0xff]
        %v1914 = vld [vmem:[%s1911 + $0x10] sm:$0xff]
        %v1915 = vld [vmem:[%s1911 + $0x18] sm:$0xff]
        %v1916 = vld [vmem:[%s1911 + $0x20] sm:$0xff]
        %v1917 = vld [vmem:[%s1911 + $0x28] sm:$0xff]
        %v1918 = vld [vmem:[%s1911 + $0x30] sm:$0xff]
        %v1919 = vld [vmem:[%s1911 + $0x38] sm:$0xff]
        %v1921 = vsel %vm524, %v1908, 0
        %v1924 = vsel %vm524, %v1909, 0
        %v1927 = vsel %vm524, %v1910, 0
        %1929 = vmatpush.msra.mxu0 0.0
        %1930 = vmatpush.msra.mxu0 0.0
        %1931 = vmatpush.msra.mxu0 0.0
        %1932 = vmatpush.msra.mxu0 0.0
        %1933 = vmatpush.msra.mxu0 0.0
        %1934 = vmatpush.msra.mxu0 0.0
        %1935 = vmatpush.msra.mxu0 0.0
        %1936 = vmatpush.msra.mxu0 0.0
        %1937 = vmatpush.msra.mxu0 0.0
        %1938 = vmatpush.msra.mxu0 0.0
        %1939 = vmatpush.msra.mxu0 0.0
        %1940 = vmatpush.msra.mxu0 0.0
        %1941 = vmatpush.msra.mxu0 %v1918
        %1942 = vmatpush.msra.mxu0 %v1916
        %1943 = vmatpush.msra.mxu0 %v1914
        %1944 = vmatpush.msra.mxu0 %v1912
        %1945 = vmatmul.f32.gmra.mxu0 %v1921
        %v1946 = vpop.f32.mrf.mxu0
        %v1947 = vadd.f32 0.0, %v1946
        %1948 = vmatmul.f32.gmra.mxu0 %v1924
        %v1949 = vpop.f32.mrf.mxu0
        %v1950 = vadd.f32 0.0, %v1949
        %1951 = vmatmul.f32.gmra.mxu0 %v1927
        %v1952 = vpop.f32.mrf.mxu0
        %v1953 = vadd.f32 0.0, %v1952
        %1954 = vdwg.mxu0
        %1955 = vmatpush.msra.mxu0 0.0
        %1956 = vmatpush.msra.mxu0 0.0
        %1957 = vmatpush.msra.mxu0 0.0
        %1958 = vmatpush.msra.mxu0 0.0
        %1959 = vmatpush.msra.mxu0 0.0
        %1960 = vmatpush.msra.mxu0 0.0
        %1961 = vmatpush.msra.mxu0 0.0
        %1962 = vmatpush.msra.mxu0 0.0
        %1963 = vmatpush.msra.mxu0 0.0
        %1964 = vmatpush.msra.mxu0 0.0
        %1965 = vmatpush.msra.mxu0 0.0
        %1966 = vmatpush.msra.mxu0 0.0
        %1967 = vmatpush.msra.mxu0 %v1919
        %1968 = vmatpush.msra.mxu0 %v1917
        %1969 = vmatpush.msra.mxu0 %v1915
        %1970 = vmatpush.msra.mxu0 %v1913
        %1971 = vmatmul.f32.gmra.mxu0 %v1921
        %v1972 = vpop.f32.mrf.mxu0
        %v1973 = vadd.f32 0.0, %v1972
        %1974 = vmatmul.f32.gmra.mxu0 %v1924
        %v1975 = vpop.f32.mrf.mxu0
        %v1976 = vadd.f32 0.0, %v1975
        %1977 = vmatmul.f32.gmra.mxu0 %v1927
        %v1978 = vpop.f32.mrf.mxu0
        %v1979 = vadd.f32 0.0, %v1978
        %1980 = vdwg.mxu0
        %s1981 = scalar_lea.vmem %s6, 64
        %v1982 = vld [vmem:[%s1981] sm:$0xff]
        %v1983 = vld [vmem:[%s1981 + $0x8] sm:$0xff]
        %v1984 = vld [vmem:[%s1981 + $0x10] sm:$0xff]
        %v1985 = vld [vmem:[%s1981 + $0x18] sm:$0xff]
        %v1986 = vld [vmem:[%s1981 + $0x20] sm:$0xff]
        %v1987 = vld [vmem:[%s1981 + $0x28] sm:$0xff]
        %v1988 = vld [vmem:[%s1981 + $0x30] sm:$0xff]
        %v1989 = vld [vmem:[%s1981 + $0x38] sm:$0xff]
        %1993 = vrot.lane.b32.xlu0 %v1947, 64
        %v1994 = vpop.permute.xlu0 %1993
        %1995 = vrot.lane.b32.xlu0 %v1950, 64
        %v1996 = vpop.permute.xlu0 %1995
        %1997 = vrot.lane.b32.xlu0 %v1953, 64
        %v1998 = vpop.permute.xlu0 %1997
        %v1999 = vsel %vm696, %v1947, 0
        %v2001 = vsel %vm696, %v1950, 0
        %v2003 = vsel %vm696, %v1953, 0
        %v2005 = vsel %vm696, %v1994, 0
        %v2007 = vsel %vm696, %v1996, 0
        %v2009 = vsel %vm696, %v1998, 0
        %2011 = vmatpush.xpose.msra.mxu0 0.0
        %2012 = vmatpush.xpose.msra.mxu0 0.0
        %2013 = vmatpush.xpose.msra.mxu0 0.0
        %2014 = vmatpush.xpose.msra.mxu0 0.0
        %2015 = vmatpush.xpose.msra.mxu0 0.0
        %2016 = vmatpush.xpose.msra.mxu0 0.0
        %2017 = vmatpush.xpose.msra.mxu0 0.0
        %2018 = vmatpush.xpose.msra.mxu0 0.0
        %2019 = vmatpush.xpose.msra.mxu0 0.0
        %2020 = vmatpush.xpose.msra.mxu0 0.0
        %2021 = vmatpush.xpose.msra.mxu0 0.0
        %2022 = vmatpush.xpose.msra.mxu0 0.0
        %2023 = vmatpush.xpose.msra.mxu0 0.0
        %2024 = vmatpush.xpose.msra.mxu0 %v2009
        %2025 = vmatpush.xpose.msra.mxu0 %v2007
        %2026 = vmatpush.xpose.msra.mxu0 %v2005
        %2027 = vmatmul.f32.gmra.mxu0 %v1999
        %v2028 = vpop.f32.mrf.mxu0
        %v2029 = vadd.f32 0.0, %v2028
        %2030 = vmatmul.f32.gmra.mxu0 %v2001
        %v2031 = vpop.f32.mrf.mxu0
        %v2032 = vadd.f32 0.0, %v2031
        %2033 = vmatmul.f32.gmra.mxu0 %v2003
        %v2034 = vpop.f32.mrf.mxu0
        %v2035 = vadd.f32 0.0, %v2034
        %2036 = vdwg.mxu0
        %v2037 = vmul.f32 %v2029, 0.25
        %v2038 = vmul.f32 %v2032, 0.25
        %v2039 = vmul.f32 %v2035, 0.25
        %v2040 = vadd.f32 %v2037, %v521
        %v2041 = vadd.f32 %v2038, %v521
        %v2042 = vadd.f32 %v2039, %v521
        %v2043 = vsel %vm741, %v2040, -inf
        %2044 = vmax.xlane.f32.xlu0 %v2043
        %v2045 = vpop.xlane.xlu0 %2044
        %v2046 = vsel %vm741, %v2041, -inf
        %2047 = vmax.xlane.f32.xlu0 %v2046
        %v2048 = vpop.xlane.xlu0 %2047
        %v2049 = vsel %vm741, %v2042, -inf
        %2050 = vmax.xlane.f32.xlu0 %v2049
        %v2051 = vpop.xlane.xlu0 %2050
        %v2052 = vsub.f32 %v2040, %v2045
        %v2053 = vsub.f32 %v2041, %v2048
        %v2054 = vsub.f32 %v2042, %v2051
        %v2055 = vmul.f32 %v2052, 1.442695
        %v2056 = vpow.pop %v2055
        %v2057 = vmul.f32 %v2053, 1.442695
        %v2058 = vpow.pop %v2057
        %v2059 = vmul.f32 %v2054, 1.442695
        %v2060 = vpow.pop %v2059
        %v2061 = vsel %vm741, %v2056, 0.0
        %2062 = vadd.xlane.f32.xlu0 %v2061
        %v2063 = vpop.xlane.xlu0 %2062
        %v2064 = vsel %vm741, %v2058, 0.0
        %2065 = vadd.xlane.f32.xlu0 %v2064
        %v2066 = vpop.xlane.xlu0 %2065
        %v2067 = vsel %vm741, %v2060, 0.0
        %2068 = vadd.xlane.f32.xlu0 %v2067
        %v2069 = vpop.xlane.xlu0 %2068
        %v2070 = vrcp.pop %v2063
        %v2071 = vmul.f32 %v2063, %v2070
        %v2072 = vsub.f32 1.0, %v2071
        %v2073 = vmul.f32 %v2070, %v2072
        %v2074 = vadd.f32 %v2070, %v2073
        %vm2075 = vweird.f32 %v2063
        %vm2076 = vweird.f32 %v2070
        %vm2077 = vmor %vm2075, %vm2076
        %v2078 = vsel %vm2077, %v2070, %v2074
        %v2079 = vand.u32 2147483647, %v2063
        %vm2080 = vcmp.eq.f32.partialorder %v2079, 8.507059e+37
        %v2081 = vand.u32 %v2063, 2147483648
        %v2082 = vor.u32 1.1754944e-38, %v2081
        %v2083 = vsel %vm2080, %v2082, %v2078
        %v2084 = vmul.f32 %v2056, %v2083
        %v2085 = vrcp.pop %v2066
        %v2086 = vmul.f32 %v2066, %v2085
        %v2087 = vsub.f32 1.0, %v2086
        %v2088 = vmul.f32 %v2085, %v2087
        %v2089 = vadd.f32 %v2085, %v2088
        %vm2090 = vweird.f32 %v2066
        %vm2091 = vweird.f32 %v2085
        %vm2092 = vmor %vm2090, %vm2091
        %v2093 = vsel %vm2092, %v2085, %v2089
        %v2094 = vand.u32 2147483647, %v2066
        %vm2095 = vcmp.eq.f32.partialorder %v2094, 8.507059e+37
        %v2096 = vand.u32 %v2066, 2147483648
        %v2097 = vor.u32 1.1754944e-38, %v2096
        %v2098 = vsel %vm2095, %v2097, %v2093
        %v2099 = vmul.f32 %v2058, %v2098
        %v2100 = vrcp.pop %v2069
        %v2101 = vmul.f32 %v2069, %v2100
        %v2102 = vsub.f32 1.0, %v2101
        %v2103 = vmul.f32 %v2100, %v2102
        %v2104 = vadd.f32 %v2100, %v2103
        %vm2105 = vweird.f32 %v2069
        %vm2106 = vweird.f32 %v2100
        %vm2107 = vmor %vm2105, %vm2106
        %v2108 = vsel %vm2107, %v2100, %v2104
        %v2109 = vand.u32 2147483647, %v2069
        %vm2110 = vcmp.eq.f32.partialorder %v2109, 8.507059e+37
        %v2111 = vand.u32 %v2069, 2147483648
        %v2112 = vor.u32 1.1754944e-38, %v2111
        %v2113 = vsel %vm2110, %v2112, %v2108
        %v2114 = vmul.f32 %v2060, %v2113
        %v2116 = vsel %vm741, %v2084, 0
        %v2119 = vsel %vm741, %v2099, 0
        %v2122 = vsel %vm741, %v2114, 0
        %2124 = vmatpush.msra.mxu0 0.0
        %2125 = vmatpush.msra.mxu0 0.0
        %2126 = vmatpush.msra.mxu0 0.0
        %2127 = vmatpush.msra.mxu0 0.0
        %2128 = vmatpush.msra.mxu0 0.0
        %2129 = vmatpush.msra.mxu0 0.0
        %2130 = vmatpush.msra.mxu0 0.0
        %2131 = vmatpush.msra.mxu0 0.0
        %2132 = vmatpush.msra.mxu0 0.0
        %2133 = vmatpush.msra.mxu0 0.0
        %2134 = vmatpush.msra.mxu0 0.0
        %2135 = vmatpush.msra.mxu0 0.0
        %2136 = vmatpush.msra.mxu0 0.0
        %2137 = vmatpush.msra.mxu0 %v1979
        %2138 = vmatpush.msra.mxu0 %v1976
        %2139 = vmatpush.msra.mxu0 %v1973
        %2140 = vmatmul.f32.gmra.mxu0 %v2116
        %v2141 = vpop.f32.mrf.mxu0
        %v2142 = vadd.f32 0.0, %v2141
        %2143 = vmatmul.f32.gmra.mxu0 %v2119
        %v2144 = vpop.f32.mrf.mxu0
        %v2145 = vadd.f32 0.0, %v2144
        %2146 = vmatmul.f32.gmra.mxu0 %v2122
        %v2147 = vpop.f32.mrf.mxu0
        %v2148 = vadd.f32 0.0, %v2147
        %2149 = vdwg.mxu0
        %2150 = vrot.lane.b32.xlu0 %v1947, 112
        %v2151 = vpop.permute.xlu0 %2150
        %2152 = vrot.lane.b32.xlu0 %v1950, 112
        %v2153 = vpop.permute.xlu0 %2152
        %2154 = vrot.lane.b32.xlu0 %v1953, 112
        %v2155 = vpop.permute.xlu0 %2154
        %2156 = vrot.lane.b32.xlu0 %v1947, 48
        %v2157 = vpop.permute.xlu0 %2156
        %2158 = vrot.lane.b32.xlu0 %v1950, 48
        %v2159 = vpop.permute.xlu0 %2158
        %2160 = vrot.lane.b32.xlu0 %v1953, 48
        %v2161 = vpop.permute.xlu0 %2160
        %v2162 = vsel %vm696, %v2151, 0
        %v2164 = vsel %vm696, %v2153, 0
        %v2166 = vsel %vm696, %v2155, 0
        %v2168 = vsel %vm696, %v2157, 0
        %v2170 = vsel %vm696, %v2159, 0
        %v2172 = vsel %vm696, %v2161, 0
        %2174 = vmatpush.xpose.msra.mxu0 0.0
        %2175 = vmatpush.xpose.msra.mxu0 0.0
        %2176 = vmatpush.xpose.msra.mxu0 0.0
        %2177 = vmatpush.xpose.msra.mxu0 0.0
        %2178 = vmatpush.xpose.msra.mxu0 0.0
        %2179 = vmatpush.xpose.msra.mxu0 0.0
        %2180 = vmatpush.xpose.msra.mxu0 0.0
        %2181 = vmatpush.xpose.msra.mxu0 0.0
        %2182 = vmatpush.xpose.msra.mxu0 0.0
        %2183 = vmatpush.xpose.msra.mxu0 0.0
        %2184 = vmatpush.xpose.msra.mxu0 0.0
        %2185 = vmatpush.xpose.msra.mxu0 0.0
        %2186 = vmatpush.xpose.msra.mxu0 0.0
        %2187 = vmatpush.xpose.msra.mxu0 %v2172
        %2188 = vmatpush.xpose.msra.mxu0 %v2170
        %2189 = vmatpush.xpose.msra.mxu0 %v2168
        %2190 = vmatmul.f32.gmra.mxu0 %v2162
        %v2191 = vpop.f32.mrf.mxu0
        %v2192 = vadd.f32 0.0, %v2191
        %2193 = vmatmul.f32.gmra.mxu0 %v2164
        %v2194 = vpop.f32.mrf.mxu0
        %v2195 = vadd.f32 0.0, %v2194
        %2196 = vmatmul.f32.gmra.mxu0 %v2166
        %v2197 = vpop.f32.mrf.mxu0
        %v2198 = vadd.f32 0.0, %v2197
        %2199 = vdwg.mxu0
        %v2200 = vmul.f32 %v2192, 0.25
        %v2201 = vmul.f32 %v2195, 0.25
        %v2202 = vmul.f32 %v2198, 0.25
        %v2203 = vadd.f32 %v2200, %v521
        %v2204 = vadd.f32 %v2201, %v521
        %v2205 = vadd.f32 %v2202, %v521
        %v2206 = vsel %vm741, %v2203, -inf
        %2207 = vmax.xlane.f32.xlu0 %v2206
        %v2208 = vpop.xlane.xlu0 %2207
        %v2209 = vsel %vm741, %v2204, -inf
        %2210 = vmax.xlane.f32.xlu0 %v2209
        %v2211 = vpop.xlane.xlu0 %2210
        %v2212 = vsel %vm741, %v2205, -inf
        %2213 = vmax.xlane.f32.xlu0 %v2212
        %v2214 = vpop.xlane.xlu0 %2213
        %v2215 = vsub.f32 %v2203, %v2208
        %v2216 = vsub.f32 %v2204, %v2211
        %v2217 = vsub.f32 %v2205, %v2214
        %v2218 = vmul.f32 %v2215, 1.442695
        %v2219 = vpow.pop %v2218
        %v2220 = vmul.f32 %v2216, 1.442695
        %v2221 = vpow.pop %v2220
        %v2222 = vmul.f32 %v2217, 1.442695
        %v2223 = vpow.pop %v2222
        %v2224 = vsel %vm741, %v2219, 0.0
        %2225 = vadd.xlane.f32.xlu0 %v2224
        %v2226 = vpop.xlane.xlu0 %2225
        %v2227 = vsel %vm741, %v2221, 0.0
        %2228 = vadd.xlane.f32.xlu0 %v2227
        %v2229 = vpop.xlane.xlu0 %2228
        %v2230 = vsel %vm741, %v2223, 0.0
        %2231 = vadd.xlane.f32.xlu0 %v2230
        %v2232 = vpop.xlane.xlu0 %2231
        %v2233 = vrcp.pop %v2226
        %v2234 = vmul.f32 %v2226, %v2233
        %v2235 = vsub.f32 1.0, %v2234
        %v2236 = vmul.f32 %v2233, %v2235
        %v2237 = vadd.f32 %v2233, %v2236
        %vm2238 = vweird.f32 %v2226
        %vm2239 = vweird.f32 %v2233
        %vm2240 = vmor %vm2238, %vm2239
        %v2241 = vsel %vm2240, %v2233, %v2237
        %v2242 = vand.u32 2147483647, %v2226
        %vm2243 = vcmp.eq.f32.partialorder %v2242, 8.507059e+37
        %v2244 = vand.u32 %v2226, 2147483648
        %v2245 = vor.u32 1.1754944e-38, %v2244
        %v2246 = vsel %vm2243, %v2245, %v2241
        %v2247 = vmul.f32 %v2219, %v2246
        %v2248 = vrcp.pop %v2229
        %v2249 = vmul.f32 %v2229, %v2248
        %v2250 = vsub.f32 1.0, %v2249
        %v2251 = vmul.f32 %v2248, %v2250
        %v2252 = vadd.f32 %v2248, %v2251
        %vm2253 = vweird.f32 %v2229
        %vm2254 = vweird.f32 %v2248
        %vm2255 = vmor %vm2253, %vm2254
        %v2256 = vsel %vm2255, %v2248, %v2252
        %v2257 = vand.u32 2147483647, %v2229
        %vm2258 = vcmp.eq.f32.partialorder %v2257, 8.507059e+37
        %v2259 = vand.u32 %v2229, 2147483648
        %v2260 = vor.u32 1.1754944e-38, %v2259
        %v2261 = vsel %vm2258, %v2260, %v2256
        %v2262 = vmul.f32 %v2221, %v2261
        %v2263 = vrcp.pop %v2232
        %v2264 = vmul.f32 %v2232, %v2263
        %v2265 = vsub.f32 1.0, %v2264
        %v2266 = vmul.f32 %v2263, %v2265
        %v2267 = vadd.f32 %v2263, %v2266
        %vm2268 = vweird.f32 %v2232
        %vm2269 = vweird.f32 %v2263
        %vm2270 = vmor %vm2268, %vm2269
        %v2271 = vsel %vm2270, %v2263, %v2267
        %v2272 = vand.u32 2147483647, %v2232
        %vm2273 = vcmp.eq.f32.partialorder %v2272, 8.507059e+37
        %v2274 = vand.u32 %v2232, 2147483648
        %v2275 = vor.u32 1.1754944e-38, %v2274
        %v2276 = vsel %vm2273, %v2275, %v2271
        %v2277 = vmul.f32 %v2223, %v2276
        %2281 = vrot.lane.b32.xlu0 %v1973, 112
        %v2282 = vpop.permute.xlu0 %2281
        %2283 = vrot.lane.b32.xlu0 %v1976, 112
        %v2284 = vpop.permute.xlu0 %2283
        %2285 = vrot.lane.b32.xlu0 %v1979, 112
        %v2286 = vpop.permute.xlu0 %2285
        %v2291 = vsel %vm741, %v2247, 0
        %v2294 = vsel %vm741, %v2262, 0
        %v2297 = vsel %vm741, %v2277, 0
        %2299 = vmatpush.msra.mxu0 0.0
        %2300 = vmatpush.msra.mxu0 0.0
        %2301 = vmatpush.msra.mxu0 0.0
        %2302 = vmatpush.msra.mxu0 0.0
        %2303 = vmatpush.msra.mxu0 0.0
        %2304 = vmatpush.msra.mxu0 0.0
        %2305 = vmatpush.msra.mxu0 0.0
        %2306 = vmatpush.msra.mxu0 0.0
        %2307 = vmatpush.msra.mxu0 0.0
        %2308 = vmatpush.msra.mxu0 0.0
        %2309 = vmatpush.msra.mxu0 0.0
        %2310 = vmatpush.msra.mxu0 0.0
        %2311 = vmatpush.msra.mxu0 0.0
        %2312 = vmatpush.msra.mxu0 %v2286
        %2313 = vmatpush.msra.mxu0 %v2284
        %2314 = vmatpush.msra.mxu0 %v2282
        %2315 = vmatmul.f32.gmra.mxu0 %v2291
        %v2316 = vpop.f32.mrf.mxu0
        %v2317 = vadd.f32 0.0, %v2316
        %2318 = vmatmul.f32.gmra.mxu0 %v2294
        %v2319 = vpop.f32.mrf.mxu0
        %v2320 = vadd.f32 0.0, %v2319
        %2321 = vmatmul.f32.gmra.mxu0 %v2297
        %v2322 = vpop.f32.mrf.mxu0
        %v2323 = vadd.f32 0.0, %v2322
        %2324 = vdwg.mxu0
        %v2326 = vsel %vm696, %v2317, 0
        %v2329 = vsel %vm696, %v2320, 0
        %v2332 = vsel %vm696, %v2323, 0
        %2334 = vmatpush.msra.mxu0 0.0
        %2335 = vmatpush.msra.mxu0 0.0
        %2336 = vmatpush.msra.mxu0 0.0
        %2337 = vmatpush.msra.mxu0 0.0
        %2338 = vmatpush.msra.mxu0 0.0
        %2339 = vmatpush.msra.mxu0 0.0
        %2340 = vmatpush.msra.mxu0 0.0
        %2341 = vmatpush.msra.mxu0 0.0
        %2342 = vmatpush.msra.mxu0 0.0
        %2343 = vmatpush.msra.mxu0 0.0
        %2344 = vmatpush.msra.mxu0 0.0
        %2345 = vmatpush.msra.mxu0 0.0
        %2346 = vmatpush.msra.mxu0 0.0
        %2347 = vmatpush.msra.mxu0 0.0
        %2348 = vmatpush.msra.mxu0 %v1985
        %2349 = vmatpush.msra.mxu0 %v1984
        %2350 = vmatmul.f32.gmra.mxu0 %v2326
        %v2351 = vpop.f32.mrf.mxu0
        %v2352 = vadd.f32 0.0, %v2351
        %2353 = vmatmul.f32.gmra.mxu0 %v2329
        %v2354 = vpop.f32.mrf.mxu0
        %v2355 = vadd.f32 0.0, %v2354
        %2356 = vmatmul.f32.gmra.mxu0 %v2332
        %v2357 = vpop.f32.mrf.mxu0
        %v2358 = vadd.f32 0.0, %v2357
        %2359 = vdwg.mxu0
        %v2361 = vsel %vm696, %v2142, 0
        %v2364 = vsel %vm696, %v2145, 0
        %v2367 = vsel %vm696, %v2148, 0
        %2369 = vmatpush.msra.mxu0 0.0
        %2370 = vmatpush.msra.mxu0 0.0
        %2371 = vmatpush.msra.mxu0 0.0
        %2372 = vmatpush.msra.mxu0 0.0
        %2373 = vmatpush.msra.mxu0 0.0
        %2374 = vmatpush.msra.mxu0 0.0
        %2375 = vmatpush.msra.mxu0 0.0
        %2376 = vmatpush.msra.mxu0 0.0
        %2377 = vmatpush.msra.mxu0 0.0
        %2378 = vmatpush.msra.mxu0 0.0
        %2379 = vmatpush.msra.mxu0 0.0
        %2380 = vmatpush.msra.mxu0 0.0
        %2381 = vmatpush.msra.mxu0 0.0
        %2382 = vmatpush.msra.mxu0 0.0
        %2383 = vmatpush.msra.mxu0 %v1983
        %2384 = vmatpush.msra.mxu0 %v1982
        %2385 = vmatmul.f32.gmra.mxu0 %v2361
        %v2386 = vpop.f32.mrf.mxu0
        %v2387 = vadd.f32 %v2352, %v2386
        %2388 = vmatmul.f32.gmra.mxu0 %v2364
        %v2389 = vpop.f32.mrf.mxu0
        %v2390 = vadd.f32 %v2355, %v2389
        %2391 = vmatmul.f32.gmra.mxu0 %v2367
        %v2392 = vpop.f32.mrf.mxu0
        %v2393 = vadd.f32 %v2358, %v2392
        %2394 = vdwg.mxu0
        %2395 = vrot.lane.b32.xlu0 %v1947, 96
        %v2396 = vpop.permute.xlu0 %2395
        %2397 = vrot.lane.b32.xlu0 %v1950, 96
        %v2398 = vpop.permute.xlu0 %2397
        %2399 = vrot.lane.b32.xlu0 %v1953, 96
        %v2400 = vpop.permute.xlu0 %2399
        %2401 = vrot.lane.b32.xlu0 %v1947, 32
        %v2402 = vpop.permute.xlu0 %2401
        %2403 = vrot.lane.b32.xlu0 %v1950, 32
        %v2404 = vpop.permute.xlu0 %2403
        %2405 = vrot.lane.b32.xlu0 %v1953, 32
        %v2406 = vpop.permute.xlu0 %2405
        %v2407 = vsel %vm696, %v2396, 0
        %v2409 = vsel %vm696, %v2398, 0
        %v2411 = vsel %vm696, %v2400, 0
        %v2413 = vsel %vm696, %v2402, 0
        %v2415 = vsel %vm696, %v2404, 0
        %v2417 = vsel %vm696, %v2406, 0
        %2419 = vmatpush.xpose.msra.mxu0 0.0
        %2420 = vmatpush.xpose.msra.mxu0 0.0
        %2421 = vmatpush.xpose.msra.mxu0 0.0
        %2422 = vmatpush.xpose.msra.mxu0 0.0
        %2423 = vmatpush.xpose.msra.mxu0 0.0
        %2424 = vmatpush.xpose.msra.mxu0 0.0
        %2425 = vmatpush.xpose.msra.mxu0 0.0
        %2426 = vmatpush.xpose.msra.mxu0 0.0
        %2427 = vmatpush.xpose.msra.mxu0 0.0
        %2428 = vmatpush.xpose.msra.mxu0 0.0
        %2429 = vmatpush.xpose.msra.mxu0 0.0
        %2430 = vmatpush.xpose.msra.mxu0 0.0
        %2431 = vmatpush.xpose.msra.mxu0 0.0
        %2432 = vmatpush.xpose.msra.mxu0 %v2417
        %2433 = vmatpush.xpose.msra.mxu0 %v2415
        %2434 = vmatpush.xpose.msra.mxu0 %v2413
        %2435 = vmatmul.f32.gmra.mxu0 %v2407
        %v2436 = vpop.f32.mrf.mxu0
        %v2437 = vadd.f32 0.0, %v2436
        %2438 = vmatmul.f32.gmra.mxu0 %v2409
        %v2439 = vpop.f32.mrf.mxu0
        %v2440 = vadd.f32 0.0, %v2439
        %2441 = vmatmul.f32.gmra.mxu0 %v2411
        %v2442 = vpop.f32.mrf.mxu0
        %v2443 = vadd.f32 0.0, %v2442
        %2444 = vdwg.mxu0
        %v2445 = vmul.f32 %v2437, 0.25
        %v2446 = vmul.f32 %v2440, 0.25
        %v2447 = vmul.f32 %v2443, 0.25
        %v2448 = vadd.f32 %v2445, %v521
        %v2449 = vadd.f32 %v2446, %v521
        %v2450 = vadd.f32 %v2447, %v521
        %v2451 = vsel %vm741, %v2448, -inf
        %2452 = vmax.xlane.f32.xlu0 %v2451
        %v2453 = vpop.xlane.xlu0 %2452
        %v2454 = vsel %vm741, %v2449, -inf
        %2455 = vmax.xlane.f32.xlu0 %v2454
        %v2456 = vpop.xlane.xlu0 %2455
        %v2457 = vsel %vm741, %v2450, -inf
        %2458 = vmax.xlane.f32.xlu0 %v2457
        %v2459 = vpop.xlane.xlu0 %2458
        %v2460 = vsub.f32 %v2448, %v2453
        %v2461 = vsub.f32 %v2449, %v2456
        %v2462 = vsub.f32 %v2450, %v2459
        %v2463 = vmul.f32 %v2460, 1.442695
        %v2464 = vpow.pop %v2463
        %v2465 = vmul.f32 %v2461, 1.442695
        %v2466 = vpow.pop %v2465
        %v2467 = vmul.f32 %v2462, 1.442695
        %v2468 = vpow.pop %v2467
        %v2469 = vsel %vm741, %v2464, 0.0
        %2470 = vadd.xlane.f32.xlu0 %v2469
        %v2471 = vpop.xlane.xlu0 %2470
        %v2472 = vsel %vm741, %v2466, 0.0
        %2473 = vadd.xlane.f32.xlu0 %v2472
        %v2474 = vpop.xlane.xlu0 %2473
        %v2475 = vsel %vm741, %v2468, 0.0
        %2476 = vadd.xlane.f32.xlu0 %v2475
        %v2477 = vpop.xlane.xlu0 %2476
        %v2478 = vrcp.pop %v2471
        %v2479 = vmul.f32 %v2471, %v2478
        %v2480 = vsub.f32 1.0, %v2479
        %v2481 = vmul.f32 %v2478, %v2480
        %v2482 = vadd.f32 %v2478, %v2481
        %vm2483 = vweird.f32 %v2471
        %vm2484 = vweird.f32 %v2478
        %vm2485 = vmor %vm2483, %vm2484
        %v2486 = vsel %vm2485, %v2478, %v2482
        %v2487 = vand.u32 2147483647, %v2471
        %vm2488 = vcmp.eq.f32.partialorder %v2487, 8.507059e+37
        %v2489 = vand.u32 %v2471, 2147483648
        %v2490 = vor.u32 1.1754944e-38, %v2489
        %v2491 = vsel %vm2488, %v2490, %v2486
        %v2492 = vmul.f32 %v2464, %v2491
        %v2493 = vrcp.pop %v2474
        %v2494 = vmul.f32 %v2474, %v2493
        %v2495 = vsub.f32 1.0, %v2494
        %v2496 = vmul.f32 %v2493, %v2495
        %v2497 = vadd.f32 %v2493, %v2496
        %vm2498 = vweird.f32 %v2474
        %vm2499 = vweird.f32 %v2493
        %vm2500 = vmor %vm2498, %vm2499
        %v2501 = vsel %vm2500, %v2493, %v2497
        %v2502 = vand.u32 2147483647, %v2474
        %vm2503 = vcmp.eq.f32.partialorder %v2502, 8.507059e+37
        %v2504 = vand.u32 %v2474, 2147483648
        %v2505 = vor.u32 1.1754944e-38, %v2504
        %v2506 = vsel %vm2503, %v2505, %v2501
        %v2507 = vmul.f32 %v2466, %v2506
        %v2508 = vrcp.pop %v2477
        %v2509 = vmul.f32 %v2477, %v2508
        %v2510 = vsub.f32 1.0, %v2509
        %v2511 = vmul.f32 %v2508, %v2510
        %v2512 = vadd.f32 %v2508, %v2511
        %vm2513 = vweird.f32 %v2477
        %vm2514 = vweird.f32 %v2508
        %vm2515 = vmor %vm2513, %vm2514
        %v2516 = vsel %vm2515, %v2508, %v2512
        %v2517 = vand.u32 2147483647, %v2477
        %vm2518 = vcmp.eq.f32.partialorder %v2517, 8.507059e+37
        %v2519 = vand.u32 %v2477, 2147483648
        %v2520 = vor.u32 1.1754944e-38, %v2519
        %v2521 = vsel %vm2518, %v2520, %v2516
        %v2522 = vmul.f32 %v2468, %v2521
        %2523 = vrot.lane.b32.xlu0 %v1973, 96
        %v2524 = vpop.permute.xlu0 %2523
        %2525 = vrot.lane.b32.xlu0 %v1976, 96
        %v2526 = vpop.permute.xlu0 %2525
        %2527 = vrot.lane.b32.xlu0 %v1979, 96
        %v2528 = vpop.permute.xlu0 %2527
        %v2533 = vsel %vm741, %v2492, 0
        %v2536 = vsel %vm741, %v2507, 0
        %v2539 = vsel %vm741, %v2522, 0
        %2541 = vmatpush.msra.mxu0 0.0
        %2542 = vmatpush.msra.mxu0 0.0
        %2543 = vmatpush.msra.mxu0 0.0
        %2544 = vmatpush.msra.mxu0 0.0
        %2545 = vmatpush.msra.mxu0 0.0
        %2546 = vmatpush.msra.mxu0 0.0
        %2547 = vmatpush.msra.mxu0 0.0
        %2548 = vmatpush.msra.mxu0 0.0
        %2549 = vmatpush.msra.mxu0 0.0
        %2550 = vmatpush.msra.mxu0 0.0
        %2551 = vmatpush.msra.mxu0 0.0
        %2552 = vmatpush.msra.mxu0 0.0
        %2553 = vmatpush.msra.mxu0 0.0
        %2554 = vmatpush.msra.mxu0 %v2528
        %2555 = vmatpush.msra.mxu0 %v2526
        %2556 = vmatpush.msra.mxu0 %v2524
        %2557 = vmatmul.f32.gmra.mxu0 %v2533
        %v2558 = vpop.f32.mrf.mxu0
        %v2559 = vadd.f32 0.0, %v2558
        %2560 = vmatmul.f32.gmra.mxu0 %v2536
        %v2561 = vpop.f32.mrf.mxu0
        %v2562 = vadd.f32 0.0, %v2561
        %2563 = vmatmul.f32.gmra.mxu0 %v2539
        %v2564 = vpop.f32.mrf.mxu0
        %v2565 = vadd.f32 0.0, %v2564
        %2566 = vdwg.mxu0
        %v2568 = vsel %vm696, %v2559, 0
        %v2571 = vsel %vm696, %v2562, 0
        %v2574 = vsel %vm696, %v2565, 0
        %2576 = vmatpush.msra.mxu0 0.0
        %2577 = vmatpush.msra.mxu0 0.0
        %2578 = vmatpush.msra.mxu0 0.0
        %2579 = vmatpush.msra.mxu0 0.0
        %2580 = vmatpush.msra.mxu0 0.0
        %2581 = vmatpush.msra.mxu0 0.0
        %2582 = vmatpush.msra.mxu0 0.0
        %2583 = vmatpush.msra.mxu0 0.0
        %2584 = vmatpush.msra.mxu0 0.0
        %2585 = vmatpush.msra.mxu0 0.0
        %2586 = vmatpush.msra.mxu0 0.0
        %2587 = vmatpush.msra.mxu0 0.0
        %2588 = vmatpush.msra.mxu0 0.0
        %2589 = vmatpush.msra.mxu0 0.0
        %2590 = vmatpush.msra.mxu0 %v1987
        %2591 = vmatpush.msra.mxu0 %v1986
        %2592 = vmatmul.f32.gmra.mxu0 %v2568
        %v2593 = vpop.f32.mrf.mxu0
        %v2594 = vadd.f32 0.0, %v2593
        %2595 = vmatmul.f32.gmra.mxu0 %v2571
        %v2596 = vpop.f32.mrf.mxu0
        %v2597 = vadd.f32 0.0, %v2596
        %2598 = vmatmul.f32.gmra.mxu0 %v2574
        %v2599 = vpop.f32.mrf.mxu0
        %v2600 = vadd.f32 0.0, %v2599
        %2601 = vdwg.mxu0
        %v2602 = vadd.f32 %v2387, %v2594
        %v2603 = vadd.f32 %v2390, %v2597
        %v2604 = vadd.f32 %v2393, %v2600
        %2605 = vrot.lane.b32.xlu0 %v1947, 80
        %v2606 = vpop.permute.xlu0 %2605
        %2607 = vrot.lane.b32.xlu0 %v1950, 80
        %v2608 = vpop.permute.xlu0 %2607
        %2609 = vrot.lane.b32.xlu0 %v1953, 80
        %v2610 = vpop.permute.xlu0 %2609
        %2611 = vrot.lane.b32.xlu0 %v1947, 16
        %v2612 = vpop.permute.xlu0 %2611
        %2613 = vrot.lane.b32.xlu0 %v1950, 16
        %v2614 = vpop.permute.xlu0 %2613
        %2615 = vrot.lane.b32.xlu0 %v1953, 16
        %v2616 = vpop.permute.xlu0 %2615
        %v2617 = vsel %vm696, %v2606, 0
        %v2619 = vsel %vm696, %v2608, 0
        %v2621 = vsel %vm696, %v2610, 0
        %v2623 = vsel %vm696, %v2612, 0
        %v2625 = vsel %vm696, %v2614, 0
        %v2627 = vsel %vm696, %v2616, 0
        %2629 = vmatpush.xpose.msra.mxu0 0.0
        %2630 = vmatpush.xpose.msra.mxu0 0.0
        %2631 = vmatpush.xpose.msra.mxu0 0.0
        %2632 = vmatpush.xpose.msra.mxu0 0.0
        %2633 = vmatpush.xpose.msra.mxu0 0.0
        %2634 = vmatpush.xpose.msra.mxu0 0.0
        %2635 = vmatpush.xpose.msra.mxu0 0.0
        %2636 = vmatpush.xpose.msra.mxu0 0.0
        %2637 = vmatpush.xpose.msra.mxu0 0.0
        %2638 = vmatpush.xpose.msra.mxu0 0.0
        %2639 = vmatpush.xpose.msra.mxu0 0.0
        %2640 = vmatpush.xpose.msra.mxu0 0.0
        %2641 = vmatpush.xpose.msra.mxu0 0.0
        %2642 = vmatpush.xpose.msra.mxu0 %v2627
        %2643 = vmatpush.xpose.msra.mxu0 %v2625
        %2644 = vmatpush.xpose.msra.mxu0 %v2623
        %2645 = vmatmul.f32.gmra.mxu0 %v2617
        %v2646 = vpop.f32.mrf.mxu0
        %v2647 = vadd.f32 0.0, %v2646
        %2648 = vmatmul.f32.gmra.mxu0 %v2619
        %v2649 = vpop.f32.mrf.mxu0
        %v2650 = vadd.f32 0.0, %v2649
        %2651 = vmatmul.f32.gmra.mxu0 %v2621
        %v2652 = vpop.f32.mrf.mxu0
        %v2653 = vadd.f32 0.0, %v2652
        %2654 = vdwg.mxu0
        %v2655 = vmul.f32 %v2647, 0.25
        %v2656 = vmul.f32 %v2650, 0.25
        %v2657 = vmul.f32 %v2653, 0.25
        %v2658 = vadd.f32 %v2655, %v521
        %v2659 = vadd.f32 %v2656, %v521
        %v2660 = vadd.f32 %v2657, %v521
        %v2661 = vsel %vm741, %v2658, -inf
        %2662 = vmax.xlane.f32.xlu0 %v2661
        %v2663 = vpop.xlane.xlu0 %2662
        %v2664 = vsel %vm741, %v2659, -inf
        %2665 = vmax.xlane.f32.xlu0 %v2664
        %v2666 = vpop.xlane.xlu0 %2665
        %v2667 = vsel %vm741, %v2660, -inf
        %2668 = vmax.xlane.f32.xlu0 %v2667
        %v2669 = vpop.xlane.xlu0 %2668
        %v2670 = vsub.f32 %v2658, %v2663
        %v2671 = vsub.f32 %v2659, %v2666
        %v2672 = vsub.f32 %v2660, %v2669
        %v2673 = vmul.f32 %v2670, 1.442695
        %v2674 = vpow.pop %v2673
        %v2675 = vmul.f32 %v2671, 1.442695
        %v2676 = vpow.pop %v2675
        %v2677 = vmul.f32 %v2672, 1.442695
        %v2678 = vpow.pop %v2677
        %v2679 = vsel %vm741, %v2674, 0.0
        %2680 = vadd.xlane.f32.xlu0 %v2679
        %v2681 = vpop.xlane.xlu0 %2680
        %v2682 = vsel %vm741, %v2676, 0.0
        %2683 = vadd.xlane.f32.xlu0 %v2682
        %v2684 = vpop.xlane.xlu0 %2683
        %v2685 = vsel %vm741, %v2678, 0.0
        %2686 = vadd.xlane.f32.xlu0 %v2685
        %v2687 = vpop.xlane.xlu0 %2686
        %v2688 = vrcp.pop %v2681
        %v2689 = vmul.f32 %v2681, %v2688
        %v2690 = vsub.f32 1.0, %v2689
        %v2691 = vmul.f32 %v2688, %v2690
        %v2692 = vadd.f32 %v2688, %v2691
        %vm2693 = vweird.f32 %v2681
        %vm2694 = vweird.f32 %v2688
        %vm2695 = vmor %vm2693, %vm2694
        %v2696 = vsel %vm2695, %v2688, %v2692
        %v2697 = vand.u32 2147483647, %v2681
        %vm2698 = vcmp.eq.f32.partialorder %v2697, 8.507059e+37
        %v2699 = vand.u32 %v2681, 2147483648
        %v2700 = vor.u32 1.1754944e-38, %v2699
        %v2701 = vsel %vm2698, %v2700, %v2696
        %v2702 = vmul.f32 %v2674, %v2701
        %v2703 = vrcp.pop %v2684
        %v2704 = vmul.f32 %v2684, %v2703
        %v2705 = vsub.f32 1.0, %v2704
        %v2706 = vmul.f32 %v2703, %v2705
        %v2707 = vadd.f32 %v2703, %v2706
        %vm2708 = vweird.f32 %v2684
        %vm2709 = vweird.f32 %v2703
        %vm2710 = vmor %vm2708, %vm2709
        %v2711 = vsel %vm2710, %v2703, %v2707
        %v2712 = vand.u32 2147483647, %v2684
        %vm2713 = vcmp.eq.f32.partialorder %v2712, 8.507059e+37
        %v2714 = vand.u32 %v2684, 2147483648
        %v2715 = vor.u32 1.1754944e-38, %v2714
        %v2716 = vsel %vm2713, %v2715, %v2711
        %v2717 = vmul.f32 %v2676, %v2716
        %v2718 = vrcp.pop %v2687
        %v2719 = vmul.f32 %v2687, %v2718
        %v2720 = vsub.f32 1.0, %v2719
        %v2721 = vmul.f32 %v2718, %v2720
        %v2722 = vadd.f32 %v2718, %v2721
        %vm2723 = vweird.f32 %v2687
        %vm2724 = vweird.f32 %v2718
        %vm2725 = vmor %vm2723, %vm2724
        %v2726 = vsel %vm2725, %v2718, %v2722
        %v2727 = vand.u32 2147483647, %v2687
        %vm2728 = vcmp.eq.f32.partialorder %v2727, 8.507059e+37
        %v2729 = vand.u32 %v2687, 2147483648
        %v2730 = vor.u32 1.1754944e-38, %v2729
        %v2731 = vsel %vm2728, %v2730, %v2726
        %v2732 = vmul.f32 %v2678, %v2731
        %2733 = vrot.lane.b32.xlu0 %v1973, 80
        %v2734 = vpop.permute.xlu0 %2733
        %2735 = vrot.lane.b32.xlu0 %v1976, 80
        %v2736 = vpop.permute.xlu0 %2735
        %2737 = vrot.lane.b32.xlu0 %v1979, 80
        %v2738 = vpop.permute.xlu0 %2737
        %v2743 = vsel %vm741, %v2702, 0
        %v2746 = vsel %vm741, %v2717, 0
        %v2749 = vsel %vm741, %v2732, 0
        %2751 = vmatpush.msra.mxu0 0.0
        %2752 = vmatpush.msra.mxu0 0.0
        %2753 = vmatpush.msra.mxu0 0.0
        %2754 = vmatpush.msra.mxu0 0.0
        %2755 = vmatpush.msra.mxu0 0.0
        %2756 = vmatpush.msra.mxu0 0.0
        %2757 = vmatpush.msra.mxu0 0.0
        %2758 = vmatpush.msra.mxu0 0.0
        %2759 = vmatpush.msra.mxu0 0.0
        %2760 = vmatpush.msra.mxu0 0.0
        %2761 = vmatpush.msra.mxu0 0.0
        %2762 = vmatpush.msra.mxu0 0.0
        %2763 = vmatpush.msra.mxu0 0.0
        %2764 = vmatpush.msra.mxu0 %v2738
        %2765 = vmatpush.msra.mxu0 %v2736
        %2766 = vmatpush.msra.mxu0 %v2734
        %2767 = vmatmul.f32.gmra.mxu0 %v2743
        %v2768 = vpop.f32.mrf.mxu0
        %v2769 = vadd.f32 0.0, %v2768
        %2770 = vmatmul.f32.gmra.mxu0 %v2746
        %v2771 = vpop.f32.mrf.mxu0
        %v2772 = vadd.f32 0.0, %v2771
        %2773 = vmatmul.f32.gmra.mxu0 %v2749
        %v2774 = vpop.f32.mrf.mxu0
        %v2775 = vadd.f32 0.0, %v2774
        %2776 = vdwg.mxu0
        %v2778 = vsel %vm696, %v2769, 0
        %v2781 = vsel %vm696, %v2772, 0
        %v2784 = vsel %vm696, %v2775, 0
        %2786 = vmatpush.msra.mxu0 0.0
        %2787 = vmatpush.msra.mxu0 0.0
        %2788 = vmatpush.msra.mxu0 0.0
        %2789 = vmatpush.msra.mxu0 0.0
        %2790 = vmatpush.msra.mxu0 0.0
        %2791 = vmatpush.msra.mxu0 0.0
        %2792 = vmatpush.msra.mxu0 0.0
        %2793 = vmatpush.msra.mxu0 0.0
        %2794 = vmatpush.msra.mxu0 0.0
        %2795 = vmatpush.msra.mxu0 0.0
        %2796 = vmatpush.msra.mxu0 0.0
        %2797 = vmatpush.msra.mxu0 0.0
        %2798 = vmatpush.msra.mxu0 0.0
        %2799 = vmatpush.msra.mxu0 0.0
        %2800 = vmatpush.msra.mxu0 %v1989
        %2801 = vmatpush.msra.mxu0 %v1988
        %2802 = vmatmul.f32.gmra.mxu0 %v2778
        %v2803 = vpop.f32.mrf.mxu0
        %v2804 = vadd.f32 0.0, %v2803
        %2805 = vmatmul.f32.gmra.mxu0 %v2781
        %v2806 = vpop.f32.mrf.mxu0
        %v2807 = vadd.f32 0.0, %v2806
        %2808 = vmatmul.f32.gmra.mxu0 %v2784
        %v2809 = vpop.f32.mrf.mxu0
        %v2810 = vadd.f32 0.0, %v2809
        %2811 = vdwg.mxu0
        %v2812 = vadd.f32 %v2602, %v2804
        %v2813 = vadd.f32 %v2603, %v2807
        %v2814 = vadd.f32 %v2604, %v2810
        %v2815 = vadd.f32 %v1826, %v2812
        %v2816 = vadd.f32 %v1827, %v2813
        %v2817 = vadd.f32 %v1828, %v2814
        %s2818 = scalar_lea.vmem %s7, 1
        %v2819 = vld [vmem:[%s2818] sm:$0x1]
        %v2821 = vperm.slane %v2819, 0
        %v2823 = vadd.f32 %v2815, %v2821
        %v2824 = vadd.f32 %v2816, %v2821
        %v2825 = vadd.f32 %v2817, %v2821
        %s2826 = scalar_lea.vmem %s8, 1
        %v2827 = vld [vmem:[%s2826] sm:$0x1]
        %s2828 = scalar_lea.vmem %s9, 1
        %v2829 = vld [vmem:[%s2828] sm:$0x1]
        %v2830 = vsel %vm524, %v2823, 0.0
        %2831 = vadd.xlane.f32.xlu0 %v2830
        %v2832 = vpop.xlane.xlu0 %2831
        %v2833 = vsel %vm524, %v2824, 0.0
        %2834 = vadd.xlane.f32.xlu0 %v2833
        %v2835 = vpop.xlane.xlu0 %2834
        %v2836 = vsel %vm524, %v2825, 0.0
        %2837 = vadd.xlane.f32.xlu0 %v2836
        %v2838 = vpop.xlane.xlu0 %2837
        %v2839 = vmul.f32 %v2832, %v540
        %v2840 = vmul.f32 %v2835, %v540
        %v2841 = vmul.f32 %v2838, %v540
        %v2842 = vsub.f32 %v2823, %v2839
        %v2843 = vsub.f32 %v2824, %v2840
        %v2844 = vsub.f32 %v2825, %v2841
        %v2845 = vmul.f32 %v2842, %v2842
        %v2846 = vmul.f32 %v2843, %v2843
        %v2847 = vmul.f32 %v2844, %v2844
        %v2848 = vsel %vm524, %v2845, 0.0
        %2849 = vadd.xlane.f32.xlu0 %v2848
        %v2850 = vpop.xlane.xlu0 %2849
        %v2851 = vsel %vm524, %v2846, 0.0
        %2852 = vadd.xlane.f32.xlu0 %v2851
        %v2853 = vpop.xlane.xlu0 %2852
        %v2854 = vsel %vm524, %v2847, 0.0
        %2855 = vadd.xlane.f32.xlu0 %v2854
        %v2856 = vpop.xlane.xlu0 %2855
        %v2857 = vmul.f32 %v2850, %v540
        %v2858 = vmul.f32 %v2853, %v540
        %v2859 = vmul.f32 %v2856, %v540
        %v2860 = vadd.f32 %v2857, 1e-05
        %v2861 = vadd.f32 %v2858, 1e-05
        %v2862 = vadd.f32 %v2859, 1e-05
        %v2863 = vrsqrt.pop %v2860
        %v2864 = vmul.f32 %v2863, %v2860
        %v2865 = vmul.f32 %v2864, %v2863
        %v2866 = vmul.f32 0.5, %v2865
        %v2867 = vsub.f32 1.5, %v2866
        %v2868 = vmul.f32 %v2863, %v2867
        %vm2869 = vweird.f32 %v2860
        %vm2870 = vweird.f32 %v2863
        %vm2871 = vmor %vm2869, %vm2870
        %v2872 = vsel %vm2871, %v2863, %v2868
        %v2873 = vrsqrt.pop %v2861
        %v2874 = vmul.f32 %v2873, %v2861
        %v2875 = vmul.f32 %v2874, %v2873
        %v2876 = vmul.f32 0.5, %v2875
        %v2877 = vsub.f32 1.5, %v2876
        %v2878 = vmul.f32 %v2873, %v2877
        %vm2879 = vweird.f32 %v2861
        %vm2880 = vweird.f32 %v2873
        %vm2881 = vmor %vm2879, %vm2880
        %v2882 = vsel %vm2881, %v2873, %v2878
        %v2883 = vrsqrt.pop %v2862
        %v2884 = vmul.f32 %v2883, %v2862
        %v2885 = vmul.f32 %v2884, %v2883
        %v2886 = vmul.f32 0.5, %v2885
        %v2887 = vsub.f32 1.5, %v2886
        %v2888 = vmul.f32 %v2883, %v2887
        %vm2889 = vweird.f32 %v2862
        %vm2890 = vweird.f32 %v2883
        %vm2891 = vmor %vm2889, %vm2890
        %v2892 = vsel %vm2891, %v2883, %v2888
        %v2893 = vmul.f32 %v2842, %v2872
        %v2894 = vmul.f32 %v2843, %v2882
        %v2895 = vmul.f32 %v2844, %v2892
        %v2897 = vperm.slane %v2827, 0
        %v2899 = vmul.f32 %v2893, %v2897
        %v2900 = vmul.f32 %v2894, %v2897
        %v2901 = vmul.f32 %v2895, %v2897
        %v2903 = vperm.slane %v2829, 0
        %v2905 = vadd.f32 %v2899, %v2903
        %v2906 = vadd.f32 %v2900, %v2903
        %v2907 = vadd.f32 %v2901, %v2903
        %s2908 = scalar_lea.vmem %s10, 32
        %v2909 = vld [vmem:[%s2908] sm:$0xff]
        %v2910 = vld [vmem:[%s2908 + $0x8] sm:$0xff]
        %v2911 = vld [vmem:[%s2908 + $0x10] sm:$0xff]
        %v2912 = vld [vmem:[%s2908 + $0x18] sm:$0xff]
        %s2913 = scalar_lea.vmem %s11, 1
        %v2914 = vld [vmem:[%s2913] sm:$0x1]
        %v2916 = vperm.slane %v2914, 0
        %v2919 = vsel %vm524, %v2905, 0
        %v2922 = vsel %vm524, %v2906, 0
        %v2925 = vsel %vm524, %v2907, 0
        %2927 = vmatpush.msra.mxu0 0.0
        %2928 = vmatpush.msra.mxu0 0.0
        %2929 = vmatpush.msra.mxu0 0.0
        %2930 = vmatpush.msra.mxu0 0.0
        %2931 = vmatpush.msra.mxu0 0.0
        %2932 = vmatpush.msra.mxu0 0.0
        %2933 = vmatpush.msra.mxu0 0.0
        %2934 = vmatpush.msra.mxu0 0.0
        %2935 = vmatpush.msra.mxu0 0.0
        %2936 = vmatpush.msra.mxu0 0.0
        %2937 = vmatpush.msra.mxu0 0.0
        %2938 = vmatpush.msra.mxu0 0.0
        %2939 = vmatpush.msra.mxu0 %v2912
        %2940 = vmatpush.msra.mxu0 %v2911
        %2941 = vmatpush.msra.mxu0 %v2910
        %2942 = vmatpush.msra.mxu0 %v2909
        %2943 = vmatmul.f32.gmra.mxu0 %v2919
        %v2944 = vpop.f32.mrf.mxu0
        %v2945 = vadd.f32 %v2916, %v2944
        %2946 = vmatmul.f32.gmra.mxu0 %v2922
        %v2947 = vpop.f32.mrf.mxu0
        %v2948 = vadd.f32 %v2916, %v2947
        %2949 = vmatmul.f32.gmra.mxu0 %v2925
        %v2950 = vpop.f32.mrf.mxu0
        %v2951 = vadd.f32 %v2916, %v2950
        %2952 = vdwg.mxu0
        %v2953 = vmul.f32 %v2945, 0.5
        %v2954 = vmul.f32 %v2948, 0.5
        %v2955 = vmul.f32 %v2951, 0.5
        %v2956 = vmul.f32 %v2945, 0.70710677
        %v2957 = vmul.f32 %v2948, 0.70710677
        %v2958 = vmul.f32 %v2951, 0.70710677
        %v2959 = vmul.f32 %v2956, %v2956
        %v2960 = vmin.f32 16.0, %v2959
        %v2961 = vmul.f32 %v2960, 2.1237322e-06
        %v2962 = vadd.f32 %v2961, 0.00028619796
        %v2963 = vmul.f32 %v2960, %v2962
        %v2964 = vadd.f32 %v2963, 0.0036580483
        %v2965 = vmul.f32 %v2960, %v2964
        %v2966 = vadd.f32 %v2965, 0.05243302
        %v2967 = vmul.f32 %v2960, %v2966
        %v2968 = vadd.f32 %v2967, 0.18741608
        %v2969 = vmul.f32 %v2960, %v2968
        %v2970 = vadd.f32 %v2969, 1.1283791
        %v2971 = vmul.f32 %v2956, %v2970
        %v2972 = vmul.f32 %v2960, 3.8918573e-05
        %v2973 = vadd.f32 %v2972, 0.001143296
        %v2974 = vmul.f32 %v2960, %v2973
        %v2975 = vadd.f32 %v2974, 0.014752088
        %v2976 = vmul.f32 %v2960, %v2975
        %v2977 = vadd.f32 %v2976, 0.112945676
        %v2978 = vmul.f32 %v2960, %v2977
        %v2979 = vadd.f32 %v2978, 0.4994258
        %v2980 = vmul.f32 %v2960, %v2979
        %v2981 = vadd.f32 %v2980, 1.0
        %v2982 = vrcp.pop %v2981
        %v2983 = vmul.f32 %v2981, %v2982
        %v2984 = vsub.f32 1.0, %v2983
        %v2985 = vmul.f32 %v2982, %v2984
        %v2986 = vadd.f32 %v2982, %v2985
        %vm2987 = vweird.f32 %v2981
        %vm2988 = vweird.f32 %v2982
        %vm2989 = vmor %vm2987, %vm2988
        %v2990 = vsel %vm2989, %v2982, %v2986
        %v2991 = vand.u32 2147483647, %v2981
        %vm2992 = vcmp.eq.f32.partialorder %v2991, 8.507059e+37
        %v2993 = vand.u32 %v2981, 2147483648
        %v2994 = vor.u32 1.1754944e-38, %v2993
        %v2995 = vsel %vm2992, %v2994, %v2990
        %v2996 = vmul.f32 %v2971, %v2995
        %v2997 = vmin.f32 %v2996, 1.0
        %v2998 = vmax.f32 %v2997, -1.0
        %v2999 = vmul.f32 %v2957, %v2957
        %v3000 = vmin.f32 16.0, %v2999
        %v3001 = vmul.f32 %v3000, 2.1237322e-06
        %v3002 = vadd.f32 %v3001, 0.00028619796
        %v3003 = vmul.f32 %v3000, %v3002
        %v3004 = vadd.f32 %v3003, 0.0036580483
        %v3005 = vmul.f32 %v3000, %v3004
        %v3006 = vadd.f32 %v3005, 0.05243302
        %v3007 = vmul.f32 %v3000, %v3006
        %v3008 = vadd.f32 %v3007, 0.18741608
        %v3009 = vmul.f32 %v3000, %v3008
        %v3010 = vadd.f32 %v3009, 1.1283791
        %v3011 = vmul.f32 %v2957, %v3010
        %v3012 = vmul.f32 %v3000, 3.8918573e-05
        %v3013 = vadd.f32 %v3012, 0.001143296
        %v3014 = vmul.f32 %v3000, %v3013
        %v3015 = vadd.f32 %v3014, 0.014752088
        %v3016 = vmul.f32 %v3000, %v3015
        %v3017 = vadd.f32 %v3016, 0.112945676
        %v3018 = vmul.f32 %v3000, %v3017
        %v3019 = vadd.f32 %v3018, 0.4994258
        %v3020 = vmul.f32 %v3000, %v3019
        %v3021 = vadd.f32 %v3020, 1.0
        %v3022 = vrcp.pop %v3021
        %v3023 = vmul.f32 %v3021, %v3022
        %v3024 = vsub.f32 1.0, %v3023
        %v3025 = vmul.f32 %v3022, %v3024
        %v3026 = vadd.f32 %v3022, %v3025
        %vm3027 = vweird.f32 %v3021
        %vm3028 = vweird.f32 %v3022
        %vm3029 = vmor %vm3027, %vm3028
        %v3030 = vsel %vm3029, %v3022, %v3026
        %v3031 = vand.u32 2147483647, %v3021
        %vm3032 = vcmp.eq.f32.partialorder %v3031, 8.507059e+37
        %v3033 = vand.u32 %v3021, 2147483648
        %v3034 = vor.u32 1.1754944e-38, %v3033
        %v3035 = vsel %vm3032, %v3034, %v3030
        %v3036 = vmul.f32 %v3011, %v3035
        %v3037 = vmin.f32 %v3036, 1.0
        %v3038 = vmax.f32 %v3037, -1.0
        %v3039 = vmul.f32 %v2958, %v2958
        %v3040 = vmin.f32 16.0, %v3039
        %v3041 = vmul.f32 %v3040, 2.1237322e-06
        %v3042 = vadd.f32 %v3041, 0.00028619796
        %v3043 = vmul.f32 %v3040, %v3042
        %v3044 = vadd.f32 %v3043, 0.0036580483
        %v3045 = vmul.f32 %v3040, %v3044
        %v3046 = vadd.f32 %v3045, 0.05243302
        %v3047 = vmul.f32 %v3040, %v3046
        %v3048 = vadd.f32 %v3047, 0.18741608
        %v3049 = vmul.f32 %v3040, %v3048
        %v3050 = vadd.f32 %v3049, 1.1283791
        %v3051 = vmul.f32 %v2958, %v3050
        %v3052 = vmul.f32 %v3040, 3.8918573e-05
        %v3053 = vadd.f32 %v3052, 0.001143296
        %v3054 = vmul.f32 %v3040, %v3053
        %v3055 = vadd.f32 %v3054, 0.014752088
        %v3056 = vmul.f32 %v3040, %v3055
        %v3057 = vadd.f32 %v3056, 0.112945676
        %v3058 = vmul.f32 %v3040, %v3057
        %v3059 = vadd.f32 %v3058, 0.4994258
        %v3060 = vmul.f32 %v3040, %v3059
        %v3061 = vadd.f32 %v3060, 1.0
        %v3062 = vrcp.pop %v3061
        %v3063 = vmul.f32 %v3061, %v3062
        %v3064 = vsub.f32 1.0, %v3063
        %v3065 = vmul.f32 %v3062, %v3064
        %v3066 = vadd.f32 %v3062, %v3065
        %vm3067 = vweird.f32 %v3061
        %vm3068 = vweird.f32 %v3062
        %vm3069 = vmor %vm3067, %vm3068
        %v3070 = vsel %vm3069, %v3062, %v3066
        %v3071 = vand.u32 2147483647, %v3061
        %vm3072 = vcmp.eq.f32.partialorder %v3071, 8.507059e+37
        %v3073 = vand.u32 %v3061, 2147483648
        %v3074 = vor.u32 1.1754944e-38, %v3073
        %v3075 = vsel %vm3072, %v3074, %v3070
        %v3076 = vmul.f32 %v3051, %v3075
        %v3077 = vmin.f32 %v3076, 1.0
        %v3078 = vmax.f32 %v3077, -1.0
        %v3079 = vadd.f32 %v2998, 1.0
        %v3080 = vadd.f32 %v3038, 1.0
        %v3081 = vadd.f32 %v3078, 1.0
        %v3082 = vmul.f32 %v2953, %v3079
        %v3083 = vmul.f32 %v2954, %v3080
        %v3084 = vmul.f32 %v2955, %v3081
        %s3085 = scalar_lea.vmem %s12, 64
        %v3086 = vld [vmem:[%s3085] sm:$0xff]
        %v3087 = vld [vmem:[%s3085 + $0x8] sm:$0xff]
        %v3088 = vld [vmem:[%s3085 + $0x10] sm:$0xff]
        %v3089 = vld [vmem:[%s3085 + $0x18] sm:$0xff]
        %v3090 = vld [vmem:[%s3085 + $0x20] sm:$0xff]
        %v3091 = vld [vmem:[%s3085 + $0x28] sm:$0xff]
        %v3092 = vld [vmem:[%s3085 + $0x30] sm:$0xff]
        %v3093 = vld [vmem:[%s3085 + $0x38] sm:$0xff]
        %s3094 = scalar_lea.vmem %s13, 1
        %v3095 = vld [vmem:[%s3094] sm:$0x1]
        %v3097 = vperm.slane %v3095, 0
        %v3100 = vsel %vm476, %v3082, 0
        %v3103 = vsel %vm476, %v3083, 0
        %v3106 = vsel %vm476, %v3084, 0
        %3108 = vmatpush.msra.mxu0 0.0
        %3109 = vmatpush.msra.mxu0 0.0
        %3110 = vmatpush.msra.mxu0 0.0
        %3111 = vmatpush.msra.mxu0 0.0
        %3112 = vmatpush.msra.mxu0 0.0
        %3113 = vmatpush.msra.mxu0 0.0
        %3114 = vmatpush.msra.mxu0 0.0
        %3115 = vmatpush.msra.mxu0 0.0
        %3116 = vmatpush.msra.mxu0 %v3093
        %3117 = vmatpush.msra.mxu0 %v3092
        %3118 = vmatpush.msra.mxu0 %v3091
        %3119 = vmatpush.msra.mxu0 %v3090
        %3120 = vmatpush.msra.mxu0 %v3089
        %3121 = vmatpush.msra.mxu0 %v3088
        %3122 = vmatpush.msra.mxu0 %v3087
        %3123 = vmatpush.msra.mxu0 %v3086
        %3124 = vmatmul.f32.gmra.mxu0 %v3100
        %v3125 = vpop.f32.mrf.mxu0
        %3126 = vmatmul.f32.gmra.mxu0 %v3103
        %v3127 = vpop.f32.mrf.mxu0
        %3128 = vmatmul.f32.gmra.mxu0 %v3106
        %v3129 = vpop.f32.mrf.mxu0
        %v3130 = vadd.f32 %v3097, %v3129
        %3131 = vdwg.mxu0
        %v3132 = vadd.f32 %v2825, %v3130
        %vm3133 = vcmask 253952
        %3134 = vst.msk [vmem:[%s459] sm:$0x1] %vm3133, %v3132
        %s3135 = sand.u32 %s335, 1
        %s3136 = scalar_lea.sflag [#allocation3], %s3135
        %s3137 = sand.u32 %s335, 1
        %s3138 = scalar_lea.vmem [#allocation2], %s3137
        // Predicated region
        $region77: #{md_cat_forward.1} parent=75 // pred_check
          %p3139 = pneg %p345
        $region78: #{md_cat_forward.1} parent=75 // pred_check_branch
          %3141 = sbr.rel (%p3139) target = $region80
        $region79: #{md_cat_forward.1} parent=75 // pred_region
          %3143 = vsyncadd %s3136, 0
          %s3144 = scalar_lea.hbm %s14, %s28
          %s3146 = sshll.u32 %s3138, 4
          %s3147 = int_to_ptr.vmem [resolvable:$true] %s3146
          %s3148 = sshll.u32 %s3144, 4
          %s3149 = int_to_ptr.hbm [resolvable:$true] %s3148
          %3151 = dma.vmem_to_hbm [thread:$0]  %s3147, 16, %s3149, %s3136
        $region80: #{md_cat_forward.1} parent=75 // pred_fallthru
          _
      $region76: #{md_cat_forward.1} parent=5 // pred_fallthru
        _
      %p3152 = scmp.le.s32.totalorder 2, %s23
      // Predicated region
      $region81: #{md_cat_forward.1} parent=5 // pred_check
        %p3153 = pneg %p3152
      $region82: #{md_cat_forward.1} parent=5 // pred_check_branch
        %3155 = sbr.rel (%p3153) target = $region84
      $region83: #{md_cat_forward.1} parent=5 // pred_region
        %s3156 = ssub.s32 %s23, 2
        // Predicated region
        $region85: #{md_cat_forward.1} parent=83 // pred_check
          %p3157 = pneg %p351
        $region86: #{md_cat_forward.1} parent=83 // pred_check_branch
          %3159 = sbr.rel (%p3157) target = $region88
        $region87: #{md_cat_forward.1} parent=83 // pred_region
          %s3160 = sand.u32 %s336, 1
          %s3161 = scalar_lea.sflag [#allocation3], %s3160
          %s3162 = sand.u32 %s336, 1
          %s3163 = scalar_lea.vmem [#allocation2], %s3162
          %3165 = dma.done %s3161, 16
        $region88: #{md_cat_forward.1} parent=83 // pred_fallthru
          _
      $region84: #{md_cat_forward.1} parent=5 // pred_fallthru
        _
    $region6: #{md_cat_forward.1} parent=1 // loop_footer
      %s27 = sadd.s32 1, %s23
    $region7: #{md_cat_forward.1} parent=1 // loop_footer_branch
      %22 = sbr.rel target = $region3
    $region8: #{md_cat_forward.1} parent=1 // loop_exit
      _
    %3166 = vsyncpa [#allocation3], 1
    %s3167 = scalar_lea.sflag [#allocation3], 1
    %3168 = vsyncpa %s3167, 1

</llo_original>
